<compile_context>
chip_gen: v7x
topology: tpu7x:2x2x1
jax: 0.10.0
libtpu: 0.0.40
codegen_flags: <defaults>
</compile_context>

<pallas_src>
import math

import jax
import jax.numpy as jnp
from jax.experimental import pallas as pl
from jax.experimental.pallas import tpu as pltpu

NODES_PER_GRAPH = 330
POOL_WINDOW = 18                                   # composed pools == 18-wide windows
POOLED_LEN = 18                                    # 330 -> 110 -> 36 -> 18 positions
POOL_COVER = POOL_WINDOW * POOLED_LEN              # 324 (rows 324..329 dropped)
ROW_TILE = 72                                      # lcm(8, 18): sublane & window aligned
WINDOWS_PER_TILE = ROW_TILE // POOL_WINDOW         # 4
N_ROW_TILES = -(-NODES_PER_GRAPH // ROW_TILE)      # 5
PADDED_NODES = N_ROW_TILES * ROW_TILE              # 360 (rows 330..359 are padding)


def _fused_graph_kernel(xg_ref, xt_ref, ea_ref,
                        wkv_ref, bkv_ref, wqs_ref, bqs_ref, we_ref,
                        w1_ref, b1_ref, wr_ref, br_ref,
                        out_ref, acc_ref):
    """One (graph, row-tile) per grid step: TransformerConv + ReLU + pool + MLP head."""
    r = pl.program_id(1)
    hidden = we_ref.shape[1]
    n_edge_feat = we_ref.shape[0]
    scale = 1.0 / math.sqrt(hidden)

    @pl.when(r == 0)
    def _init():
        acc_ref[...] = jnp.zeros_like(acc_ref)

    # K/V for every real source node.  [330,4]x[4,2H] is ~84K MACs, so it is simply
    # recomputed per row tile instead of staged in scratch.
    kv = jnp.dot(xg_ref[0], wkv_ref[...],
                 preferred_element_type=jnp.float32) + bkv_ref[...]        # [P, 2H]
    k = kv[:, :hidden]
    v = kv[:, hidden:]

    # Q / skip projection for this tile's 72 target rows (fused lane-dense matmul).
    qs = jnp.dot(xt_ref[0], wqs_ref[...],
                 preferred_element_type=jnp.float32) + bqs_ref[...]        # [TR, 2H]
    q = qs[:, :hidden]
    skip = qs[:, hidden:]

    we = we_ref[...]                                                        # [F, H]
    # qe[i, f] = q_i . We[f]   (one small MXU matmul, no cross-lane reductions)
    qe = jax.lax.dot_general(q, we, (((1,), (1,)), ((), ())),
                             preferred_element_type=jnp.float32)            # [TR, F]

    # Edge features arrive in bf16; channel F is the 0/1 adjacency mask.
    ea = [ea_ref[0, f, 0].astype(jnp.float32) for f in range(n_edge_feat)]  # F x [TR, P]
    edge_present = ea_ref[0, n_edge_feat, 0].astype(jnp.float32) > 0.0      # [TR, P]

    # scores: s[i, j] = q_i . (k_j + W_e e_{ij}) / sqrt(H), only over existing edges.
    s = jax.lax.dot_general(q, k, (((1,), (1,)), ((), ())),
                            preferred_element_type=jnp.float32)             # [TR, P]
    for f in range(n_edge_feat):                                            # F=5 unrolled
        s = s + qe[:, f:f + 1] * ea[f]
    s = jnp.where(edge_present, s * scale, -1e30)

    # masked softmax over incoming edges (per target row)
    m = jnp.max(s, axis=-1, keepdims=True)                                  # [TR, 1] (XLU)
    p = jnp.exp(s - m)                                                      # [TR, P] (EUP)

    # Lane reductions on the (otherwise idle) MXU: denominator + F edge coefficients.
    ones_col = jnp.ones((NODES_PER_GRAPH, 1), jnp.float32)
    denom = jnp.dot(p, ones_col, preferred_element_type=jnp.float32)        # [TR, 1]
    inv_denom = 1.0 / denom                                                 # exact recip.

    agg = jnp.dot(p, v, preferred_element_type=jnp.float32) * inv_denom     # [TR, H]
    for f in range(n_edge_feat):
        coef = jnp.dot(p * ea[f], ones_col,
                       preferred_element_type=jnp.float32)                  # [TR, 1] (MXU)
        agg = agg + (coef * inv_denom) * we[f:f + 1, :]                      # outer product

    # Rows with no incoming edge aggregate nothing (exact PyG semantics); this also
    # neutralises the padded rows 330..359.
    agg = jnp.where(m > -1e29, agg, 0.0)

    h = jnp.maximum(agg + skip, 0.0)                                         # conv1 + ReLU

    # MaxPool(3,3)->(3,3)->(2,2) == max over disjoint 18-row windows; 72 rows == 4 windows.
    pooled = jnp.max(h.reshape(WINDOWS_PER_TILE, POOL_WINDOW, hidden), axis=1)   # [4, H]

    h1 = jnp.maximum(
        jnp.dot(pooled, w1_ref[...], preferred_element_type=jnp.float32) + b1_ref[...],
        0.0)                                                                 # [4, H]
    logits = jnp.dot(h1, wr_ref[...],
                     preferred_element_type=jnp.float32) + br_ref[...]       # [4, O]

    # Only the first POOLED_LEN (=18) windows exist in the torch model; the padded
    # tail windows (ids 18, 19) are dropped.
    win_id = (r * WINDOWS_PER_TILE
              + jax.lax.broadcasted_iota(jnp.int32, (WINDOWS_PER_TILE, 1), 0))
    logits = jnp.where(win_id < POOLED_LEN, logits, 0.0)
    acc_ref[...] += jnp.sum(logits, axis=0, keepdims=True)

    # Output block is resident across the (arbitrary) row-tile axis; only the value
    # written on the last row tile ever reaches HBM.
    out_ref[0] = jax.nn.sigmoid(acc_ref[...] * (1.0 / POOLED_LEN))


def init_params(key, in_channels, hidden_channels, out_channels, edge_dim=5):
    ks = jax.random.split(key, 13)

    def w(k, shape, scale=0.2):
        return (scale * jax.random.normal(k, shape)).astype(jnp.float32)

    return dict(
        Wq=w(ks[0], (in_channels, hidden_channels)),
        bq=w(ks[1], (1, hidden_channels), 0.05),
        Wk=w(ks[2], (in_channels, hidden_channels)),
        bk=w(ks[3], (1, hidden_channels), 0.05),
        Wv=w(ks[4], (in_channels, hidden_channels)),
        bv=w(ks[5], (1, hidden_channels), 0.05),
        We=w(ks[6], (edge_dim, hidden_channels)),       # lin_edge (no bias in PyG)
        Ws=w(ks[7], (in_channels, hidden_channels)),    # lin_skip (root weight)
        bs=w(ks[8], (1, hidden_channels), 0.05),
        W1=w(ks[9], (hidden_channels, hidden_channels)),
        b1=w(ks[10], (1, hidden_channels), 0.05),
        Wr=w(ks[11], (hidden_channels, out_channels)),
        br=w(ks[12], (1, out_channels), 0.05),
    )


def model_base_forward(x, edge_index, edge_attr, batch, params):
    in_ch = x.shape[1]
    out_ch = params['Wr'].shape[1]
    n_edge_feat = edge_attr.shape[1]
    P, TR, NT = NODES_PER_GRAPH, ROW_TILE, N_ROW_TILES
    batch_size = batch.shape[0] // P

    # --- glue: densify the per-graph edge blocks directly into the tiled kernel layout
    # (bf16, mask as an extra channel, no transpose).  NOTE: duplicate edges overwrite
    # (PyG would sum duplicate messages); edges are assumed intra-graph (PyG batching).
    src, tgt = edge_index[0], edge_index[1]
    g = tgt // P
    tl = tgt % P
    sl = src % P
    wt = tl // TR                      # which row tile
    rw = tl % TR                       # row within tile

    n_e = src.shape[0]
    eam = jnp.zeros((batch_size, n_edge_feat + 1, NT, TR, P), jnp.bfloat16)
    eam = eam.at[jnp.repeat(g, n_edge_feat),
                 jnp.tile(jnp.arange(n_edge_feat, dtype=jnp.int32), n_e),
                 jnp.repeat(wt, n_edge_feat),
                 jnp.repeat(rw, n_edge_feat),
                 jnp.repeat(sl, n_edge_feat)].set(
        edge_attr.astype(jnp.bfloat16).reshape(-1))
    eam = eam.at[g, n_edge_feat, wt, rw, sl].set(
        jnp.ones(sl.shape, jnp.bfloat16))                   # adjacency-mask channel

    x3 = x.astype(jnp.float32).reshape(batch_size, P, in_ch)
    x_pad = jnp.pad(x3, ((0, 0), (0, PADDED_NODES - P), (0, 0)))

    # Fused projection weights (lane-dense matmuls inside the kernel).
    w_kv = jnp.concatenate([params['Wk'], params['Wv']], axis=1)
    b_kv = jnp.concatenate([params['bk'], params['bv']], axis=1)
    w_qs = jnp.concatenate([params['Wq'], params['Ws']], axis=1)
    b_qs = jnp.concatenate([params['bq'], params['bs']], axis=1)

    def _resident(arr):                                     # whole array, every step
        nd = arr.ndim
        return pl.BlockSpec(arr.shape, lambda b, r, nd=nd: (0,) * nd)

    weights = (w_kv, b_kv, w_qs, b_qs, params['We'],
               params['W1'], params['b1'], params['Wr'], params['br'])

    in_specs = ([pl.BlockSpec((1, P, in_ch), lambda b, r: (b, 0, 0)),          # x (full graph)
                 pl.BlockSpec((1, TR, in_ch), lambda b, r: (b, r, 0)),          # x (row tile)
                 pl.BlockSpec((1, n_edge_feat + 1, 1, TR, P),
                              lambda b, r: (b, 0, r, 0, 0))]                    # edges+mask
                + [_resident(w) for w in weights])

    head = pl.pallas_call(
        _fused_graph_kernel,
        out_shape=jax.ShapeDtypeStruct((batch_size, 1, out_ch), jnp.float32),
        grid_spec=pltpu.PrefetchScalarGridSpec(
            num_scalar_prefetch=0,
            grid=(batch_size, NT),
            in_specs=in_specs,
            out_specs=pl.BlockSpec((1, 1, out_ch), lambda b, r: (b, 0, 0)),
            scratch_shapes=[pltpu.VMEM((1, out_ch), jnp.float32)]),
        compiler_params=pltpu.CompilerParams(
            dimension_semantics=("parallel", "arbitrary"),
            vmem_limit_bytes=32 * 1024 * 1024),
    )(x3, x_pad, eam, *weights)

    out = head.reshape(batch_size, out_ch)
    if out_ch == 1:                                          # torch .squeeze(-1)
        out = out[:, 0]
    return out


def reference_forward(x, edge_index, edge_attr, batch, params):
    """Pure-JAX reference (segment-softmax TransformerConv) for validation."""
    hidden = params['Wq'].shape[1]
    n = x.shape[0]
    batch_size = batch.shape[0] // NODES_PER_GRAPH
    src, tgt = edge_index[0], edge_index[1]
    q = x @ params['Wq'] + params['bq']
    k = x @ params['Wk'] + params['bk']
    v = x @ params['Wv'] + params['bv']
    e = edge_attr @ params['We']
    key_e = k[src] + e
    val_e = v[src] + e
    scores = jnp.sum(q[tgt] * key_e, axis=-1) / math.sqrt(hidden)
    m = jax.ops.segment_max(scores, tgt, num_segments=n)
    p = jnp.exp(scores - m[tgt])
    denom = jax.ops.segment_sum(p, tgt, num_segments=n)
    alpha = p / denom[tgt]
    agg = jax.ops.segment_sum(alpha[:, None] * val_e, tgt, num_segments=n)
    h = jnp.maximum(agg + x @ params['Ws'] + params['bs'], 0.0)
    h = h.reshape(batch_size, NODES_PER_GRAPH, hidden)
    h = h[:, :POOL_COVER, :].reshape(
        batch_size, POOLED_LEN, POOL_WINDOW, hidden).max(axis=2)
    h = jnp.maximum(h @ params['W1'] + params['b1'], 0.0)
    logits = h @ params['Wr'] + params['br']
    out = jax.nn.sigmoid(logits.mean(axis=1))
    return out[:, 0] if out.shape[-1] == 1 else out


if __name__ == "__main__":
    in_channels, hidden_channels, out_channels = 4, 32, 1
    batch_size = 2
    n = batch_size * NODES_PER_GRAPH          # 660 nodes (330 per graph, per the forward)

    key = jax.random.PRNGKey(0)
    k_x, k_e, k_p = jax.random.split(key, 3)
    x = jax.random.normal(k_x, (n, in_channels), jnp.float32)

    # ring-style edges within each graph (offsets 1, 7, 13): every node has 3 in-edges
    src_list, tgt_list = [], []
    idx = jnp.arange(NODES_PER_GRAPH)
    for g in range(batch_size):
        base = g * NODES_PER_GRAPH
        for off in (1, 7, 13):
            src_list.append(base + idx)
            tgt_list.append(base + (idx + off) % NODES_PER_GRAPH)
    edge_index = jnp.stack(
        [jnp.concatenate(src_list), jnp.concatenate(tgt_list)], axis=0).astype(jnp.int32)
    num_edges = edge_index.shape[1]
    edge_attr = jax.random.normal(k_e, (num_edges, 5), jnp.float32)
    batch = jnp.repeat(jnp.arange(batch_size, dtype=jnp.int32), NODES_PER_GRAPH)

    params = init_params(k_p, in_channels, hidden_channels, out_channels)

    out = jax.jit(model_base_forward)(x, edge_index, edge_attr, batch, params)
    out = jax.block_until_ready(out)

    # The kernel intentionally carries edge features in bf16 (perf review item 1), so
    # the tight check compares against the f32 reference fed identically-rounded edge
    # features; a looser sanity check compares against the full-precision reference.
    edge_attr_bf16 = edge_attr.astype(jnp.bfloat16).astype(jnp.float32)
    ref = reference_forward(x, edge_index, edge_attr_bf16, batch, params)
    ref_full = reference_forward(x, edge_index, edge_attr, batch, params)

    assert out.shape == (batch_size,), out.shape
    assert jnp.allclose(out, ref, rtol=1e-3, atol=1e-3), (out, ref)
    assert jnp.allclose(out, ref_full, rtol=1e-2, atol=1e-2), (out, ref_full)
    print("KERNEL_OK")
</pallas_src>

<mosaic_0001>
module attributes {stable_mosaic.version = 11 : i64} {
  func.func @_fused_graph_kernel(%arg0: i32, %arg1: i32, %arg2: memref<1x330x4xf32, #tpu.memory_space<vmem>>, %arg3: memref<1x72x4xf32, #tpu.memory_space<vmem>>, %arg4: memref<1x6x1x72x330xbf16, #tpu.memory_space<vmem>>, %arg5: memref<4x64xf32, #tpu.memory_space<vmem>>, %arg6: memref<1x64xf32, #tpu.memory_space<vmem>>, %arg7: memref<4x64xf32, #tpu.memory_space<vmem>>, %arg8: memref<1x64xf32, #tpu.memory_space<vmem>>, %arg9: memref<5x32xf32, #tpu.memory_space<vmem>>, %arg10: memref<32x32xf32, #tpu.memory_space<vmem>>, %arg11: memref<1x32xf32, #tpu.memory_space<vmem>>, %arg12: memref<32x1xf32, #tpu.memory_space<vmem>>, %arg13: memref<1x1xf32, #tpu.memory_space<vmem>>, %arg14: memref<1x1x1xf32, #tpu.memory_space<vmem>>, %arg15: memref<1x1xf32, #tpu.memory_space<vmem>>) attributes {dimension_semantics = [#tpu.dimension_semantics<parallel>, #tpu.dimension_semantics<arbitrary>], iteration_bounds = array<i64: 2, 5>, scalar_prefetch = 0 : i64, scratch_operands = 1 : i64, tpu.core_type = #tpu.core_type<tc>, window_params = [{transform_indices = @transform_0, window_bounds = array<i64: 1, 330, 4>}, {transform_indices = @transform_1, window_bounds = array<i64: 1, 72, 4>}, {transform_indices = @transform_2, window_bounds = array<i64: 1, 6, 1, 72, 330>}, {pipeline_mode = #tpu.pipeline_mode<synchronous>, transform_indices = @transform_3, window_bounds = array<i64: 4, 64>}, {pipeline_mode = #tpu.pipeline_mode<synchronous>, transform_indices = @transform_4, window_bounds = array<i64: 1, 64>}, {pipeline_mode = #tpu.pipeline_mode<synchronous>, transform_indices = @transform_5, window_bounds = array<i64: 4, 64>}, {pipeline_mode = #tpu.pipeline_mode<synchronous>, transform_indices = @transform_6, window_bounds = array<i64: 1, 64>}, {pipeline_mode = #tpu.pipeline_mode<synchronous>, transform_indices = @transform_7, window_bounds = array<i64: 5, 32>}, {pipeline_mode = #tpu.pipeline_mode<synchronous>, transform_indices = @transform_8, window_bounds = array<i64: 32, 32>}, {pipeline_mode = #tpu.pipeline_mode<synchronous>, transform_indices = @transform_9, window_bounds = array<i64: 1, 32>}, {pipeline_mode = #tpu.pipeline_mode<synchronous>, transform_indices = @transform_10, window_bounds = array<i64: 32, 1>}, {pipeline_mode = #tpu.pipeline_mode<synchronous>, transform_indices = @transform_11, window_bounds = array<i64: 1, 1>}, {transform_indices = @transform_12, window_bounds = array<i64: 1, 1, 1>}]} {
    %c0_i32 = arith.constant 0 : i32
    %0 = arith.cmpi eq, %arg1, %c0_i32 : i32
    %1 = arith.extui %0 : i1 to i32
    %c0_i32_0 = arith.constant 0 : i32
    %2 = arith.cmpi ne, %1, %c0_i32_0 : i32
    scf.if %2 {
      %cst_85 = arith.constant 0.000000e+00 : f32
      %167 = vector.broadcast %cst_85 : f32 to vector<1x1xf32>
      %c0_86 = arith.constant 0 : index
      %c0_87 = arith.constant 0 : index
      %168 = vector.load %arg15[%c0_86, %c0_87] : memref<1x1xf32, #tpu.memory_space<vmem>>, vector<1x1xf32>
      tpu.vector_store %arg15[%c0_86, %c0_87], %167 {strides = array<i32>} : memref<1x1xf32, #tpu.memory_space<vmem>>, vector<1x1xf32>,
    } else {
    }
    %c0 = arith.constant 0 : index
    %c0_1 = arith.constant 0 : index
    %c0_2 = arith.constant 0 : index
    %3 = vector.load %arg2[%c0, %c0_1, %c0_2] : memref<1x330x4xf32, #tpu.memory_space<vmem>>, vector<1x330x4xf32>
    %4 = vector.shape_cast %3 : vector<1x330x4xf32> to vector<330x4xf32>
    %c0_3 = arith.constant 0 : index
    %c0_4 = arith.constant 0 : index
    %5 = vector.load %arg5[%c0_3, %c0_4] : memref<4x64xf32, #tpu.memory_space<vmem>>, vector<4x64xf32>
    %cst = arith.constant dense<0.000000e+00> : vector<330x64xf32>
    %6 = tpu.matmul %4, %5, %cst {dimension_numbers = #tpu.dot_dimension_numbers<[1], [0], [0], [1], [0, 0, 1, 1], [], []>} : vector<330x4xf32>, vector<4x64xf32>, vector<330x64xf32> -> vector<330x64xf32>
    %c0_5 = arith.constant 0 : index
    %c0_6 = arith.constant 0 : index
    %7 = vector.load %arg6[%c0_5, %c0_6] : memref<1x64xf32, #tpu.memory_space<vmem>>, vector<1x64xf32>
    %8 = vector.broadcast %7 : vector<1x64xf32> to vector<330x64xf32>
    %9 = arith.addf %6, %8 : vector<330x64xf32>
    %10 = vector.extract_strided_slice %9 {offsets = [0, 0], sizes = [330, 32], strides = [1, 1]} : vector<330x64xf32> to vector<330x32xf32>
    %11 = vector.extract_strided_slice %9 {offsets = [0, 32], sizes = [330, 32], strides = [1, 1]} : vector<330x64xf32> to vector<330x32xf32>
    %c0_7 = arith.constant 0 : index
    %c0_8 = arith.constant 0 : index
    %c0_9 = arith.constant 0 : index
    %12 = vector.load %arg3[%c0_7, %c0_8, %c0_9] : memref<1x72x4xf32, #tpu.memory_space<vmem>>, vector<1x72x4xf32>
    %13 = vector.shape_cast %12 : vector<1x72x4xf32> to vector<72x4xf32>
    %c0_10 = arith.constant 0 : index
    %c0_11 = arith.constant 0 : index
    %14 = vector.load %arg7[%c0_10, %c0_11] : memref<4x64xf32, #tpu.memory_space<vmem>>, vector<4x64xf32>
    %cst_12 = arith.constant dense<0.000000e+00> : vector<72x64xf32>
    %15 = tpu.matmul %13, %14, %cst_12 {dimension_numbers = #tpu.dot_dimension_numbers<[1], [0], [0], [1], [0, 0, 1, 1], [], []>} : vector<72x4xf32>, vector<4x64xf32>, vector<72x64xf32> -> vector<72x64xf32>
    %c0_13 = arith.constant 0 : index
    %c0_14 = arith.constant 0 : index
    %16 = vector.load %arg8[%c0_13, %c0_14] : memref<1x64xf32, #tpu.memory_space<vmem>>, vector<1x64xf32>
    %17 = vector.broadcast %16 : vector<1x64xf32> to vector<72x64xf32>
    %18 = arith.addf %15, %17 : vector<72x64xf32>
    %19 = vector.extract_strided_slice %18 {offsets = [0, 0], sizes = [72, 32], strides = [1, 1]} : vector<72x64xf32> to vector<72x32xf32>
    %20 = vector.extract_strided_slice %18 {offsets = [0, 32], sizes = [72, 32], strides = [1, 1]} : vector<72x64xf32> to vector<72x32xf32>
    %c0_15 = arith.constant 0 : index
    %c0_16 = arith.constant 0 : index
    %21 = vector.load %arg9[%c0_15, %c0_16] : memref<5x32xf32, #tpu.memory_space<vmem>>, vector<5x32xf32>
    %cst_17 = arith.constant dense<0.000000e+00> : vector<72x5xf32>
    %22 = tpu.matmul %19, %21, %cst_17 {dimension_numbers = #tpu.dot_dimension_numbers<[1], [1], [0], [0], [0, 0, 1, 0], [], []>} : vector<72x32xf32>, vector<5x32xf32>, vector<72x5xf32> -> vector<72x5xf32>
    %c0_18 = arith.constant 0 : index
    %c0_19 = arith.constant 0 : index
    %c0_20 = arith.constant 0 : index
    %c0_21 = arith.constant 0 : index
    %c0_22 = arith.constant 0 : index
    %23 = vector.load %arg4[%c0_18, %c0_19, %c0_20, %c0_21, %c0_22] : memref<1x6x1x72x330xbf16, #tpu.memory_space<vmem>>, vector<1x1x1x72x330xbf16>
    %24 = vector.shape_cast %23 : vector<1x1x1x72x330xbf16> to vector<72x330xbf16>
    %25 = arith.extf %24 : vector<72x330xbf16> to vector<72x330xf32>
    %c0_23 = arith.constant 0 : index
    %c1 = arith.constant 1 : index
    %c0_24 = arith.constant 0 : index
    %c0_25 = arith.constant 0 : index
    %c0_26 = arith.constant 0 : index
    %26 = vector.load %arg4[%c0_23, %c1, %c0_24, %c0_25, %c0_26] : memref<1x6x1x72x330xbf16, #tpu.memory_space<vmem>>, vector<1x1x1x72x330xbf16>
    %27 = vector.shape_cast %26 : vector<1x1x1x72x330xbf16> to vector<72x330xbf16>
    %28 = arith.extf %27 : vector<72x330xbf16> to vector<72x330xf32>
    %c0_27 = arith.constant 0 : index
    %c2 = arith.constant 2 : index
    %c0_28 = arith.constant 0 : index
    %c0_29 = arith.constant 0 : index
    %c0_30 = arith.constant 0 : index
    %29 = vector.load %arg4[%c0_27, %c2, %c0_28, %c0_29, %c0_30] : memref<1x6x1x72x330xbf16, #tpu.memory_space<vmem>>, vector<1x1x1x72x330xbf16>
    %30 = vector.shape_cast %29 : vector<1x1x1x72x330xbf16> to vector<72x330xbf16>
    %31 = arith.extf %30 : vector<72x330xbf16> to vector<72x330xf32>
    %c0_31 = arith.constant 0 : index
    %c3 = arith.constant 3 : index
    %c0_32 = arith.constant 0 : index
    %c0_33 = arith.constant 0 : index
    %c0_34 = arith.constant 0 : index
    %32 = vector.load %arg4[%c0_31, %c3, %c0_32, %c0_33, %c0_34] : memref<1x6x1x72x330xbf16, #tpu.memory_space<vmem>>, vector<1x1x1x72x330xbf16>
    %33 = vector.shape_cast %32 : vector<1x1x1x72x330xbf16> to vector<72x330xbf16>
    %34 = arith.extf %33 : vector<72x330xbf16> to vector<72x330xf32>
    %c0_35 = arith.constant 0 : index
    %c4 = arith.constant 4 : index
    %c0_36 = arith.constant 0 : index
    %c0_37 = arith.constant 0 : index
    %c0_38 = arith.constant 0 : index
    %35 = vector.load %arg4[%c0_35, %c4, %c0_36, %c0_37, %c0_38] : memref<1x6x1x72x330xbf16, #tpu.memory_space<vmem>>, vector<1x1x1x72x330xbf16>
    %36 = vector.shape_cast %35 : vector<1x1x1x72x330xbf16> to vector<72x330xbf16>
    %37 = arith.extf %36 : vector<72x330xbf16> to vector<72x330xf32>
    %c0_39 = arith.constant 0 : index
    %c5 = arith.constant 5 : index
    %c0_40 = arith.constant 0 : index
    %c0_41 = arith.constant 0 : index
    %c0_42 = arith.constant 0 : index
    %38 = vector.load %arg4[%c0_39, %c5, %c0_40, %c0_41, %c0_42] : memref<1x6x1x72x330xbf16, #tpu.memory_space<vmem>>, vector<1x1x1x72x330xbf16>
    %39 = vector.shape_cast %38 : vector<1x1x1x72x330xbf16> to vector<72x330xbf16>
    %40 = arith.extf %39 : vector<72x330xbf16> to vector<72x330xf32>
    %cst_43 = arith.constant 0.000000e+00 : f32
    %41 = vector.broadcast %cst_43 : f32 to vector<72x330xf32>
    %42 = arith.cmpf ogt, %40, %41 : vector<72x330xf32>
    %cst_44 = arith.constant dense<0.000000e+00> : vector<72x330xf32>
    %43 = tpu.matmul %19, %10, %cst_44 {dimension_numbers = #tpu.dot_dimension_numbers<[1], [1], [0], [0], [0, 0, 1, 0], [], []>} : vector<72x32xf32>, vector<330x32xf32>, vector<72x330xf32> -> vector<72x330xf32>
    %44 = vector.extract_strided_slice %22 {offsets = [0, 0], sizes = [72, 1], strides = [1, 1]} : vector<72x5xf32> to vector<72x1xf32>
    %45 = vector.broadcast %44 : vector<72x1xf32> to vector<72x330xf32>
    %46 = arith.mulf %45, %25 : vector<72x330xf32>
    %47 = arith.addf %43, %46 : vector<72x330xf32>
    %48 = vector.extract_strided_slice %22 {offsets = [0, 1], sizes = [72, 1], strides = [1, 1]} : vector<72x5xf32> to vector<72x1xf32>
    %49 = vector.broadcast %48 : vector<72x1xf32> to vector<72x330xf32>
    %50 = arith.mulf %49, %28 : vector<72x330xf32>
    %51 = arith.addf %47, %50 : vector<72x330xf32>
    %52 = vector.extract_strided_slice %22 {offsets = [0, 2], sizes = [72, 1], strides = [1, 1]} : vector<72x5xf32> to vector<72x1xf32>
    %53 = vector.broadcast %52 : vector<72x1xf32> to vector<72x330xf32>
    %54 = arith.mulf %53, %31 : vector<72x330xf32>
    %55 = arith.addf %51, %54 : vector<72x330xf32>
    %56 = vector.extract_strided_slice %22 {offsets = [0, 3], sizes = [72, 1], strides = [1, 1]} : vector<72x5xf32> to vector<72x1xf32>
    %57 = vector.broadcast %56 : vector<72x1xf32> to vector<72x330xf32>
    %58 = arith.mulf %57, %34 : vector<72x330xf32>
    %59 = arith.addf %55, %58 : vector<72x330xf32>
    %60 = vector.extract_strided_slice %22 {offsets = [0, 4], sizes = [72, 1], strides = [1, 1]} : vector<72x5xf32> to vector<72x1xf32>
    %61 = vector.broadcast %60 : vector<72x1xf32> to vector<72x330xf32>
    %62 = arith.mulf %61, %37 : vector<72x330xf32>
    %63 = arith.addf %59, %62 : vector<72x330xf32>
    %cst_45 = arith.constant 0.176776692 : f32
    %64 = vector.broadcast %cst_45 : f32 to vector<72x330xf32>
    %65 = arith.mulf %63, %64 : vector<72x330xf32>
    %cst_46 = arith.constant -1.000000e+30 : f32
    %66 = vector.broadcast %cst_46 : f32 to vector<72x330xf32>
    %67 = arith.select %42, %65, %66 : vector<72x330xi1>, vector<72x330xf32>
    %cst_47 = arith.constant dense<0xFF800000> : vector<72xf32>
    %68 = vector.multi_reduction <maximumf>, %67, %cst_47 [1] : vector<72x330xf32> to vector<72xf32>
    %69 = vector.shape_cast %68 : vector<72xf32> to vector<72x1xf32>
    %70 = vector.broadcast %69 : vector<72x1xf32> to vector<72x330xf32>
    %71 = arith.subf %67, %70 : vector<72x330xf32>
    %72 = math.exp %71 : vector<72x330xf32>
    %cst_48 = arith.constant 1.000000e+00 : f32
    %73 = vector.broadcast %cst_48 : f32 to vector<330x1xf32>
    %cst_49 = arith.constant dense<0.000000e+00> : vector<72x1xf32>
    %74 = tpu.matmul %72, %73, %cst_49 {dimension_numbers = #tpu.dot_dimension_numbers<[1], [0], [0], [1], [0, 0, 1, 1], [], []>} : vector<72x330xf32>, vector<330x1xf32>, vector<72x1xf32> -> vector<72x1xf32>
    %cst_50 = arith.constant 1.000000e+00 : f32
    %75 = vector.broadcast %cst_50 : f32 to vector<72x1xf32>
    %76 = arith.divf %75, %74 : vector<72x1xf32>
    %cst_51 = arith.constant dense<0.000000e+00> : vector<72x32xf32>
    %77 = tpu.matmul %72, %11, %cst_51 {dimension_numbers = #tpu.dot_dimension_numbers<[1], [0], [0], [1], [0, 0, 1, 1], [], []>} : vector<72x330xf32>, vector<330x32xf32>, vector<72x32xf32> -> vector<72x32xf32>
    %78 = vector.broadcast %76 : vector<72x1xf32> to vector<72x32xf32>
    %79 = arith.mulf %77, %78 : vector<72x32xf32>
    %80 = arith.mulf %72, %25 : vector<72x330xf32>
    %cst_52 = arith.constant dense<0.000000e+00> : vector<72x1xf32>
    %81 = tpu.matmul %80, %73, %cst_52 {dimension_numbers = #tpu.dot_dimension_numbers<[1], [0], [0], [1], [0, 0, 1, 1], [], []>} : vector<72x330xf32>, vector<330x1xf32>, vector<72x1xf32> -> vector<72x1xf32>
    %82 = arith.mulf %81, %76 : vector<72x1xf32>
    %83 = vector.extract_strided_slice %21 {offsets = [0, 0], sizes = [1, 32], strides = [1, 1]} : vector<5x32xf32> to vector<1x32xf32>
    %84 = vector.broadcast %82 : vector<72x1xf32> to vector<72x32xf32>
    %85 = vector.broadcast %83 : vector<1x32xf32> to vector<72x32xf32>
    %86 = arith.mulf %84, %85 : vector<72x32xf32>
    %87 = arith.addf %79, %86 : vector<72x32xf32>
    %88 = arith.mulf %72, %28 : vector<72x330xf32>
    %cst_53 = arith.constant dense<0.000000e+00> : vector<72x1xf32>
    %89 = tpu.matmul %88, %73, %cst_53 {dimension_numbers = #tpu.dot_dimension_numbers<[1], [0], [0], [1], [0, 0, 1, 1], [], []>} : vector<72x330xf32>, vector<330x1xf32>, vector<72x1xf32> -> vector<72x1xf32>
    %90 = arith.mulf %89, %76 : vector<72x1xf32>
    %91 = vector.extract_strided_slice %21 {offsets = [1, 0], sizes = [1, 32], strides = [1, 1]} : vector<5x32xf32> to vector<1x32xf32>
    %92 = vector.broadcast %90 : vector<72x1xf32> to vector<72x32xf32>
    %93 = vector.broadcast %91 : vector<1x32xf32> to vector<72x32xf32>
    %94 = arith.mulf %92, %93 : vector<72x32xf32>
    %95 = arith.addf %87, %94 : vector<72x32xf32>
    %96 = arith.mulf %72, %31 : vector<72x330xf32>
    %cst_54 = arith.constant dense<0.000000e+00> : vector<72x1xf32>
    %97 = tpu.matmul %96, %73, %cst_54 {dimension_numbers = #tpu.dot_dimension_numbers<[1], [0], [0], [1], [0, 0, 1, 1], [], []>} : vector<72x330xf32>, vector<330x1xf32>, vector<72x1xf32> -> vector<72x1xf32>
    %98 = arith.mulf %97, %76 : vector<72x1xf32>
    %99 = vector.extract_strided_slice %21 {offsets = [2, 0], sizes = [1, 32], strides = [1, 1]} : vector<5x32xf32> to vector<1x32xf32>
    %100 = vector.broadcast %98 : vector<72x1xf32> to vector<72x32xf32>
    %101 = vector.broadcast %99 : vector<1x32xf32> to vector<72x32xf32>
    %102 = arith.mulf %100, %101 : vector<72x32xf32>
    %103 = arith.addf %95, %102 : vector<72x32xf32>
    %104 = arith.mulf %72, %34 : vector<72x330xf32>
    %cst_55 = arith.constant dense<0.000000e+00> : vector<72x1xf32>
    %105 = tpu.matmul %104, %73, %cst_55 {dimension_numbers = #tpu.dot_dimension_numbers<[1], [0], [0], [1], [0, 0, 1, 1], [], []>} : vector<72x330xf32>, vector<330x1xf32>, vector<72x1xf32> -> vector<72x1xf32>
    %106 = arith.mulf %105, %76 : vector<72x1xf32>
    %107 = vector.extract_strided_slice %21 {offsets = [3, 0], sizes = [1, 32], strides = [1, 1]} : vector<5x32xf32> to vector<1x32xf32>
    %108 = vector.broadcast %106 : vector<72x1xf32> to vector<72x32xf32>
    %109 = vector.broadcast %107 : vector<1x32xf32> to vector<72x32xf32>
    %110 = arith.mulf %108, %109 : vector<72x32xf32>
    %111 = arith.addf %103, %110 : vector<72x32xf32>
    %112 = arith.mulf %72, %37 : vector<72x330xf32>
    %cst_56 = arith.constant dense<0.000000e+00> : vector<72x1xf32>
    %113 = tpu.matmul %112, %73, %cst_56 {dimension_numbers = #tpu.dot_dimension_numbers<[1], [0], [0], [1], [0, 0, 1, 1], [], []>} : vector<72x330xf32>, vector<330x1xf32>, vector<72x1xf32> -> vector<72x1xf32>
    %114 = arith.mulf %113, %76 : vector<72x1xf32>
    %115 = vector.extract_strided_slice %21 {offsets = [4, 0], sizes = [1, 32], strides = [1, 1]} : vector<5x32xf32> to vector<1x32xf32>
    %116 = vector.broadcast %114 : vector<72x1xf32> to vector<72x32xf32>
    %117 = vector.broadcast %115 : vector<1x32xf32> to vector<72x32xf32>
    %118 = arith.mulf %116, %117 : vector<72x32xf32>
    %119 = arith.addf %111, %118 : vector<72x32xf32>
    %cst_57 = arith.constant -1.000000e+29 : f32
    %120 = vector.broadcast %cst_57 : f32 to vector<72x1xf32>
    %121 = arith.cmpf ogt, %69, %120 : vector<72x1xf32>
    %cst_58 = arith.constant 0.000000e+00 : f32
    %122 = vector.shape_cast %121 : vector<72x1xi1> to vector<72x1xi1>
    %123 = vector.broadcast %122 : vector<72x1xi1> to vector<72x32xi1>
    %124 = vector.broadcast %cst_58 : f32 to vector<72x32xf32>
    %125 = arith.select %123, %119, %124 : vector<72x32xi1>, vector<72x32xf32>
    %126 = arith.addf %125, %20 : vector<72x32xf32>
    %cst_59 = arith.constant 0.000000e+00 : f32
    %127 = vector.broadcast %cst_59 : f32 to vector<72x32xf32>
    %128 = arith.maximumf %126, %127 : vector<72x32xf32>
    %129 = vector.shape_cast %128 : vector<72x32xf32> to vector<4x18x32xf32>
    %cst_60 = arith.constant dense<0xFF800000> : vector<4x32xf32>
    %130 = vector.multi_reduction <maximumf>, %129, %cst_60 [1] : vector<4x18x32xf32> to vector<4x32xf32>
    %c0_61 = arith.constant 0 : index
    %c0_62 = arith.constant 0 : index
    %131 = vector.load %arg10[%c0_61, %c0_62] : memref<32x32xf32, #tpu.memory_space<vmem>>, vector<32x32xf32>
    %cst_63 = arith.constant dense<0.000000e+00> : vector<4x32xf32>
    %132 = tpu.matmul %130, %131, %cst_63 {dimension_numbers = #tpu.dot_dimension_numbers<[1], [0], [0], [1], [0, 0, 1, 1], [], []>} : vector<4x32xf32>, vector<32x32xf32>, vector<4x32xf32> -> vector<4x32xf32>
    %c0_64 = arith.constant 0 : index
    %c0_65 = arith.constant 0 : index
    %133 = vector.load %arg11[%c0_64, %c0_65] : memref<1x32xf32, #tpu.memory_space<vmem>>, vector<1x32xf32>
    %134 = vector.broadcast %133 : vector<1x32xf32> to vector<4x32xf32>
    %135 = arith.addf %132, %134 : vector<4x32xf32>
    %cst_66 = arith.constant 0.000000e+00 : f32
    %136 = vector.broadcast %cst_66 : f32 to vector<4x32xf32>
    %137 = arith.maximumf %135, %136 : vector<4x32xf32>
    %c0_67 = arith.constant 0 : index
    %c0_68 = arith.constant 0 : index
    %138 = vector.load %arg12[%c0_67, %c0_68] : memref<32x1xf32, #tpu.memory_space<vmem>>, vector<32x1xf32>
    %cst_69 = arith.constant dense<0.000000e+00> : vector<4x1xf32>
    %139 = tpu.matmul %137, %138, %cst_69 {dimension_numbers = #tpu.dot_dimension_numbers<[1], [0], [0], [1], [0, 0, 1, 1], [], []>} : vector<4x32xf32>, vector<32x1xf32>, vector<4x1xf32> -> vector<4x1xf32>
    %c0_70 = arith.constant 0 : index
    %c0_71 = arith.constant 0 : index
    %140 = vector.load %arg13[%c0_70, %c0_71] : memref<1x1xf32, #tpu.memory_space<vmem>>, vector<1x1xf32>
    %141 = vector.broadcast %140 : vector<1x1xf32> to vector<4x1xf32>
    %142 = arith.addf %139, %141 : vector<4x1xf32>
    %c4_i32 = arith.constant 4 : i32
    %143 = arith.muli %arg1, %c4_i32 : i32
    %144 = tpu.iota {dimensions = array<i32: 0>} : vector<4x1xi32>
    %145 = vector.broadcast %143 : i32 to vector<4x1xi32>
    %146 = arith.addi %145, %144 : vector<4x1xi32>
    %c18_i32 = arith.constant 18 : i32
    %147 = vector.broadcast %c18_i32 : i32 to vector<4x1xi32>
    %148 = arith.cmpi slt, %146, %147 : vector<4x1xi32>
    %cst_72 = arith.constant 0.000000e+00 : f32
    %149 = vector.broadcast %cst_72 : f32 to vector<4x1xf32>
    %150 = arith.select %148, %142, %149 : vector<4x1xi1>, vector<4x1xf32>
    %c0_73 = arith.constant 0 : index
    %c0_74 = arith.constant 0 : index
    %151 = vector.load %arg15[%c0_73, %c0_74] : memref<1x1xf32, #tpu.memory_space<vmem>>, vector<1x1xf32>
    %cst_75 = arith.constant dense<0.000000e+00> : vector<1xf32>
    %152 = vector.multi_reduction <add>, %150, %cst_75 [0] : vector<4x1xf32> to vector<1xf32>
    %153 = vector.shape_cast %152 : vector<1xf32> to vector<1x1xf32>
    %154 = arith.addf %151, %153 : vector<1x1xf32>
    %c0_76 = arith.constant 0 : index
    %c0_77 = arith.constant 0 : index
    %155 = vector.load %arg15[%c0_76, %c0_77] : memref<1x1xf32, #tpu.memory_space<vmem>>, vector<1x1xf32>
    tpu.vector_store %arg15[%c0_76, %c0_77], %154 {strides = array<i32>} : memref<1x1xf32, #tpu.memory_space<vmem>>, vector<1x1xf32>,
    %c0_78 = arith.constant 0 : index
    %c0_79 = arith.constant 0 : index
    %156 = vector.load %arg15[%c0_78, %c0_79] : memref<1x1xf32, #tpu.memory_space<vmem>>, vector<1x1xf32>
    %cst_80 = arith.constant 0.055555556 : f32
    %157 = vector.broadcast %cst_80 : f32 to vector<1x1xf32>
    %158 = arith.mulf %156, %157 : vector<1x1xf32>
    %159 = arith.negf %158 : vector<1x1xf32>
    %160 = math.exp %159 : vector<1x1xf32>
    %cst_81 = arith.constant 1.000000e+00 : f32
    %161 = vector.broadcast %cst_81 : f32 to vector<1x1xf32>
    %162 = arith.addf %161, %160 : vector<1x1xf32>
    %163 = arith.divf %161, %162 : vector<1x1xf32>
    %c0_82 = arith.constant 0 : index
    %c0_83 = arith.constant 0 : index
    %c0_84 = arith.constant 0 : index
    %164 = vector.load %arg14[%c0_82, %c0_83, %c0_84] : memref<1x1x1xf32, #tpu.memory_space<vmem>>, vector<1x1x1xf32>
    %165 = vector.shape_cast %164 : vector<1x1x1xf32> to vector<1x1xf32>
    %166 = vector.shape_cast %163 : vector<1x1xf32> to vector<1x1x1xf32>
    tpu.vector_store %arg14[%c0_82, %c0_83, %c0_84], %166 {strides = array<i32>} : memref<1x1x1xf32, #tpu.memory_space<vmem>>, vector<1x1x1xf32>,
    return
  }
  func.func @transform_0(%arg0: i32, %arg1: i32) -> (i32, i32, i32) {
    %c0_i32 = arith.constant 0 : i32
    %c0_i32_0 = arith.constant 0 : i32
    %c0_i32_1 = arith.constant 0 : i32
    return %arg0, %c0_i32, %c0_i32_0 : i32, i32, i32
  }
  func.func @transform_1(%arg0: i32, %arg1: i32) -> (i32, i32, i32) {
    %c0_i32 = arith.constant 0 : i32
    %c0_i32_0 = arith.constant 0 : i32
    return %arg0, %arg1, %c0_i32 : i32, i32, i32
  }
  func.func @transform_2(%arg0: i32, %arg1: i32) -> (i32, i32, i32, i32, i32) {
    %c0_i32 = arith.constant 0 : i32
    %c0_i32_0 = arith.constant 0 : i32
    %c0_i32_1 = arith.constant 0 : i32
    %c0_i32_2 = arith.constant 0 : i32
    return %arg0, %c0_i32, %arg1, %c0_i32_0, %c0_i32_1 : i32, i32, i32, i32, i32
  }
  func.func @transform_3(%arg0: i32, %arg1: i32) -> (i32, i32) {
    %c0_i32 = arith.constant 0 : i32
    %c0_i32_0 = arith.constant 0 : i32
    %c0_i32_1 = arith.constant 0 : i32
    return %c0_i32, %c0_i32_0 : i32, i32
  }
  func.func @transform_4(%arg0: i32, %arg1: i32) -> (i32, i32) {
    %c0_i32 = arith.constant 0 : i32
    %c0_i32_0 = arith.constant 0 : i32
    %c0_i32_1 = arith.constant 0 : i32
    return %c0_i32, %c0_i32_0 : i32, i32
  }
  func.func @transform_5(%arg0: i32, %arg1: i32) -> (i32, i32) {
    %c0_i32 = arith.constant 0 : i32
    %c0_i32_0 = arith.constant 0 : i32
    %c0_i32_1 = arith.constant 0 : i32
    return %c0_i32, %c0_i32_0 : i32, i32
  }
  func.func @transform_6(%arg0: i32, %arg1: i32) -> (i32, i32) {
    %c0_i32 = arith.constant 0 : i32
    %c0_i32_0 = arith.constant 0 : i32
    %c0_i32_1 = arith.constant 0 : i32
    return %c0_i32, %c0_i32_0 : i32, i32
  }
  func.func @transform_7(%arg0: i32, %arg1: i32) -> (i32, i32) {
    %c0_i32 = arith.constant 0 : i32
    %c0_i32_0 = arith.constant 0 : i32
    %c0_i32_1 = arith.constant 0 : i32
    return %c0_i32, %c0_i32_0 : i32, i32
  }
  func.func @transform_8(%arg0: i32, %arg1: i32) -> (i32, i32) {
    %c0_i32 = arith.constant 0 : i32
    %c0_i32_0 = arith.constant 0 : i32
    %c0_i32_1 = arith.constant 0 : i32
    return %c0_i32, %c0_i32_0 : i32, i32
  }
  func.func @transform_9(%arg0: i32, %arg1: i32) -> (i32, i32) {
    %c0_i32 = arith.constant 0 : i32
    %c0_i32_0 = arith.constant 0 : i32
    %c0_i32_1 = arith.constant 0 : i32
    return %c0_i32, %c0_i32_0 : i32, i32
  }
  func.func @transform_10(%arg0: i32, %arg1: i32) -> (i32, i32) {
    %c0_i32 = arith.constant 0 : i32
    %c0_i32_0 = arith.constant 0 : i32
    %c0_i32_1 = arith.constant 0 : i32
    return %c0_i32, %c0_i32_0 : i32, i32
  }
  func.func @transform_11(%arg0: i32, %arg1: i32) -> (i32, i32) {
    %c0_i32 = arith.constant 0 : i32
    %c0_i32_0 = arith.constant 0 : i32
    %c0_i32_1 = arith.constant 0 : i32
    return %c0_i32, %c0_i32_0 : i32, i32
  }
  func.func @transform_12(%arg0: i32, %arg1: i32) -> (i32, i32, i32) {
    %c0_i32 = arith.constant 0 : i32
    %c0_i32_0 = arith.constant 0 : i32
    %c0_i32_1 = arith.constant 0 : i32
    return %arg0, %c0_i32, %c0_i32_0 : i32, i32, i32
  }
}

</mosaic_0001>

<llo_original>
// kernel: model_base_forward.1
$region0: #{model_base_forward.1}
  #allocation0 [shape = 'u32[]', space=smem, size = 0x4, offset = 0x4, fixed_abs, tag = 'smem constant byte address 0x4 - core index']
  #allocation1 [shape = 'u32[144,128]{1,0:T(1,128)}', space=vmem, size = 0x12000, scoped, tag = 'internal scratch']
  #allocation2 [shape = 'f32[1,1]{1,0:T(1,128)}', space=vmem, size = 0x200, scoped, tag = 'scratch operand']
  #allocation3 [shape = 'f32[1,1]{1,0:T(1,128)S(1)}', space=vmem, size = 0x200, scoped, tag = 'scoped memory for model_base_forward.1']
  %s0 = inlined_call_operand.vmem [shape: f32[2,330,4], index: 0, kind: input, shape index: {}]
  %s1 = inlined_call_operand.vmem [shape: f32[2,360,4], index: 1, kind: input, shape index: {}]
  %s2 = inlined_call_operand.vmem [shape: bf16[2,6,5,72,330], index: 2, kind: input, shape index: {}]
  %s3 = inlined_call_operand.vmem [shape: f32[4,64], index: 3, kind: input, shape index: {}]
  %s4 = inlined_call_operand.vmem [shape: f32[1,64], index: 4, kind: input, shape index: {}]
  %s5 = inlined_call_operand.vmem [shape: f32[4,64], index: 5, kind: input, shape index: {}]
  %s6 = inlined_call_operand.vmem [shape: f32[1,64], index: 6, kind: input, shape index: {}]
  %s7 = inlined_call_operand.vmem [shape: f32[5,32], index: 7, kind: input, shape index: {}]
  %s8 = inlined_call_operand.vmem [shape: f32[32,32], index: 8, kind: input, shape index: {}]
  %s9 = inlined_call_operand.vmem [shape: f32[1,32], index: 9, kind: input, shape index: {}]
  %s10 = inlined_call_operand.vmem [shape: f32[32,1], index: 10, kind: input, shape index: {}]
  %s11 = inlined_call_operand.<no memory space> [shape: f32[1,1], index: 11, kind: input, shape index: {}]
  %s12 = inlined_call_operand.vmem [shape: f32[2,1,1], index: 12, kind: output, shape index: {}]
  %s13 = sld [smem:[#allocation0]]
  $region111: #{model_base_forward.1} parent=0
    _
  %s15 = ssub.s32 1, %s13
  %s16 = scalar_select 0, %s15, %s13
  %v17 = vstv %s11
  %18 = vst [vmem:[#allocation3] sm:$0x1] %v17
  $region1: #{model_base_forward.1} parent=0
    #allocation4 [shape = 'u8[663552]{0}', space=vmem, size = 0xa2000, scoped, tag = 'input window, operand 2']
    loop: start=0, step=1, limit=12
    $region2: #{model_base_forward.1} parent=1 // loop_pre_header
      _
    $region3: #{model_base_forward.1} parent=1 // loop_header
      %s20 = sphi 0, %s24
      %p21 = scmp.ge.s32.totalorder %s20, 12
      %s27 = sphi 0, %s39
      %s28 = sphi 0, %s35
      %s29 = sphi 0, %s27
      %s30 = sphi 0, %s28
      %s31 = sphi 0, %s29
      %s32 = sphi 0, %s30
      %s42 = sphi 0, %s44
      %s45 = sphi 0, %s42
      %s46 = sphi 0, %s45
      %s62 = sphi 0, %s46
      %s70 = sphi 0, %s72
      %s73 = sphi 0, %s70
      %s74 = sphi 0, %s73
      %s90 = sphi 0, %s74
      %s98 = sphi 0, %s100
      %s101 = sphi 0, %s98
      %s102 = sphi 0, %s101
      %s118 = sphi 0, %s102
      %s122 = sphi 0, %s122
      %s124 = sphi 0, %s122
      %s125 = sphi 0, %s124
      %s139 = sphi 0, %s125
      %s143 = sphi 0, %s143
      %s145 = sphi 0, %s143
      %s146 = sphi 0, %s145
      %s160 = sphi 0, %s146
      %s164 = sphi 0, %s164
      %s166 = sphi 0, %s164
      %s167 = sphi 0, %s166
      %s181 = sphi 0, %s167
      %s185 = sphi 0, %s185
      %s187 = sphi 0, %s185
      %s188 = sphi 0, %s187
      %s202 = sphi 0, %s188
      %s206 = sphi 0, %s206
      %s208 = sphi 0, %s206
      %s209 = sphi 0, %s208
      %s223 = sphi 0, %s209
      %s227 = sphi 0, %s227
      %s229 = sphi 0, %s227
      %s230 = sphi 0, %s229
      %s244 = sphi 0, %s230
      %s248 = sphi 0, %s248
      %s250 = sphi 0, %s248
      %s251 = sphi 0, %s250
      %s265 = sphi 0, %s251
      %s269 = sphi 0, %s269
      %s271 = sphi 0, %s269
      %s272 = sphi 0, %s271
      %s286 = sphi 0, %s272
      %s290 = sphi 0, %s290
      %s292 = sphi 0, %s290
      %s293 = sphi 0, %s292
      %s307 = sphi 0, %s293
      %s313 = sphi 0, %s315
      %s316 = sphi 0, %s313
      %s317 = sphi 0, %s316
      %s333 = sphi 0, %s317
    $region4: #{model_base_forward.1} parent=1 // loop_header_branch
      %23 = sbr.rel (%p21) target = $region8
    $region5: #{model_base_forward.1} parent=1 // loop_body
      %s25 = ssub.s32 %s20, 1
      %s26 = ssub.s32 %s20, 2
      %s33 = sadd.s32 1, %s28
      %p34 = scmp.ge.s32.totalorder %s33, 5
      %s35 = scalar_select %p34, 0, %s33
      %s36 = sadd.s32 1, %s27
      %s37 = scalar_select %p34, %s36, %s27
      %p38 = scmp.ge.s32.totalorder %s37, 2
      %s39 = scalar_select %p38, 0, %s37
      %s40 = ssub.s32 %s27, %s39
      %p41 = scmp.eq.s32.totalorder %s40, 0
      %s43 = sadd.s32 %s42, 1
      %s44 = scalar_select %p41, %s42, %s43
      %p47 = pneg %p41
      %p48 = scmp.eq.s32.totalorder %s20, 9
      %p49 = por %p47, %p48
      %p50 = scmp.ne.s32.totalorder %s42, %s45
      %p51 = scmp.eq.s32.totalorder %s20, 0
      %p52 = por %p50, %p51
      %p53 = scmp.ne.s32.totalorder %s42, %s45
      %p54 = scmp.eq.s32.totalorder %s25, 9
      %p55 = por %p53, %p54
      %p56 = scmp.ne.s32.totalorder %s45, %s46
      %p57 = scmp.eq.s32.totalorder %s25, 0
      %p58 = por %p56, %p57
      %p59 = scmp.ne.s32.totalorder %s45, %s46
      %p60 = scmp.eq.s32.totalorder %s26, 9
      %p61 = por %p59, %p60
      %p63 = scmp.ne.s32.totalorder %s46, %s62
      %p64 = scmp.eq.s32.totalorder %s26, 0
      %p65 = por %p63, %p64
      %s66 = ssub.s32 %s27, %s39
      %s67 = ssub.s32 %s28, %s35
      %s68 = sor.u32 %s66, %s67
      %p69 = scmp.eq.s32.totalorder %s68, 0
      %s71 = sadd.s32 %s70, 1
      %s72 = scalar_select %p69, %s70, %s71
      %p75 = pneg %p69
      %p76 = scmp.eq.s32.totalorder %s20, 9
      %p77 = por %p75, %p76
      %p78 = scmp.ne.s32.totalorder %s70, %s73
      %p79 = scmp.eq.s32.totalorder %s20, 0
      %p80 = por %p78, %p79
      %p81 = scmp.ne.s32.totalorder %s70, %s73
      %p82 = scmp.eq.s32.totalorder %s25, 9
      %p83 = por %p81, %p82
      %p84 = scmp.ne.s32.totalorder %s73, %s74
      %p85 = scmp.eq.s32.totalorder %s25, 0
      %p86 = por %p84, %p85
      %p87 = scmp.ne.s32.totalorder %s73, %s74
      %p88 = scmp.eq.s32.totalorder %s26, 9
      %p89 = por %p87, %p88
      %p91 = scmp.ne.s32.totalorder %s74, %s90
      %p92 = scmp.eq.s32.totalorder %s26, 0
      %p93 = por %p91, %p92
      %s94 = ssub.s32 %s27, %s39
      %s95 = ssub.s32 %s28, %s35
      %s96 = sor.u32 %s94, %s95
      %p97 = scmp.eq.s32.totalorder %s96, 0
      %s99 = sadd.s32 %s98, 1
      %s100 = scalar_select %p97, %s98, %s99
      %p103 = pneg %p97
      %p104 = scmp.eq.s32.totalorder %s20, 9
      %p105 = por %p103, %p104
      %p106 = scmp.ne.s32.totalorder %s98, %s101
      %p107 = scmp.eq.s32.totalorder %s20, 0
      %p108 = por %p106, %p107
      %p109 = scmp.ne.s32.totalorder %s98, %s101
      %p110 = scmp.eq.s32.totalorder %s25, 9
      %p111 = por %p109, %p110
      %p112 = scmp.ne.s32.totalorder %s101, %s102
      %p113 = scmp.eq.s32.totalorder %s25, 0
      %p114 = por %p112, %p113
      %p115 = scmp.ne.s32.totalorder %s101, %s102
      %p116 = scmp.eq.s32.totalorder %s26, 9
      %p117 = por %p115, %p116
      %p119 = scmp.ne.s32.totalorder %s102, %s118
      %p120 = scmp.eq.s32.totalorder %s26, 0
      %p121 = por %p119, %p120
      %s123 = sadd.s32 %s122, 1
      %p126 = scmp.eq.s32.totalorder %s20, 9
      %p127 = scmp.ne.s32.totalorder %s122, %s124
      %p128 = scmp.eq.s32.totalorder %s20, 0
      %p129 = por %p127, %p128
      %p130 = scmp.ne.s32.totalorder %s122, %s124
      %p131 = scmp.eq.s32.totalorder %s25, 9
      %p132 = por %p130, %p131
      %p133 = scmp.ne.s32.totalorder %s124, %s125
      %p134 = scmp.eq.s32.totalorder %s25, 0
      %p135 = por %p133, %p134
      %p136 = scmp.ne.s32.totalorder %s124, %s125
      %p137 = scmp.eq.s32.totalorder %s26, 9
      %p138 = por %p136, %p137
      %p140 = scmp.ne.s32.totalorder %s125, %s139
      %p141 = scmp.eq.s32.totalorder %s26, 0
      %p142 = por %p140, %p141
      %s144 = sadd.s32 %s143, 1
      %p147 = scmp.eq.s32.totalorder %s20, 9
      %p148 = scmp.ne.s32.totalorder %s143, %s145
      %p149 = scmp.eq.s32.totalorder %s20, 0
      %p150 = por %p148, %p149
      %p151 = scmp.ne.s32.totalorder %s143, %s145
      %p152 = scmp.eq.s32.totalorder %s25, 9
      %p153 = por %p151, %p152
      %p154 = scmp.ne.s32.totalorder %s145, %s146
      %p155 = scmp.eq.s32.totalorder %s25, 0
      %p156 = por %p154, %p155
      %p157 = scmp.ne.s32.totalorder %s145, %s146
      %p158 = scmp.eq.s32.totalorder %s26, 9
      %p159 = por %p157, %p158
      %p161 = scmp.ne.s32.totalorder %s146, %s160
      %p162 = scmp.eq.s32.totalorder %s26, 0
      %p163 = por %p161, %p162
      %s165 = sadd.s32 %s164, 1
      %p168 = scmp.eq.s32.totalorder %s20, 9
      %p169 = scmp.ne.s32.totalorder %s164, %s166
      %p170 = scmp.eq.s32.totalorder %s20, 0
      %p171 = por %p169, %p170
      %p172 = scmp.ne.s32.totalorder %s164, %s166
      %p173 = scmp.eq.s32.totalorder %s25, 9
      %p174 = por %p172, %p173
      %p175 = scmp.ne.s32.totalorder %s166, %s167
      %p176 = scmp.eq.s32.totalorder %s25, 0
      %p177 = por %p175, %p176
      %p178 = scmp.ne.s32.totalorder %s166, %s167
      %p179 = scmp.eq.s32.totalorder %s26, 9
      %p180 = por %p178, %p179
      %p182 = scmp.ne.s32.totalorder %s167, %s181
      %p183 = scmp.eq.s32.totalorder %s26, 0
      %p184 = por %p182, %p183
      %s186 = sadd.s32 %s185, 1
      %p189 = scmp.eq.s32.totalorder %s20, 9
      %p190 = scmp.ne.s32.totalorder %s185, %s187
      %p191 = scmp.eq.s32.totalorder %s20, 0
      %p192 = por %p190, %p191
      %p193 = scmp.ne.s32.totalorder %s185, %s187
      %p194 = scmp.eq.s32.totalorder %s25, 9
      %p195 = por %p193, %p194
      %p196 = scmp.ne.s32.totalorder %s187, %s188
      %p197 = scmp.eq.s32.totalorder %s25, 0
      %p198 = por %p196, %p197
      %p199 = scmp.ne.s32.totalorder %s187, %s188
      %p200 = scmp.eq.s32.totalorder %s26, 9
      %p201 = por %p199, %p200
      %p203 = scmp.ne.s32.totalorder %s188, %s202
      %p204 = scmp.eq.s32.totalorder %s26, 0
      %p205 = por %p203, %p204
      %s207 = sadd.s32 %s206, 1
      %p210 = scmp.eq.s32.totalorder %s20, 9
      %p211 = scmp.ne.s32.totalorder %s206, %s208
      %p212 = scmp.eq.s32.totalorder %s20, 0
      %p213 = por %p211, %p212
      %p214 = scmp.ne.s32.totalorder %s206, %s208
      %p215 = scmp.eq.s32.totalorder %s25, 9
      %p216 = por %p214, %p215
      %p217 = scmp.ne.s32.totalorder %s208, %s209
      %p218 = scmp.eq.s32.totalorder %s25, 0
      %p219 = por %p217, %p218
      %p220 = scmp.ne.s32.totalorder %s208, %s209
      %p221 = scmp.eq.s32.totalorder %s26, 9
      %p222 = por %p220, %p221
      %p224 = scmp.ne.s32.totalorder %s209, %s223
      %p225 = scmp.eq.s32.totalorder %s26, 0
      %p226 = por %p224, %p225
      %s228 = sadd.s32 %s227, 1
      %p231 = scmp.eq.s32.totalorder %s20, 9
      %p232 = scmp.ne.s32.totalorder %s227, %s229
      %p233 = scmp.eq.s32.totalorder %s20, 0
      %p234 = por %p232, %p233
      %p235 = scmp.ne.s32.totalorder %s227, %s229
      %p236 = scmp.eq.s32.totalorder %s25, 9
      %p237 = por %p235, %p236
      %p238 = scmp.ne.s32.totalorder %s229, %s230
      %p239 = scmp.eq.s32.totalorder %s25, 0
      %p240 = por %p238, %p239
      %p241 = scmp.ne.s32.totalorder %s229, %s230
      %p242 = scmp.eq.s32.totalorder %s26, 9
      %p243 = por %p241, %p242
      %p245 = scmp.ne.s32.totalorder %s230, %s244
      %p246 = scmp.eq.s32.totalorder %s26, 0
      %p247 = por %p245, %p246
      %s249 = sadd.s32 %s248, 1
      %p252 = scmp.eq.s32.totalorder %s20, 9
      %p253 = scmp.ne.s32.totalorder %s248, %s250
      %p254 = scmp.eq.s32.totalorder %s20, 0
      %p255 = por %p253, %p254
      %p256 = scmp.ne.s32.totalorder %s248, %s250
      %p257 = scmp.eq.s32.totalorder %s25, 9
      %p258 = por %p256, %p257
      %p259 = scmp.ne.s32.totalorder %s250, %s251
      %p260 = scmp.eq.s32.totalorder %s25, 0
      %p261 = por %p259, %p260
      %p262 = scmp.ne.s32.totalorder %s250, %s251
      %p263 = scmp.eq.s32.totalorder %s26, 9
      %p264 = por %p262, %p263
      %p266 = scmp.ne.s32.totalorder %s251, %s265
      %p267 = scmp.eq.s32.totalorder %s26, 0
      %p268 = por %p266, %p267
      %s270 = sadd.s32 %s269, 1
      %p273 = scmp.eq.s32.totalorder %s20, 9
      %p274 = scmp.ne.s32.totalorder %s269, %s271
      %p275 = scmp.eq.s32.totalorder %s20, 0
      %p276 = por %p274, %p275
      %p277 = scmp.ne.s32.totalorder %s269, %s271
      %p278 = scmp.eq.s32.totalorder %s25, 9
      %p279 = por %p277, %p278
      %p280 = scmp.ne.s32.totalorder %s271, %s272
      %p281 = scmp.eq.s32.totalorder %s25, 0
      %p282 = por %p280, %p281
      %p283 = scmp.ne.s32.totalorder %s271, %s272
      %p284 = scmp.eq.s32.totalorder %s26, 9
      %p285 = por %p283, %p284
      %p287 = scmp.ne.s32.totalorder %s272, %s286
      %p288 = scmp.eq.s32.totalorder %s26, 0
      %p289 = por %p287, %p288
      %s291 = sadd.s32 %s290, 1
      %p294 = scmp.eq.s32.totalorder %s20, 9
      %p295 = scmp.ne.s32.totalorder %s290, %s292
      %p296 = scmp.eq.s32.totalorder %s20, 0
      %p297 = por %p295, %p296
      %p298 = scmp.ne.s32.totalorder %s290, %s292
      %p299 = scmp.eq.s32.totalorder %s25, 9
      %p300 = por %p298, %p299
      %p301 = scmp.ne.s32.totalorder %s292, %s293
      %p302 = scmp.eq.s32.totalorder %s25, 0
      %p303 = por %p301, %p302
      %p304 = scmp.ne.s32.totalorder %s292, %s293
      %p305 = scmp.eq.s32.totalorder %s26, 9
      %p306 = por %p304, %p305
      %p308 = scmp.ne.s32.totalorder %s293, %s307
      %p309 = scmp.eq.s32.totalorder %s26, 0
      %p310 = por %p308, %p309
      %s311 = ssub.s32 %s27, %s39
      %p312 = scmp.eq.s32.totalorder %s311, 0
      %s314 = sadd.s32 %s313, 1
      %s315 = scalar_select %p312, %s313, %s314
      %p318 = pneg %p312
      %p319 = scmp.eq.s32.totalorder %s20, 9
      %p320 = por %p318, %p319
      %p321 = scmp.ne.s32.totalorder %s313, %s316
      %p322 = scmp.eq.s32.totalorder %s20, 0
      %p323 = por %p321, %p322
      %p324 = scmp.ne.s32.totalorder %s313, %s316
      %p325 = scmp.eq.s32.totalorder %s25, 9
      %p326 = por %p324, %p325
      %p327 = scmp.ne.s32.totalorder %s316, %s317
      %p328 = scmp.eq.s32.totalorder %s25, 0
      %p329 = por %p327, %p328
      %p330 = scmp.ne.s32.totalorder %s316, %s317
      %p331 = scmp.eq.s32.totalorder %s26, 9
      %p332 = por %p330, %p331
      %p334 = scmp.ne.s32.totalorder %s317, %s333
      %p335 = scmp.eq.s32.totalorder %s26, 0
      %p336 = por %p334, %p335
      %p337 = scmp.le.s32.totalorder 1, %s20
      %p338 = scmp.lt.s32.totalorder %s20, 11
      %p339 = pnand %p337, %p338
      %p340 = pneg %p339
      // Predicated region
      $region9: #{model_base_forward.1} parent=5 // pred_check
        _
      $region10: #{model_base_forward.1} parent=5 // pred_check_branch
        %342 = sbr.rel (%p339) target = $region12
      $region11: #{model_base_forward.1} parent=5 // pred_region
        %s343 = ssub.s32 %s20, 1
        // Predicated region
        $region13: #{model_base_forward.1} parent=11 // pred_check
          %p344 = pneg %p135
        $region14: #{model_base_forward.1} parent=11 // pred_check_branch
          %346 = sbr.rel (%p344) target = $region16
        $region15: #{model_base_forward.1} parent=11 // pred_region
          _
        $region16: #{model_base_forward.1} parent=11 // pred_fallthru
          _
        // Predicated region
        $region17: #{model_base_forward.1} parent=11 // pred_check
          %p347 = pneg %p156
        $region18: #{model_base_forward.1} parent=11 // pred_check_branch
          %349 = sbr.rel (%p347) target = $region20
        $region19: #{model_base_forward.1} parent=11 // pred_region
          _
        $region20: #{model_base_forward.1} parent=11 // pred_fallthru
          _
        // Predicated region
        $region21: #{model_base_forward.1} parent=11 // pred_check
          %p350 = pneg %p177
        $region22: #{model_base_forward.1} parent=11 // pred_check_branch
          %352 = sbr.rel (%p350) target = $region24
        $region23: #{model_base_forward.1} parent=11 // pred_region
          _
        $region24: #{model_base_forward.1} parent=11 // pred_fallthru
          _
        // Predicated region
        $region25: #{model_base_forward.1} parent=11 // pred_check
          %p353 = pneg %p198
        $region26: #{model_base_forward.1} parent=11 // pred_check_branch
          %355 = sbr.rel (%p353) target = $region28
        $region27: #{model_base_forward.1} parent=11 // pred_region
          _
        $region28: #{model_base_forward.1} parent=11 // pred_fallthru
          _
        // Predicated region
        $region29: #{model_base_forward.1} parent=11 // pred_check
          %p356 = pneg %p219
        $region30: #{model_base_forward.1} parent=11 // pred_check_branch
          %358 = sbr.rel (%p356) target = $region32
        $region31: #{model_base_forward.1} parent=11 // pred_region
          _
        $region32: #{model_base_forward.1} parent=11 // pred_fallthru
          _
        // Predicated region
        $region33: #{model_base_forward.1} parent=11 // pred_check
          %p359 = pneg %p240
        $region34: #{model_base_forward.1} parent=11 // pred_check_branch
          %361 = sbr.rel (%p359) target = $region36
        $region35: #{model_base_forward.1} parent=11 // pred_region
          _
        $region36: #{model_base_forward.1} parent=11 // pred_fallthru
          _
        // Predicated region
        $region37: #{model_base_forward.1} parent=11 // pred_check
          %p362 = pneg %p261
        $region38: #{model_base_forward.1} parent=11 // pred_check_branch
          %364 = sbr.rel (%p362) target = $region40
        $region39: #{model_base_forward.1} parent=11 // pred_region
          _
        $region40: #{model_base_forward.1} parent=11 // pred_fallthru
          _
        // Predicated region
        $region41: #{model_base_forward.1} parent=11 // pred_check
          %p365 = pneg %p282
        $region42: #{model_base_forward.1} parent=11 // pred_check_branch
          %367 = sbr.rel (%p365) target = $region44
        $region43: #{model_base_forward.1} parent=11 // pred_region
          _
        $region44: #{model_base_forward.1} parent=11 // pred_fallthru
          _
        // Predicated region
        $region45: #{model_base_forward.1} parent=11 // pred_check
          %p368 = pneg %p303
        $region46: #{model_base_forward.1} parent=11 // pred_check_branch
          %370 = sbr.rel (%p368) target = $region48
        $region47: #{model_base_forward.1} parent=11 // pred_region
          _
        $region48: #{model_base_forward.1} parent=11 // pred_fallthru
          _
      $region12: #{model_base_forward.1} parent=5 // pred_fallthru
        _
      %p371 = scmp.lt.s32.totalorder %s20, 10
      // Predicated region
      $region49: #{model_base_forward.1} parent=5 // pred_check
        %p372 = pneg %p371
      $region50: #{model_base_forward.1} parent=5 // pred_check_branch
        %374 = sbr.rel (%p372) target = $region52
      $region51: #{model_base_forward.1} parent=5 // pred_region
        // Predicated region
        $region53: #{model_base_forward.1} parent=51 // pred_check
          %p375 = pneg %p52
        $region54: #{model_base_forward.1} parent=51 // pred_check_branch
          %377 = sbr.rel (%p375) target = $region56
        $region55: #{model_base_forward.1} parent=51 // pred_region
          %p378 = scmp.lt.s32.totalorder %s27, 1
          %s379 = scalar_select %p378, %s27, 1
          %s380 = smul.addr %s379, 42
          %s381 = smul.addr %s380, 8
          %s382 = scalar_lea.vmem %s0, %s381
        $region56: #{model_base_forward.1} parent=51 // pred_fallthru
          _
        // Predicated region
        $region57: #{model_base_forward.1} parent=51 // pred_check
          %p383 = pneg %p80
        $region58: #{model_base_forward.1} parent=51 // pred_check_branch
          %385 = sbr.rel (%p383) target = $region60
        $region59: #{model_base_forward.1} parent=51 // pred_region
          %s386 = smul.u32 9, %s28
          %p387 = scmp.lt.s32.totalorder %s27, 1
          %s388 = scalar_select %p387, %s27, 1
          %p389 = scmp.lt.s32.totalorder %s386, 44
          %s390 = scalar_select %p389, %s386, 44
          %s391 = smul.addr %s388, 45
          %s392 = sadd.s32 %s390, %s391
          %s393 = smul.addr %s392, 8
          %s394 = scalar_lea.vmem %s1, %s393
          %s395 = smul.u32 9, %s28
        $region60: #{model_base_forward.1} parent=51 // pred_fallthru
          _
        // Predicated region
        $region61: #{model_base_forward.1} parent=51 // pred_check
          %p396 = pneg %p108
        $region62: #{model_base_forward.1} parent=51 // pred_check_branch
          %398 = sbr.rel (%p396) target = $region64
        $region63: #{model_base_forward.1} parent=51 // pred_region
          %s399 = sand.u32 %s98, 1
          %s400 = sand.u32 %s98, 1
          %s401 = smul.addr %s400, 648
          %s402 = scalar_lea.vmem [#allocation4], %s401
          %s403 = smul.addr %s28, 27
          %s404 = smul.addr %s27, 810
          %s405 = sadd.s32 %s403, %s404
          %s406 = smul.addr %s405, 4
          %s407 = scalar_lea.vmem %s2, %s406
          // Predicated region
          $region65: #{model_base_forward.1} parent=63 // pred_check
            _
          $region66: #{model_base_forward.1} parent=63 // pred_check_branch
            %409 = sbr.rel (0) target = $region68
          $region67: #{model_base_forward.1} parent=63 // pred_region
            // Predicated region
            $region69: #{model_base_forward.1} parent=67 // pred_check
              _
            $region70: #{model_base_forward.1} parent=67 // pred_check_branch
              %411 = sbr.rel (0) target = $region72
            $region71: #{model_base_forward.1} parent=67 // pred_region
              %s412 = scalar_lea.vmem %s407, 8
              %s413 = scalar_lea.vmem %s402, 8 [#allocation4]
              loop: start=0, step=1, limit=1
              $region73: #{model_base_forward.1} parent=71 // loop_pre_header
                _
              $region74: #{model_base_forward.1} parent=71 // loop_header
                %s415 = sphi 0, %s419
                %p416 = scmp.ge.s32.totalorder %s415, 1
                %s420 = sphi %s407, %s407
                %s421 = sphi %s402, %s402
              $region75: #{model_base_forward.1} parent=71 // loop_header_branch
                %418 = sbr.rel (%p416) target = $region79
              $region76: #{model_base_forward.1} parent=71 // loop_body
                %v422 = vld [vmem:[%s420] sm:$0xff]
                %423 = vst [vmem:[%s421] sm:$0xff] %v422
                %v424 = vld [vmem:[%s420 + $0xc] sm:$0xff]
                %425 = vst [vmem:[%s421 + $0xc] sm:$0xff] %v424
                %v426 = vld [vmem:[%s420 + $0x18] sm:$0xff]
                %427 = vst [vmem:[%s421 + $0x18] sm:$0xff] %v426
                %v428 = vld [vmem:[%s420 + $0x24] sm:$0xff]
                %429 = vst [vmem:[%s421 + $0x24] sm:$0xff] %v428
                %v430 = vld [vmem:[%s420 + $0x30] sm:$0xff]
                %431 = vst [vmem:[%s421 + $0x30] sm:$0xff] %v430
                %v432 = vld [vmem:[%s420 + $0x3c] sm:$0xff]
                %433 = vst [vmem:[%s421 + $0x3c] sm:$0xff] %v432
                %v434 = vld [vmem:[%s420 + $0x48] sm:$0xff]
                %435 = vst [vmem:[%s421 + $0x48] sm:$0xff] %v434
                %v436 = vld [vmem:[%s420 + $0x54] sm:$0xff]
                %437 = vst [vmem:[%s421 + $0x54] sm:$0xff] %v436
                %v438 = vld [vmem:[%s420 + $0x60] sm:$0xff]
                %439 = vst [vmem:[%s421 + $0x60] sm:$0xff] %v438
                %v440 = vld [vmem:[%s420 + $0x21c] sm:$0xff]
                %441 = vst [vmem:[%s421 + $0x6c] sm:$0xff] %v440
                %v442 = vld [vmem:[%s420 + $0x228] sm:$0xff]
                %443 = vst [vmem:[%s421 + $0x78] sm:$0xff] %v442
                %v444 = vld [vmem:[%s420 + $0x234] sm:$0xff]
                %445 = vst [vmem:[%s421 + $0x84] sm:$0xff] %v444
                %v446 = vld [vmem:[%s420 + $0x240] sm:$0xff]
                %447 = vst [vmem:[%s421 + $0x90] sm:$0xff] %v446
                %v448 = vld [vmem:[%s420 + $0x24c] sm:$0xff]
                %449 = vst [vmem:[%s421 + $0x9c] sm:$0xff] %v448
                %v450 = vld [vmem:[%s420 + $0x258] sm:$0xff]
                %451 = vst [vmem:[%s421 + $0xa8] sm:$0xff] %v450
                %v452 = vld [vmem:[%s420 + $0x264] sm:$0xff]
                %453 = vst [vmem:[%s421 + $0xb4] sm:$0xff] %v452
                %v454 = vld [vmem:[%s420 + $0x270] sm:$0xff]
                %455 = vst [vmem:[%s421 + $0xc0] sm:$0xff] %v454
                %v456 = vld [vmem:[%s420 + $0x27c] sm:$0xff]
                %457 = vst [vmem:[%s421 + $0xcc] sm:$0xff] %v456
                %v458 = vld [vmem:[%s420 + $0x438] sm:$0xff]
                %459 = vst [vmem:[%s421 + $0xd8] sm:$0xff] %v458
                %v460 = vld [vmem:[%s420 + $0x444] sm:$0xff]
                %461 = vst [vmem:[%s421 + $0xe4] sm:$0xff] %v460
                %v462 = vld [vmem:[%s420 + $0x450] sm:$0xff]
                %463 = vst [vmem:[%s421 + $0xf0] sm:$0xff] %v462
                %v464 = vld [vmem:[%s420 + $0x45c] sm:$0xff]
                %465 = vst [vmem:[%s421 + $0xfc] sm:$0xff] %v464
                %v466 = vld [vmem:[%s420 + $0x468] sm:$0xff]
                %467 = vst [vmem:[%s421 + $0x108] sm:$0xff] %v466
                %v468 = vld [vmem:[%s420 + $0x474] sm:$0xff]
                %469 = vst [vmem:[%s421 + $0x114] sm:$0xff] %v468
                %v470 = vld [vmem:[%s420 + $0x480] sm:$0xff]
                %471 = vst [vmem:[%s421 + $0x120] sm:$0xff] %v470
                %v472 = vld [vmem:[%s420 + $0x48c] sm:$0xff]
                %473 = vst [vmem:[%s421 + $0x12c] sm:$0xff] %v472
                %v474 = vld [vmem:[%s420 + $0x498] sm:$0xff]
                %475 = vst [vmem:[%s421 + $0x138] sm:$0xff] %v474
                %v476 = vld [vmem:[%s420 + $0x654] sm:$0xff]
                %477 = vst [vmem:[%s421 + $0x144] sm:$0xff] %v476
                %v478 = vld [vmem:[%s420 + $0x660] sm:$0xff]
                %479 = vst [vmem:[%s421 + $0x150] sm:$0xff] %v478
                %v480 = vld [vmem:[%s420 + $0x66c] sm:$0xff]
                %481 = vst [vmem:[%s421 + $0x15c] sm:$0xff] %v480
                %v482 = vld [vmem:[%s420 + $0x678] sm:$0xff]
                %483 = vst [vmem:[%s421 + $0x168] sm:$0xff] %v482
                %v484 = vld [vmem:[%s420 + $0x684] sm:$0xff]
                %485 = vst [vmem:[%s421 + $0x174] sm:$0xff] %v484
                %v486 = vld [vmem:[%s420 + $0x690] sm:$0xff]
                %487 = vst [vmem:[%s421 + $0x180] sm:$0xff] %v486
                %v488 = vld [vmem:[%s420 + $0x69c] sm:$0xff]
                %489 = vst [vmem:[%s421 + $0x18c] sm:$0xff] %v488
                %v490 = vld [vmem:[%s420 + $0x6a8] sm:$0xff]
                %491 = vst [vmem:[%s421 + $0x198] sm:$0xff] %v490
                %v492 = vld [vmem:[%s420 + $0x6b4] sm:$0xff]
                %493 = vst [vmem:[%s421 + $0x1a4] sm:$0xff] %v492
                %v494 = vld [vmem:[%s420 + $0x870] sm:$0xff]
                %495 = vst [vmem:[%s421 + $0x1b0] sm:$0xff] %v494
                %v496 = vld [vmem:[%s420 + $0x87c] sm:$0xff]
                %497 = vst [vmem:[%s421 + $0x1bc] sm:$0xff] %v496
                %v498 = vld [vmem:[%s420 + $0x888] sm:$0xff]
                %499 = vst [vmem:[%s421 + $0x1c8] sm:$0xff] %v498
                %v500 = vld [vmem:[%s420 + $0x894] sm:$0xff]
                %501 = vst [vmem:[%s421 + $0x1d4] sm:$0xff] %v500
                %v502 = vld [vmem:[%s420 + $0x8a0] sm:$0xff]
                %503 = vst [vmem:[%s421 + $0x1e0] sm:$0xff] %v502
                %v504 = vld [vmem:[%s420 + $0x8ac] sm:$0xff]
                %505 = vst [vmem:[%s421 + $0x1ec] sm:$0xff] %v504
                %v506 = vld [vmem:[%s420 + $0x8b8] sm:$0xff]
                %507 = vst [vmem:[%s421 + $0x1f8] sm:$0xff] %v506
                %v508 = vld [vmem:[%s420 + $0x8c4] sm:$0xff]
                %509 = vst [vmem:[%s421 + $0x204] sm:$0xff] %v508
                %v510 = vld [vmem:[%s420 + $0x8d0] sm:$0xff]
                %511 = vst [vmem:[%s421 + $0x210] sm:$0xff] %v510
                %v512 = vld [vmem:[%s420 + $0xa8c] sm:$0xff]
                %513 = vst [vmem:[%s421 + $0x21c] sm:$0xff] %v512
                %v514 = vld [vmem:[%s420 + $0xa98] sm:$0xff]
                %515 = vst [vmem:[%s421 + $0x228] sm:$0xff] %v514
                %v516 = vld [vmem:[%s420 + $0xaa4] sm:$0xff]
                %517 = vst [vmem:[%s421 + $0x234] sm:$0xff] %v516
                %v518 = vld [vmem:[%s420 + $0xab0] sm:$0xff]
                %519 = vst [vmem:[%s421 + $0x240] sm:$0xff] %v518
                %v520 = vld [vmem:[%s420 + $0xabc] sm:$0xff]
                %521 = vst [vmem:[%s421 + $0x24c] sm:$0xff] %v520
                %v522 = vld [vmem:[%s420 + $0xac8] sm:$0xff]
                %523 = vst [vmem:[%s421 + $0x258] sm:$0xff] %v522
                %v524 = vld [vmem:[%s420 + $0xad4] sm:$0xff]
                %525 = vst [vmem:[%s421 + $0x264] sm:$0xff] %v524
                %v526 = vld [vmem:[%s420 + $0xae0] sm:$0xff]
                %527 = vst [vmem:[%s421 + $0x270] sm:$0xff] %v526
                %v528 = vld [vmem:[%s420 + $0xaec] sm:$0xff]
                %529 = vst [vmem:[%s421 + $0x27c] sm:$0xff] %v528
              $region77: #{model_base_forward.1} parent=71 // loop_footer
                %s419 = sadd.s32 1, %s415
              $region78: #{model_base_forward.1} parent=71 // loop_footer_branch
                %414 = sbr.rel target = $region74
              $region79: #{model_base_forward.1} parent=71 // loop_exit
                _
              loop: start=0, step=1, limit=1
              $region80: #{model_base_forward.1} parent=71 // loop_pre_header
                _
              $region81: #{model_base_forward.1} parent=71 // loop_header
                %s532 = sphi 0, %s536
                %p533 = scmp.ge.s32.totalorder %s532, 1
                %s537 = sphi %s412, %s412
                %s538 = sphi %s413, %s413
              $region82: #{model_base_forward.1} parent=71 // loop_header_branch
                %535 = sbr.rel (%p533) target = $region86
              $region83: #{model_base_forward.1} parent=71 // loop_body
                %v539 = vld [vmem:[%s537] sm:$0xf]
                %540 = vst [vmem:[%s538] sm:$0xf] %v539
                %v541 = vld [vmem:[%s537 + $0xc] sm:$0xf]
                %542 = vst [vmem:[%s538 + $0xc] sm:$0xf] %v541
                %v543 = vld [vmem:[%s537 + $0x18] sm:$0xf]
                %544 = vst [vmem:[%s538 + $0x18] sm:$0xf] %v543
                %v545 = vld [vmem:[%s537 + $0x24] sm:$0xf]
                %546 = vst [vmem:[%s538 + $0x24] sm:$0xf] %v545
                %v547 = vld [vmem:[%s537 + $0x30] sm:$0xf]
                %548 = vst [vmem:[%s538 + $0x30] sm:$0xf] %v547
                %v549 = vld [vmem:[%s537 + $0x3c] sm:$0xf]
                %550 = vst [vmem:[%s538 + $0x3c] sm:$0xf] %v549
                %v551 = vld [vmem:[%s537 + $0x48] sm:$0xf]
                %552 = vst [vmem:[%s538 + $0x48] sm:$0xf] %v551
                %v553 = vld [vmem:[%s537 + $0x54] sm:$0xf]
                %554 = vst [vmem:[%s538 + $0x54] sm:$0xf] %v553
                %v555 = vld [vmem:[%s537 + $0x60] sm:$0xf]
                %556 = vst [vmem:[%s538 + $0x60] sm:$0xf] %v555
                %v557 = vld [vmem:[%s537 + $0x21c] sm:$0xf]
                %558 = vst [vmem:[%s538 + $0x6c] sm:$0xf] %v557
                %v559 = vld [vmem:[%s537 + $0x228] sm:$0xf]
                %560 = vst [vmem:[%s538 + $0x78] sm:$0xf] %v559
                %v561 = vld [vmem:[%s537 + $0x234] sm:$0xf]
                %562 = vst [vmem:[%s538 + $0x84] sm:$0xf] %v561
                %v563 = vld [vmem:[%s537 + $0x240] sm:$0xf]
                %564 = vst [vmem:[%s538 + $0x90] sm:$0xf] %v563
                %v565 = vld [vmem:[%s537 + $0x24c] sm:$0xf]
                %566 = vst [vmem:[%s538 + $0x9c] sm:$0xf] %v565
                %v567 = vld [vmem:[%s537 + $0x258] sm:$0xf]
                %568 = vst [vmem:[%s538 + $0xa8] sm:$0xf] %v567
                %v569 = vld [vmem:[%s537 + $0x264] sm:$0xf]
                %570 = vst [vmem:[%s538 + $0xb4] sm:$0xf] %v569
                %v571 = vld [vmem:[%s537 + $0x270] sm:$0xf]
                %572 = vst [vmem:[%s538 + $0xc0] sm:$0xf] %v571
                %v573 = vld [vmem:[%s537 + $0x27c] sm:$0xf]
                %574 = vst [vmem:[%s538 + $0xcc] sm:$0xf] %v573
                %v575 = vld [vmem:[%s537 + $0x438] sm:$0xf]
                %576 = vst [vmem:[%s538 + $0xd8] sm:$0xf] %v575
                %v577 = vld [vmem:[%s537 + $0x444] sm:$0xf]
                %578 = vst [vmem:[%s538 + $0xe4] sm:$0xf] %v577
                %v579 = vld [vmem:[%s537 + $0x450] sm:$0xf]
                %580 = vst [vmem:[%s538 + $0xf0] sm:$0xf] %v579
                %v581 = vld [vmem:[%s537 + $0x45c] sm:$0xf]
                %582 = vst [vmem:[%s538 + $0xfc] sm:$0xf] %v581
                %v583 = vld [vmem:[%s537 + $0x468] sm:$0xf]
                %584 = vst [vmem:[%s538 + $0x108] sm:$0xf] %v583
                %v585 = vld [vmem:[%s537 + $0x474] sm:$0xf]
                %586 = vst [vmem:[%s538 + $0x114] sm:$0xf] %v585
                %v587 = vld [vmem:[%s537 + $0x480] sm:$0xf]
                %588 = vst [vmem:[%s538 + $0x120] sm:$0xf] %v587
                %v589 = vld [vmem:[%s537 + $0x48c] sm:$0xf]
                %590 = vst [vmem:[%s538 + $0x12c] sm:$0xf] %v589
                %v591 = vld [vmem:[%s537 + $0x498] sm:$0xf]
                %592 = vst [vmem:[%s538 + $0x138] sm:$0xf] %v591
                %v593 = vld [vmem:[%s537 + $0x654] sm:$0xf]
                %594 = vst [vmem:[%s538 + $0x144] sm:$0xf] %v593
                %v595 = vld [vmem:[%s537 + $0x660] sm:$0xf]
                %596 = vst [vmem:[%s538 + $0x150] sm:$0xf] %v595
                %v597 = vld [vmem:[%s537 + $0x66c] sm:$0xf]
                %598 = vst [vmem:[%s538 + $0x15c] sm:$0xf] %v597
                %v599 = vld [vmem:[%s537 + $0x678] sm:$0xf]
                %600 = vst [vmem:[%s538 + $0x168] sm:$0xf] %v599
                %v601 = vld [vmem:[%s537 + $0x684] sm:$0xf]
                %602 = vst [vmem:[%s538 + $0x174] sm:$0xf] %v601
                %v603 = vld [vmem:[%s537 + $0x690] sm:$0xf]
                %604 = vst [vmem:[%s538 + $0x180] sm:$0xf] %v603
                %v605 = vld [vmem:[%s537 + $0x69c] sm:$0xf]
                %606 = vst [vmem:[%s538 + $0x18c] sm:$0xf] %v605
                %v607 = vld [vmem:[%s537 + $0x6a8] sm:$0xf]
                %608 = vst [vmem:[%s538 + $0x198] sm:$0xf] %v607
                %v609 = vld [vmem:[%s537 + $0x6b4] sm:$0xf]
                %610 = vst [vmem:[%s538 + $0x1a4] sm:$0xf] %v609
                %v611 = vld [vmem:[%s537 + $0x870] sm:$0xf]
                %612 = vst [vmem:[%s538 + $0x1b0] sm:$0xf] %v611
                %v613 = vld [vmem:[%s537 + $0x87c] sm:$0xf]
                %614 = vst [vmem:[%s538 + $0x1bc] sm:$0xf] %v613
                %v615 = vld [vmem:[%s537 + $0x888] sm:$0xf]
                %616 = vst [vmem:[%s538 + $0x1c8] sm:$0xf] %v615
                %v617 = vld [vmem:[%s537 + $0x894] sm:$0xf]
                %618 = vst [vmem:[%s538 + $0x1d4] sm:$0xf] %v617
                %v619 = vld [vmem:[%s537 + $0x8a0] sm:$0xf]
                %620 = vst [vmem:[%s538 + $0x1e0] sm:$0xf] %v619
                %v621 = vld [vmem:[%s537 + $0x8ac] sm:$0xf]
                %622 = vst [vmem:[%s538 + $0x1ec] sm:$0xf] %v621
                %v623 = vld [vmem:[%s537 + $0x8b8] sm:$0xf]
                %624 = vst [vmem:[%s538 + $0x1f8] sm:$0xf] %v623
                %v625 = vld [vmem:[%s537 + $0x8c4] sm:$0xf]
                %626 = vst [vmem:[%s538 + $0x204] sm:$0xf] %v625
                %v627 = vld [vmem:[%s537 + $0x8d0] sm:$0xf]
                %628 = vst [vmem:[%s538 + $0x210] sm:$0xf] %v627
                %v629 = vld [vmem:[%s537 + $0xa8c] sm:$0xf]
                %630 = vst [vmem:[%s538 + $0x21c] sm:$0xf] %v629
                %v631 = vld [vmem:[%s537 + $0xa98] sm:$0xf]
                %632 = vst [vmem:[%s538 + $0x228] sm:$0xf] %v631
                %v633 = vld [vmem:[%s537 + $0xaa4] sm:$0xf]
                %634 = vst [vmem:[%s538 + $0x234] sm:$0xf] %v633
                %v635 = vld [vmem:[%s537 + $0xab0] sm:$0xf]
                %636 = vst [vmem:[%s538 + $0x240] sm:$0xf] %v635
                %v637 = vld [vmem:[%s537 + $0xabc] sm:$0xf]
                %638 = vst [vmem:[%s538 + $0x24c] sm:$0xf] %v637
                %v639 = vld [vmem:[%s537 + $0xac8] sm:$0xf]
                %640 = vst [vmem:[%s538 + $0x258] sm:$0xf] %v639
                %v641 = vld [vmem:[%s537 + $0xad4] sm:$0xf]
                %642 = vst [vmem:[%s538 + $0x264] sm:$0xf] %v641
                %v643 = vld [vmem:[%s537 + $0xae0] sm:$0xf]
                %644 = vst [vmem:[%s538 + $0x270] sm:$0xf] %v643
                %v645 = vld [vmem:[%s537 + $0xaec] sm:$0xf]
                %646 = vst [vmem:[%s538 + $0x27c] sm:$0xf] %v645
              $region84: #{model_base_forward.1} parent=71 // loop_footer
                %s536 = sadd.s32 1, %s532
              $region85: #{model_base_forward.1} parent=71 // loop_footer_branch
                %531 = sbr.rel target = $region81
              $region86: #{model_base_forward.1} parent=71 // loop_exit
                _
            $region72: #{model_base_forward.1} parent=67 // pred_fallthru
              _
          $region68: #{model_base_forward.1} parent=63 // pred_fallthru
            _
          %647 = vnop
        $region64: #{model_base_forward.1} parent=51 // pred_fallthru
          _
      $region52: #{model_base_forward.1} parent=5 // pred_fallthru
        _
      %p648 = scmp.le.s32.totalorder 1, %s20
      %p649 = scmp.lt.s32.totalorder %s20, 11
      %p650 = pnand %p648, %p649
      %p651 = pneg %p650
      // Predicated region
      $region87: #{model_base_forward.1} parent=5 // pred_check
        _
      $region88: #{model_base_forward.1} parent=5 // pred_check_branch
        %653 = sbr.rel (%p650) target = $region90
      $region89: #{model_base_forward.1} parent=5 // pred_region
        %s654 = ssub.s32 %s20, 1
        %s655 = sand.u32 %s101, 1
        %s656 = sand.u32 %s101, 1
        %s657 = smul.addr %s656, 648
        %s658 = scalar_lea.vmem [#allocation4], %s657
        // Predicated region
        $region91: #{model_base_forward.1} parent=89 // pred_check
          %p659 = pneg %p114
        $region92: #{model_base_forward.1} parent=89 // pred_check_branch
          %661 = sbr.rel (%p659) target = $region94
        $region93: #{model_base_forward.1} parent=89 // pred_region
          _
        $region94: #{model_base_forward.1} parent=89 // pred_fallthru
          _
        %p662 = scmp.lt.s32.totalorder %s29, 1
        %s663 = scalar_select %p662, %s29, 1
        %s664 = smul.addr %s663, 42
        %s665 = smul.addr %s664, 8
        %s666 = scalar_lea.vmem %s0, %s665
        %p667 = pneg %p58
        %p668 = pneg %p55
        %s669 = smul.u32 9, %s30
        %p670 = scmp.lt.s32.totalorder %s29, 1
        %s671 = scalar_select %p670, %s29, 1
        %p672 = scmp.lt.s32.totalorder %s669, 44
        %s673 = scalar_select %p672, %s669, 44
        %s674 = smul.addr %s671, 45
        %s675 = sadd.s32 %s673, %s674
        %s676 = smul.addr %s675, 8
        %s677 = scalar_lea.vmem %s1, %s676
        %p678 = pneg %p86
        %p679 = pneg %p83
        %s680 = sand.u32 %s101, 1
        %s681 = sand.u32 %s101, 1
        %s682 = smul.addr %s681, 648
        %s683 = scalar_lea.vmem [#allocation4], %s682
        %p684 = pneg %p114
        %p685 = pneg %p111
        %p686 = pneg %p135
        %p687 = pneg %p132
        %p688 = pneg %p156
        %p689 = pneg %p153
        %p690 = pneg %p177
        %p691 = pneg %p174
        %p692 = pneg %p198
        %p693 = pneg %p195
        %p694 = pneg %p219
        %p695 = pneg %p216
        %p696 = pneg %p240
        %p697 = pneg %p237
        %p698 = pneg %p261
        %p699 = pneg %p258
        %p700 = pneg %p282
        %p701 = pneg %p279
        %p702 = pneg %p303
        %p703 = pneg %p300
        %p704 = pneg %p329
        %p705 = pneg %p326
        %p706 = scmp.lt.s32.totalorder %s29, 1
        %s707 = scalar_select %p706, %s29, 1
        %s708 = scalar_lea.vmem %s12, %s707
        %p709 = scmp.lt.s32.totalorder %s29, 1
        %s710 = scalar_select %p709, %s29, 1
        %s711 = smul.addr %s710, 42
        %s712 = smul.addr %s711, 8
        %s713 = scalar_lea.vmem %s0, %s712
        %s714 = smul.u32 9, %s30
        %p715 = scmp.lt.s32.totalorder %s29, 1
        %s716 = scalar_select %p715, %s29, 1
        %p717 = scmp.lt.s32.totalorder %s714, 44
        %s718 = scalar_select %p717, %s714, 44
        %s719 = smul.addr %s716, 45
        %s720 = sadd.s32 %s718, %s719
        %s721 = smul.addr %s720, 8
        %s722 = scalar_lea.vmem %s1, %s721
        %s723 = smul.u32 9, %s30
        %p724 = scmp.lt.s32.totalorder %s29, 1
        %s725 = scalar_select %p724, %s29, 1
        %s726 = scalar_lea.vmem %s12, %s725
        %p727 = scmp.eq.s32.totalorder %s30, 0
        // Predicated region
        $region95: #{model_base_forward.1} parent=89 // pred_check
          %p728 = pneg %p727
        $region96: #{model_base_forward.1} parent=89 // pred_check_branch
          %730 = sbr.rel (%p728) target = $region98
        $region97: #{model_base_forward.1} parent=89 // pred_region
          %vm731 = vcmask 0
          %732 = vst.msk [vmem:[#allocation2] sm:$0x1] %vm731, 0.0
        $region98: #{model_base_forward.1} parent=89 // pred_fallthru
          _
        %v733 = vld [vmem:[%s713] sm:$0xff]
        %v734 = vld [vmem:[%s713 + $0x8] sm:$0xff]
        %v735 = vld [vmem:[%s713 + $0x10] sm:$0xff]
        %v736 = vld [vmem:[%s713 + $0x18] sm:$0xff]
        %v737 = vld [vmem:[%s713 + $0x20] sm:$0xff]
        %v738 = vld [vmem:[%s713 + $0x28] sm:$0xff]
        %v739 = vld [vmem:[%s713 + $0x30] sm:$0xff]
        %v740 = vld [vmem:[%s713 + $0x38] sm:$0xff]
        %v741 = vld [vmem:[%s713 + $0x40] sm:$0xff]
        %v742 = vld [vmem:[%s713 + $0x48] sm:$0xff]
        %v743 = vld [vmem:[%s713 + $0x50] sm:$0xff]
        %v744 = vld [vmem:[%s713 + $0x58] sm:$0xff]
        %v745 = vld [vmem:[%s713 + $0x60] sm:$0xff]
        %v746 = vld [vmem:[%s713 + $0x68] sm:$0xff]
        %v747 = vld [vmem:[%s713 + $0x70] sm:$0xff]
        %v748 = vld [vmem:[%s713 + $0x78] sm:$0xff]
        %v749 = vld [vmem:[%s713 + $0x80] sm:$0xff]
        %v750 = vld [vmem:[%s713 + $0x88] sm:$0xff]
        %v751 = vld [vmem:[%s713 + $0x90] sm:$0xff]
        %v752 = vld [vmem:[%s713 + $0x98] sm:$0xff]
        %v753 = vld [vmem:[%s713 + $0xa0] sm:$0xff]
        %v754 = vld [vmem:[%s713 + $0xa8] sm:$0xff]
        %v755 = vld [vmem:[%s713 + $0xb0] sm:$0xff]
        %v756 = vld [vmem:[%s713 + $0xb8] sm:$0xff]
        %v757 = vld [vmem:[%s713 + $0xc0] sm:$0xff]
        %v758 = vld [vmem:[%s713 + $0xc8] sm:$0xff]
        %v759 = vld [vmem:[%s713 + $0xd0] sm:$0xff]
        %v760 = vld [vmem:[%s713 + $0xd8] sm:$0xff]
        %v761 = vld [vmem:[%s713 + $0xe0] sm:$0xff]
        %v762 = vld [vmem:[%s713 + $0xe8] sm:$0xff]
        %v763 = vld [vmem:[%s713 + $0xf0] sm:$0xff]
        %v764 = vld [vmem:[%s713 + $0xf8] sm:$0xff]
        %v765 = vld [vmem:[%s713 + $0x100] sm:$0xff]
        %v766 = vld [vmem:[%s713 + $0x108] sm:$0xff]
        %v767 = vld [vmem:[%s713 + $0x110] sm:$0xff]
        %v768 = vld [vmem:[%s713 + $0x118] sm:$0xff]
        %v769 = vld [vmem:[%s713 + $0x120] sm:$0xff]
        %v770 = vld [vmem:[%s713 + $0x128] sm:$0xff]
        %v771 = vld [vmem:[%s713 + $0x130] sm:$0xff]
        %v772 = vld [vmem:[%s713 + $0x138] sm:$0xff]
        %v773 = vld [vmem:[%s713 + $0x140] sm:$0xff]
        %v774 = vld [vmem:[%s713 + $0x148] sm:$0x3]
        %v775 = vld [vmem:[%s3] sm:$0xf]
        %v776 = vld [vmem:[%s4] sm:$0x1]
        %v778 = vlaneseq
        %v779 = vshrl.u32 %v778, 7
        %v780 = vsub.s32 0, %v779
        %v781 = vrot.slane %v776, %v780
        %vm783 = vcmask 31744
        %v785 = vsel %vm783, %v733, 0
        %v788 = vsel %vm783, %v734, 0
        %v791 = vsel %vm783, %v735, 0
        %v794 = vsel %vm783, %v736, 0
        %v797 = vsel %vm783, %v737, 0
        %v800 = vsel %vm783, %v738, 0
        %v803 = vsel %vm783, %v739, 0
        %v806 = vsel %vm783, %v740, 0
        %v809 = vsel %vm783, %v741, 0
        %v812 = vsel %vm783, %v742, 0
        %v815 = vsel %vm783, %v743, 0
        %v818 = vsel %vm783, %v744, 0
        %v821 = vsel %vm783, %v745, 0
        %v824 = vsel %vm783, %v746, 0
        %v827 = vsel %vm783, %v747, 0
        %v830 = vsel %vm783, %v748, 0
        %v833 = vsel %vm783, %v749, 0
        %v836 = vsel %vm783, %v750, 0
        %v839 = vsel %vm783, %v751, 0
        %v842 = vsel %vm783, %v752, 0
        %v845 = vsel %vm783, %v753, 0
        %v848 = vsel %vm783, %v754, 0
        %v851 = vsel %vm783, %v755, 0
        %v854 = vsel %vm783, %v756, 0
        %v857 = vsel %vm783, %v757, 0
        %v860 = vsel %vm783, %v758, 0
        %v863 = vsel %vm783, %v759, 0
        %v866 = vsel %vm783, %v760, 0
        %v869 = vsel %vm783, %v761, 0
        %v872 = vsel %vm783, %v762, 0
        %v875 = vsel %vm783, %v763, 0
        %v878 = vsel %vm783, %v764, 0
        %v881 = vsel %vm783, %v765, 0
        %v884 = vsel %vm783, %v766, 0
        %v887 = vsel %vm783, %v767, 0
        %v890 = vsel %vm783, %v768, 0
        %v893 = vsel %vm783, %v769, 0
        %v896 = vsel %vm783, %v770, 0
        %v899 = vsel %vm783, %v771, 0
        %v902 = vsel %vm783, %v772, 0
        %v905 = vsel %vm783, %v773, 0
        %v908 = vsel %vm783, %v774, 0
        %vm910 = vcmask 1043456
        %v912 = vsel %vm910, %v775, 0
        %914 = vmatprep.subr.mxu0 0.0
        %915 = vmatpush1.msra.mxu0 %v912
        %916 = vmatprep.subr.mxu0 0.0
        %917 = vmatpush1.msra.mxu0 0.0
        %918 = vmatprep.subr.mxu0 0.0
        %919 = vmatpush1.msra.mxu0 0.0
        %920 = vmatprep.subr.mxu0 0.0
        %921 = vmatpush1.msra.mxu0 0.0
        %922 = vmatprep.subr.mxu0 0.0
        %923 = vmatpush1.msra.mxu0 0.0
        %924 = vmatprep.subr.mxu0 0.0
        %925 = vmatpush1.msra.mxu0 0.0
        %926 = vmatprep.subr.mxu0 0.0
        %927 = vmatpush1.msra.mxu0 0.0
        %928 = vmatprep.subr.mxu0 0.0
        %929 = vmatpush1.msra.mxu0 0.0
        %930 = vmatprep.subr.mxu0 0.0
        %931 = vmatpush1.msra.mxu0 0.0
        %932 = vmatprep.subr.mxu0 0.0
        %933 = vmatpush1.msra.mxu0 0.0
        %934 = vmatprep.subr.mxu0 0.0
        %935 = vmatpush1.msra.mxu0 0.0
        %936 = vmatprep.subr.mxu0 0.0
        %937 = vmatpush1.msra.mxu0 0.0
        %938 = vmatprep.subr.mxu0 0.0
        %939 = vmatpush1.msra.mxu0 0.0
        %940 = vmatprep.subr.mxu0 0.0
        %941 = vmatpush1.msra.mxu0 0.0
        %942 = vmatprep.subr.mxu0 0.0
        %943 = vmatpush1.msra.mxu0 0.0
        %944 = vmatprep.subr.mxu0 0.0
        %945 = vmatpush1.msra.mxu0 0.0
        %946 = vmatprep.subr.mxu0 0.0
        %947 = vmatpush1.msra.mxu0 0.0
        %948 = vmatprep.subr.mxu0 0.0
        %949 = vmatpush1.msra.mxu0 0.0
        %950 = vmatprep.subr.mxu0 0.0
        %951 = vmatpush1.msra.mxu0 0.0
        %952 = vmatprep.subr.mxu0 0.0
        %953 = vmatpush1.msra.mxu0 0.0
        %954 = vmatprep.subr.mxu0 0.0
        %955 = vmatpush1.msra.mxu0 0.0
        %956 = vmatprep.subr.mxu0 0.0
        %957 = vmatpush1.msra.mxu0 0.0
        %958 = vmatprep.subr.mxu0 0.0
        %959 = vmatpush1.msra.mxu0 0.0
        %960 = vmatprep.subr.mxu0 0.0
        %961 = vmatpush1.msra.mxu0 0.0
        %962 = vmatprep.subr.mxu0 0.0
        %963 = vmatpush1.msra.mxu0 0.0
        %964 = vmatprep.subr.mxu0 0.0
        %965 = vmatpush1.msra.mxu0 0.0
        %966 = vmatprep.subr.mxu0 0.0
        %967 = vmatpush1.msra.mxu0 0.0
        %968 = vmatprep.subr.mxu0 0.0
        %969 = vmatpush1.msra.mxu0 0.0
        %970 = vmatprep.subr.mxu0 0.0
        %971 = vmatpush1.msra.mxu0 0.0
        %972 = vmatprep.subr.mxu0 0.0
        %973 = vmatpush1.msra.mxu0 0.0
        %974 = vmatprep.subr.mxu0 0.0
        %975 = vmatpush1.msra.mxu0 0.0
        %976 = vmatprep.subr.mxu0 0.0
        %977 = vmatpush1.msra.mxu0 0.0
        %978 = vmatprep.mubr.f32.mxu0 0.0
        %979 = vmatmul.mubr.f32.gmra.mrb[0].mxu0 %v785
        %v980 = vpop.f32.mrb[0].mxu0
        %v981 = vadd.f32 %v781, %v980
        %v982 = vpop.f32.mrb[0].mxu0
        %983 = vmatprep.mubr.f32.mxu0 0.0
        %984 = vmatmul.mubr.f32.gmra.mrb[0].mxu0 %v788
        %v985 = vpop.f32.mrb[0].mxu0
        %v986 = vadd.f32 %v781, %v985
        %v987 = vpop.f32.mrb[0].mxu0
        %988 = vmatprep.mubr.f32.mxu0 0.0
        %989 = vmatmul.mubr.f32.gmra.mrb[0].mxu0 %v791
        %v990 = vpop.f32.mrb[0].mxu0
        %v991 = vadd.f32 %v781, %v990
        %v992 = vpop.f32.mrb[0].mxu0
        %993 = vmatprep.mubr.f32.mxu0 0.0
        %994 = vmatmul.mubr.f32.gmra.mrb[0].mxu0 %v794
        %v995 = vpop.f32.mrb[0].mxu0
        %v996 = vadd.f32 %v781, %v995
        %v997 = vpop.f32.mrb[0].mxu0
        %998 = vmatprep.mubr.f32.mxu0 0.0
        %999 = vmatmul.mubr.f32.gmra.mrb[0].mxu0 %v797
        %v1000 = vpop.f32.mrb[0].mxu0
        %v1001 = vadd.f32 %v781, %v1000
        %v1002 = vpop.f32.mrb[0].mxu0
        %1003 = vmatprep.mubr.f32.mxu0 0.0
        %1004 = vmatmul.mubr.f32.gmra.mrb[0].mxu0 %v800
        %v1005 = vpop.f32.mrb[0].mxu0
        %v1006 = vadd.f32 %v781, %v1005
        %v1007 = vpop.f32.mrb[0].mxu0
        %1008 = vmatprep.mubr.f32.mxu0 0.0
        %1009 = vmatmul.mubr.f32.gmra.mrb[0].mxu0 %v803
        %v1010 = vpop.f32.mrb[0].mxu0
        %v1011 = vadd.f32 %v781, %v1010
        %v1012 = vpop.f32.mrb[0].mxu0
        %1013 = vmatprep.mubr.f32.mxu0 0.0
        %1014 = vmatmul.mubr.f32.gmra.mrb[0].mxu0 %v806
        %v1015 = vpop.f32.mrb[0].mxu0
        %v1016 = vadd.f32 %v781, %v1015
        %v1017 = vpop.f32.mrb[0].mxu0
        %1018 = vmatprep.mubr.f32.mxu0 0.0
        %1019 = vmatmul.mubr.f32.gmra.mrb[0].mxu0 %v809
        %v1020 = vpop.f32.mrb[0].mxu0
        %v1021 = vadd.f32 %v781, %v1020
        %v1022 = vpop.f32.mrb[0].mxu0
        %1023 = vmatprep.mubr.f32.mxu0 0.0
        %1024 = vmatmul.mubr.f32.gmra.mrb[0].mxu0 %v812
        %v1025 = vpop.f32.mrb[0].mxu0
        %v1026 = vadd.f32 %v781, %v1025
        %v1027 = vpop.f32.mrb[0].mxu0
        %1028 = vmatprep.mubr.f32.mxu0 0.0
        %1029 = vmatmul.mubr.f32.gmra.mrb[0].mxu0 %v815
        %v1030 = vpop.f32.mrb[0].mxu0
        %v1031 = vadd.f32 %v781, %v1030
        %v1032 = vpop.f32.mrb[0].mxu0
        %1033 = vmatprep.mubr.f32.mxu0 0.0
        %1034 = vmatmul.mubr.f32.gmra.mrb[0].mxu0 %v818
        %v1035 = vpop.f32.mrb[0].mxu0
        %v1036 = vadd.f32 %v781, %v1035
        %v1037 = vpop.f32.mrb[0].mxu0
        %1038 = vmatprep.mubr.f32.mxu0 0.0
        %1039 = vmatmul.mubr.f32.gmra.mrb[0].mxu0 %v821
        %v1040 = vpop.f32.mrb[0].mxu0
        %v1041 = vadd.f32 %v781, %v1040
        %v1042 = vpop.f32.mrb[0].mxu0
        %1043 = vmatprep.mubr.f32.mxu0 0.0
        %1044 = vmatmul.mubr.f32.gmra.mrb[0].mxu0 %v824
        %v1045 = vpop.f32.mrb[0].mxu0
        %v1046 = vadd.f32 %v781, %v1045
        %v1047 = vpop.f32.mrb[0].mxu0
        %1048 = vmatprep.mubr.f32.mxu0 0.0
        %1049 = vmatmul.mubr.f32.gmra.mrb[0].mxu0 %v827
        %v1050 = vpop.f32.mrb[0].mxu0
        %v1051 = vadd.f32 %v781, %v1050
        %v1052 = vpop.f32.mrb[0].mxu0
        %1053 = vmatprep.mubr.f32.mxu0 0.0
        %1054 = vmatmul.mubr.f32.gmra.mrb[0].mxu0 %v830
        %v1055 = vpop.f32.mrb[0].mxu0
        %v1056 = vadd.f32 %v781, %v1055
        %v1057 = vpop.f32.mrb[0].mxu0
        %1058 = vmatprep.mubr.f32.mxu0 0.0
        %1059 = vmatmul.mubr.f32.gmra.mrb[0].mxu0 %v833
        %v1060 = vpop.f32.mrb[0].mxu0
        %v1061 = vadd.f32 %v781, %v1060
        %v1062 = vpop.f32.mrb[0].mxu0
        %1063 = vmatprep.mubr.f32.mxu0 0.0
        %1064 = vmatmul.mubr.f32.gmra.mrb[0].mxu0 %v836
        %v1065 = vpop.f32.mrb[0].mxu0
        %v1066 = vadd.f32 %v781, %v1065
        %v1067 = vpop.f32.mrb[0].mxu0
        %1068 = vmatprep.mubr.f32.mxu0 0.0
        %1069 = vmatmul.mubr.f32.gmra.mrb[0].mxu0 %v839
        %v1070 = vpop.f32.mrb[0].mxu0
        %v1071 = vadd.f32 %v781, %v1070
        %v1072 = vpop.f32.mrb[0].mxu0
        %1073 = vmatprep.mubr.f32.mxu0 0.0
        %1074 = vmatmul.mubr.f32.gmra.mrb[0].mxu0 %v842
        %v1075 = vpop.f32.mrb[0].mxu0
        %v1076 = vadd.f32 %v781, %v1075
        %v1077 = vpop.f32.mrb[0].mxu0
        %1078 = vmatprep.mubr.f32.mxu0 0.0
        %1079 = vmatmul.mubr.f32.gmra.mrb[0].mxu0 %v845
        %v1080 = vpop.f32.mrb[0].mxu0
        %v1081 = vadd.f32 %v781, %v1080
        %v1082 = vpop.f32.mrb[0].mxu0
        %1083 = vmatprep.mubr.f32.mxu0 0.0
        %1084 = vmatmul.mubr.f32.gmra.mrb[0].mxu0 %v848
        %v1085 = vpop.f32.mrb[0].mxu0
        %v1086 = vadd.f32 %v781, %v1085
        %v1087 = vpop.f32.mrb[0].mxu0
        %1088 = vmatprep.mubr.f32.mxu0 0.0
        %1089 = vmatmul.mubr.f32.gmra.mrb[0].mxu0 %v851
        %v1090 = vpop.f32.mrb[0].mxu0
        %v1091 = vadd.f32 %v781, %v1090
        %v1092 = vpop.f32.mrb[0].mxu0
        %1093 = vmatprep.mubr.f32.mxu0 0.0
        %1094 = vmatmul.mubr.f32.gmra.mrb[0].mxu0 %v854
        %v1095 = vpop.f32.mrb[0].mxu0
        %v1096 = vadd.f32 %v781, %v1095
        %v1097 = vpop.f32.mrb[0].mxu0
        %1098 = vmatprep.mubr.f32.mxu0 0.0
        %1099 = vmatmul.mubr.f32.gmra.mrb[0].mxu0 %v857
        %v1100 = vpop.f32.mrb[0].mxu0
        %v1101 = vadd.f32 %v781, %v1100
        %v1102 = vpop.f32.mrb[0].mxu0
        %1103 = vmatprep.mubr.f32.mxu0 0.0
        %1104 = vmatmul.mubr.f32.gmra.mrb[0].mxu0 %v860
        %v1105 = vpop.f32.mrb[0].mxu0
        %v1106 = vadd.f32 %v781, %v1105
        %v1107 = vpop.f32.mrb[0].mxu0
        %1108 = vmatprep.mubr.f32.mxu0 0.0
        %1109 = vmatmul.mubr.f32.gmra.mrb[0].mxu0 %v863
        %v1110 = vpop.f32.mrb[0].mxu0
        %v1111 = vadd.f32 %v781, %v1110
        %v1112 = vpop.f32.mrb[0].mxu0
        %1113 = vmatprep.mubr.f32.mxu0 0.0
        %1114 = vmatmul.mubr.f32.gmra.mrb[0].mxu0 %v866
        %v1115 = vpop.f32.mrb[0].mxu0
        %v1116 = vadd.f32 %v781, %v1115
        %v1117 = vpop.f32.mrb[0].mxu0
        %1118 = vmatprep.mubr.f32.mxu0 0.0
        %1119 = vmatmul.mubr.f32.gmra.mrb[0].mxu0 %v869
        %v1120 = vpop.f32.mrb[0].mxu0
        %v1121 = vadd.f32 %v781, %v1120
        %v1122 = vpop.f32.mrb[0].mxu0
        %1123 = vmatprep.mubr.f32.mxu0 0.0
        %1124 = vmatmul.mubr.f32.gmra.mrb[0].mxu0 %v872
        %v1125 = vpop.f32.mrb[0].mxu0
        %v1126 = vadd.f32 %v781, %v1125
        %v1127 = vpop.f32.mrb[0].mxu0
        %1128 = vmatprep.mubr.f32.mxu0 0.0
        %1129 = vmatmul.mubr.f32.gmra.mrb[0].mxu0 %v875
        %v1130 = vpop.f32.mrb[0].mxu0
        %v1131 = vadd.f32 %v781, %v1130
        %v1132 = vpop.f32.mrb[0].mxu0
        %1133 = vmatprep.mubr.f32.mxu0 0.0
        %1134 = vmatmul.mubr.f32.gmra.mrb[0].mxu0 %v878
        %v1135 = vpop.f32.mrb[0].mxu0
        %v1136 = vadd.f32 %v781, %v1135
        %v1137 = vpop.f32.mrb[0].mxu0
        %1138 = vmatprep.mubr.f32.mxu0 0.0
        %1139 = vmatmul.mubr.f32.gmra.mrb[0].mxu0 %v881
        %v1140 = vpop.f32.mrb[0].mxu0
        %v1141 = vadd.f32 %v781, %v1140
        %v1142 = vpop.f32.mrb[0].mxu0
        %1143 = vmatprep.mubr.f32.mxu0 0.0
        %1144 = vmatmul.mubr.f32.gmra.mrb[0].mxu0 %v884
        %v1145 = vpop.f32.mrb[0].mxu0
        %v1146 = vadd.f32 %v781, %v1145
        %v1147 = vpop.f32.mrb[0].mxu0
        %1148 = vmatprep.mubr.f32.mxu0 0.0
        %1149 = vmatmul.mubr.f32.gmra.mrb[0].mxu0 %v887
        %v1150 = vpop.f32.mrb[0].mxu0
        %v1151 = vadd.f32 %v781, %v1150
        %v1152 = vpop.f32.mrb[0].mxu0
        %1153 = vmatprep.mubr.f32.mxu0 0.0
        %1154 = vmatmul.mubr.f32.gmra.mrb[0].mxu0 %v890
        %v1155 = vpop.f32.mrb[0].mxu0
        %v1156 = vadd.f32 %v781, %v1155
        %v1157 = vpop.f32.mrb[0].mxu0
        %1158 = vmatprep.mubr.f32.mxu0 0.0
        %1159 = vmatmul.mubr.f32.gmra.mrb[0].mxu0 %v893
        %v1160 = vpop.f32.mrb[0].mxu0
        %v1161 = vadd.f32 %v781, %v1160
        %v1162 = vpop.f32.mrb[0].mxu0
        %1163 = vmatprep.mubr.f32.mxu0 0.0
        %1164 = vmatmul.mubr.f32.gmra.mrb[0].mxu0 %v896
        %v1165 = vpop.f32.mrb[0].mxu0
        %v1166 = vadd.f32 %v781, %v1165
        %v1167 = vpop.f32.mrb[0].mxu0
        %1168 = vmatprep.mubr.f32.mxu0 0.0
        %1169 = vmatmul.mubr.f32.gmra.mrb[0].mxu0 %v899
        %v1170 = vpop.f32.mrb[0].mxu0
        %v1171 = vadd.f32 %v781, %v1170
        %v1172 = vpop.f32.mrb[0].mxu0
        %1173 = vmatprep.mubr.f32.mxu0 0.0
        %1174 = vmatmul.mubr.f32.gmra.mrb[0].mxu0 %v902
        %v1175 = vpop.f32.mrb[0].mxu0
        %v1176 = vadd.f32 %v781, %v1175
        %v1177 = vpop.f32.mrb[0].mxu0
        %1178 = vmatprep.mubr.f32.mxu0 0.0
        %1179 = vmatmul.mubr.f32.gmra.mrb[0].mxu0 %v905
        %v1180 = vpop.f32.mrb[0].mxu0
        %v1181 = vadd.f32 %v781, %v1180
        %v1182 = vpop.f32.mrb[0].mxu0
        %1183 = vmatprep.mubr.f32.mxu0 0.0
        %1184 = vmatmul.mubr.f32.gmra.mrb[0].mxu0 %v908
        %v1185 = vpop.f32.mrb[0].mxu0
        %v1186 = vadd.f32 %v781, %v1185
        %v1187 = vpop.f32.mrb[0].mxu0
        %1188 = vdwg.mxu0
        %v1189 = vld [vmem:[%s722] sm:$0xff]
        %v1190 = vld [vmem:[%s722 + $0x8] sm:$0xff]
        %v1191 = vld [vmem:[%s722 + $0x10] sm:$0xff]
        %v1192 = vld [vmem:[%s722 + $0x18] sm:$0xff]
        %v1193 = vld [vmem:[%s722 + $0x20] sm:$0xff]
        %v1194 = vld [vmem:[%s722 + $0x28] sm:$0xff]
        %v1195 = vld [vmem:[%s722 + $0x30] sm:$0xff]
        %v1196 = vld [vmem:[%s722 + $0x38] sm:$0xff]
        %v1197 = vld [vmem:[%s722 + $0x40] sm:$0xff]
        %v1198 = vld [vmem:[%s5] sm:$0xf]
        %v1199 = vld [vmem:[%s6] sm:$0x1]
        %v1201 = vlaneseq
        %v1202 = vshrl.u32 %v1201, 7
        %v1203 = vsub.s32 0, %v1202
        %v1204 = vrot.slane %v1199, %v1203
        %v1207 = vsel %vm783, %v1189, 0
        %v1210 = vsel %vm783, %v1190, 0
        %v1213 = vsel %vm783, %v1191, 0
        %v1216 = vsel %vm783, %v1192, 0
        %v1219 = vsel %vm783, %v1193, 0
        %v1222 = vsel %vm783, %v1194, 0
        %v1225 = vsel %vm783, %v1195, 0
        %v1228 = vsel %vm783, %v1196, 0
        %v1231 = vsel %vm783, %v1197, 0
        %v1234 = vsel %vm910, %v1198, 0
        %1236 = vmatprep.subr.mxu0 0.0
        %1237 = vmatpush1.msra.mxu0 %v1234
        %1238 = vmatprep.subr.mxu0 0.0
        %1239 = vmatpush1.msra.mxu0 0.0
        %1240 = vmatprep.subr.mxu0 0.0
        %1241 = vmatpush1.msra.mxu0 0.0
        %1242 = vmatprep.subr.mxu0 0.0
        %1243 = vmatpush1.msra.mxu0 0.0
        %1244 = vmatprep.subr.mxu0 0.0
        %1245 = vmatpush1.msra.mxu0 0.0
        %1246 = vmatprep.subr.mxu0 0.0
        %1247 = vmatpush1.msra.mxu0 0.0
        %1248 = vmatprep.subr.mxu0 0.0
        %1249 = vmatpush1.msra.mxu0 0.0
        %1250 = vmatprep.subr.mxu0 0.0
        %1251 = vmatpush1.msra.mxu0 0.0
        %1252 = vmatprep.subr.mxu0 0.0
        %1253 = vmatpush1.msra.mxu0 0.0
        %1254 = vmatprep.subr.mxu0 0.0
        %1255 = vmatpush1.msra.mxu0 0.0
        %1256 = vmatprep.subr.mxu0 0.0
        %1257 = vmatpush1.msra.mxu0 0.0
        %1258 = vmatprep.subr.mxu0 0.0
        %1259 = vmatpush1.msra.mxu0 0.0
        %1260 = vmatprep.subr.mxu0 0.0
        %1261 = vmatpush1.msra.mxu0 0.0
        %1262 = vmatprep.subr.mxu0 0.0
        %1263 = vmatpush1.msra.mxu0 0.0
        %1264 = vmatprep.subr.mxu0 0.0
        %1265 = vmatpush1.msra.mxu0 0.0
        %1266 = vmatprep.subr.mxu0 0.0
        %1267 = vmatpush1.msra.mxu0 0.0
        %1268 = vmatprep.subr.mxu0 0.0
        %1269 = vmatpush1.msra.mxu0 0.0
        %1270 = vmatprep.subr.mxu0 0.0
        %1271 = vmatpush1.msra.mxu0 0.0
        %1272 = vmatprep.subr.mxu0 0.0
        %1273 = vmatpush1.msra.mxu0 0.0
        %1274 = vmatprep.subr.mxu0 0.0
        %1275 = vmatpush1.msra.mxu0 0.0
        %1276 = vmatprep.subr.mxu0 0.0
        %1277 = vmatpush1.msra.mxu0 0.0
        %1278 = vmatprep.subr.mxu0 0.0
        %1279 = vmatpush1.msra.mxu0 0.0
        %1280 = vmatprep.subr.mxu0 0.0
        %1281 = vmatpush1.msra.mxu0 0.0
        %1282 = vmatprep.subr.mxu0 0.0
        %1283 = vmatpush1.msra.mxu0 0.0
        %1284 = vmatprep.subr.mxu0 0.0
        %1285 = vmatpush1.msra.mxu0 0.0
        %1286 = vmatprep.subr.mxu0 0.0
        %1287 = vmatpush1.msra.mxu0 0.0
        %1288 = vmatprep.subr.mxu0 0.0
        %1289 = vmatpush1.msra.mxu0 0.0
        %1290 = vmatprep.subr.mxu0 0.0
        %1291 = vmatpush1.msra.mxu0 0.0
        %1292 = vmatprep.subr.mxu0 0.0
        %1293 = vmatpush1.msra.mxu0 0.0
        %1294 = vmatprep.subr.mxu0 0.0
        %1295 = vmatpush1.msra.mxu0 0.0
        %1296 = vmatprep.subr.mxu0 0.0
        %1297 = vmatpush1.msra.mxu0 0.0
        %1298 = vmatprep.subr.mxu0 0.0
        %1299 = vmatpush1.msra.mxu0 0.0
        %1300 = vmatprep.mubr.f32.mxu0 0.0
        %1301 = vmatmul.mubr.f32.gmra.mrb[0].mxu0 %v1207
        %v1302 = vpop.f32.mrb[0].mxu0
        %v1303 = vadd.f32 %v1204, %v1302
        %v1304 = vpop.f32.mrb[0].mxu0
        %1305 = vmatprep.mubr.f32.mxu0 0.0
        %1306 = vmatmul.mubr.f32.gmra.mrb[0].mxu0 %v1210
        %v1307 = vpop.f32.mrb[0].mxu0
        %v1308 = vadd.f32 %v1204, %v1307
        %v1309 = vpop.f32.mrb[0].mxu0
        %1310 = vmatprep.mubr.f32.mxu0 0.0
        %1311 = vmatmul.mubr.f32.gmra.mrb[0].mxu0 %v1213
        %v1312 = vpop.f32.mrb[0].mxu0
        %v1313 = vadd.f32 %v1204, %v1312
        %v1314 = vpop.f32.mrb[0].mxu0
        %1315 = vmatprep.mubr.f32.mxu0 0.0
        %1316 = vmatmul.mubr.f32.gmra.mrb[0].mxu0 %v1216
        %v1317 = vpop.f32.mrb[0].mxu0
        %v1318 = vadd.f32 %v1204, %v1317
        %v1319 = vpop.f32.mrb[0].mxu0
        %1320 = vmatprep.mubr.f32.mxu0 0.0
        %1321 = vmatmul.mubr.f32.gmra.mrb[0].mxu0 %v1219
        %v1322 = vpop.f32.mrb[0].mxu0
        %v1323 = vadd.f32 %v1204, %v1322
        %v1324 = vpop.f32.mrb[0].mxu0
        %1325 = vmatprep.mubr.f32.mxu0 0.0
        %1326 = vmatmul.mubr.f32.gmra.mrb[0].mxu0 %v1222
        %v1327 = vpop.f32.mrb[0].mxu0
        %v1328 = vadd.f32 %v1204, %v1327
        %v1329 = vpop.f32.mrb[0].mxu0
        %1330 = vmatprep.mubr.f32.mxu0 0.0
        %1331 = vmatmul.mubr.f32.gmra.mrb[0].mxu0 %v1225
        %v1332 = vpop.f32.mrb[0].mxu0
        %v1333 = vadd.f32 %v1204, %v1332
        %v1334 = vpop.f32.mrb[0].mxu0
        %1335 = vmatprep.mubr.f32.mxu0 0.0
        %1336 = vmatmul.mubr.f32.gmra.mrb[0].mxu0 %v1228
        %v1337 = vpop.f32.mrb[0].mxu0
        %v1338 = vadd.f32 %v1204, %v1337
        %v1339 = vpop.f32.mrb[0].mxu0
        %1340 = vmatprep.mubr.f32.mxu0 0.0
        %1341 = vmatmul.mubr.f32.gmra.mrb[0].mxu0 %v1231
        %v1342 = vpop.f32.mrb[0].mxu0
        %v1343 = vadd.f32 %v1204, %v1342
        %v1344 = vpop.f32.mrb[0].mxu0
        %1345 = vdwg.mxu0
        %v1346 = vld [vmem:[%s7] sm:$0x1f]
        %vm1347 = vcmask 261120
        %v1349 = vsel %vm1347, %v1303, 0
        %v1352 = vsel %vm1347, %v1308, 0
        %v1355 = vsel %vm1347, %v1313, 0
        %v1358 = vsel %vm1347, %v1318, 0
        %v1361 = vsel %vm1347, %v1323, 0
        %v1364 = vsel %vm1347, %v1328, 0
        %v1367 = vsel %vm1347, %v1333, 0
        %v1370 = vsel %vm1347, %v1338, 0
        %v1373 = vsel %vm1347, %v1343, 0
        %v1376 = vsel %vm1347, %v1346, 0
        %1378 = vmatprep.subr.mxu0 0.0
        %1379 = vmatpush1.xpose.msra.mxu0 %v1376
        %1380 = vmatprep.subr.mxu0 0.0
        %1381 = vmatpush1.xpose.msra.mxu0 0.0
        %1382 = vmatprep.subr.mxu0 0.0
        %1383 = vmatpush1.xpose.msra.mxu0 0.0
        %1384 = vmatprep.subr.mxu0 0.0
        %1385 = vmatpush1.xpose.msra.mxu0 0.0
        %1386 = vmatprep.subr.mxu0 0.0
        %1387 = vmatpush1.xpose.msra.mxu0 0.0
        %1388 = vmatprep.subr.mxu0 0.0
        %1389 = vmatpush1.xpose.msra.mxu0 0.0
        %1390 = vmatprep.subr.mxu0 0.0
        %1391 = vmatpush1.xpose.msra.mxu0 0.0
        %1392 = vmatprep.subr.mxu0 0.0
        %1393 = vmatpush1.xpose.msra.mxu0 0.0
        %1394 = vmatprep.subr.mxu0 0.0
        %1395 = vmatpush1.xpose.msra.mxu0 0.0
        %1396 = vmatprep.subr.mxu0 0.0
        %1397 = vmatpush1.xpose.msra.mxu0 0.0
        %1398 = vmatprep.subr.mxu0 0.0
        %1399 = vmatpush1.xpose.msra.mxu0 0.0
        %1400 = vmatprep.subr.mxu0 0.0
        %1401 = vmatpush1.xpose.msra.mxu0 0.0
        %1402 = vmatprep.subr.mxu0 0.0
        %1403 = vmatpush1.xpose.msra.mxu0 0.0
        %1404 = vmatprep.subr.mxu0 0.0
        %1405 = vmatpush1.xpose.msra.mxu0 0.0
        %1406 = vmatprep.subr.mxu0 0.0
        %1407 = vmatpush1.xpose.msra.mxu0 0.0
        %1408 = vmatprep.subr.mxu0 0.0
        %1409 = vmatpush1.xpose.msra.mxu0 0.0
        %1410 = vmatprep.subr.mxu0 0.0
        %1411 = vmatpush1.xpose.msra.mxu0 0.0
        %1412 = vmatprep.subr.mxu0 0.0
        %1413 = vmatpush1.xpose.msra.mxu0 0.0
        %1414 = vmatprep.subr.mxu0 0.0
        %1415 = vmatpush1.xpose.msra.mxu0 0.0
        %1416 = vmatprep.subr.mxu0 0.0
        %1417 = vmatpush1.xpose.msra.mxu0 0.0
        %1418 = vmatprep.subr.mxu0 0.0
        %1419 = vmatpush1.xpose.msra.mxu0 0.0
        %1420 = vmatprep.subr.mxu0 0.0
        %1421 = vmatpush1.xpose.msra.mxu0 0.0
        %1422 = vmatprep.subr.mxu0 0.0
        %1423 = vmatpush1.xpose.msra.mxu0 0.0
        %1424 = vmatprep.subr.mxu0 0.0
        %1425 = vmatpush1.xpose.msra.mxu0 0.0
        %1426 = vmatprep.subr.mxu0 0.0
        %1427 = vmatpush1.xpose.msra.mxu0 0.0
        %1428 = vmatprep.subr.mxu0 0.0
        %1429 = vmatpush1.xpose.msra.mxu0 0.0
        %1430 = vmatprep.subr.mxu0 0.0
        %1431 = vmatpush1.xpose.msra.mxu0 0.0
        %1432 = vmatprep.subr.mxu0 0.0
        %1433 = vmatpush1.xpose.msra.mxu0 0.0
        %1434 = vmatprep.subr.mxu0 0.0
        %1435 = vmatpush1.xpose.msra.mxu0 0.0
        %1436 = vmatprep.subr.mxu0 0.0
        %1437 = vmatpush1.xpose.msra.mxu0 0.0
        %1438 = vmatprep.subr.mxu0 0.0
        %1439 = vmatpush1.xpose.msra.mxu0 0.0
        %1440 = vmatprep.subr.mxu0 0.0
        %1441 = vmatpush1.xpose.msra.mxu0 0.0
        %1442 = vmatprep.mubr.f32.mxu0 0.0
        %1443 = vmatmul.mubr.f32.gmra.mrb[0].mxu0 %v1349
        %v1444 = vpop.f32.mrb[0].mxu0
        %v1445 = vadd.f32 0.0, %v1444
        %v1446 = vpop.f32.mrb[0].mxu0
        %1447 = vmatprep.mubr.f32.mxu0 0.0
        %1448 = vmatmul.mubr.f32.gmra.mrb[0].mxu0 %v1352
        %v1449 = vpop.f32.mrb[0].mxu0
        %v1450 = vadd.f32 0.0, %v1449
        %v1451 = vpop.f32.mrb[0].mxu0
        %1452 = vmatprep.mubr.f32.mxu0 0.0
        %1453 = vmatmul.mubr.f32.gmra.mrb[0].mxu0 %v1355
        %v1454 = vpop.f32.mrb[0].mxu0
        %v1455 = vadd.f32 0.0, %v1454
        %v1456 = vpop.f32.mrb[0].mxu0
        %1457 = vmatprep.mubr.f32.mxu0 0.0
        %1458 = vmatmul.mubr.f32.gmra.mrb[0].mxu0 %v1358
        %v1459 = vpop.f32.mrb[0].mxu0
        %v1460 = vadd.f32 0.0, %v1459
        %v1461 = vpop.f32.mrb[0].mxu0
        %1462 = vmatprep.mubr.f32.mxu0 0.0
        %1463 = vmatmul.mubr.f32.gmra.mrb[0].mxu0 %v1361
        %v1464 = vpop.f32.mrb[0].mxu0
        %v1465 = vadd.f32 0.0, %v1464
        %v1466 = vpop.f32.mrb[0].mxu0
        %1467 = vmatprep.mubr.f32.mxu0 0.0
        %1468 = vmatmul.mubr.f32.gmra.mrb[0].mxu0 %v1364
        %v1469 = vpop.f32.mrb[0].mxu0
        %v1470 = vadd.f32 0.0, %v1469
        %v1471 = vpop.f32.mrb[0].mxu0
        %1472 = vmatprep.mubr.f32.mxu0 0.0
        %1473 = vmatmul.mubr.f32.gmra.mrb[0].mxu0 %v1367
        %v1474 = vpop.f32.mrb[0].mxu0
        %v1475 = vadd.f32 0.0, %v1474
        %v1476 = vpop.f32.mrb[0].mxu0
        %1477 = vmatprep.mubr.f32.mxu0 0.0
        %1478 = vmatmul.mubr.f32.gmra.mrb[0].mxu0 %v1370
        %v1479 = vpop.f32.mrb[0].mxu0
        %v1480 = vadd.f32 0.0, %v1479
        %v1481 = vpop.f32.mrb[0].mxu0
        %1482 = vmatprep.mubr.f32.mxu0 0.0
        %1483 = vmatmul.mubr.f32.gmra.mrb[0].mxu0 %v1373
        %v1484 = vpop.f32.mrb[0].mxu0
        %v1485 = vadd.f32 0.0, %v1484
        %v1486 = vpop.f32.mrb[0].mxu0
        %1487 = vdwg.mxu0
        %v1488 = vld [vmem:[%s658] sm:$0xff]
        %v1489 = vld [vmem:[%s658 + $0x8] sm:$0xf]
        %v1490 = vld [vmem:[%s658 + $0xc] sm:$0xff]
        %v1491 = vld [vmem:[%s658 + $0x14] sm:$0xf]
        %v1492 = vld [vmem:[%s658 + $0x18] sm:$0xff]
        %v1493 = vld [vmem:[%s658 + $0x20] sm:$0xf]
        %v1494 = vld [vmem:[%s658 + $0x24] sm:$0xff]
        %v1495 = vld [vmem:[%s658 + $0x2c] sm:$0xf]
        %v1496 = vld [vmem:[%s658 + $0x30] sm:$0xff]
        %v1497 = vld [vmem:[%s658 + $0x38] sm:$0xf]
        %v1498 = vld [vmem:[%s658 + $0x3c] sm:$0xff]
        %v1499 = vld [vmem:[%s658 + $0x44] sm:$0xf]
        %v1500 = vld [vmem:[%s658 + $0x48] sm:$0xff]
        %v1501 = vld [vmem:[%s658 + $0x50] sm:$0xf]
        %v1502 = vld [vmem:[%s658 + $0x54] sm:$0xff]
        %v1503 = vld [vmem:[%s658 + $0x5c] sm:$0xf]
        %v1504 = vld [vmem:[%s658 + $0x60] sm:$0xff]
        %v1505 = vld [vmem:[%s658 + $0x68] sm:$0xf]
        %v1506 = vunpack.c.l.bf16 %v1488
        %v1507 = vunpack.c.h.bf16 %v1488
        %v1508 = vunpack.c.l.bf16 %v1489
        %v1509 = vunpack.c.l.bf16 %v1490
        %v1510 = vunpack.c.h.bf16 %v1490
        %v1511 = vunpack.c.l.bf16 %v1491
        %v1512 = vunpack.c.l.bf16 %v1492
        %v1513 = vunpack.c.h.bf16 %v1492
        %v1514 = vunpack.c.l.bf16 %v1493
        %v1515 = vunpack.c.l.bf16 %v1494
        %v1516 = vunpack.c.h.bf16 %v1494
        %v1517 = vunpack.c.l.bf16 %v1495
        %v1518 = vunpack.c.l.bf16 %v1496
        %v1519 = vunpack.c.h.bf16 %v1496
        %v1520 = vunpack.c.l.bf16 %v1497
        %v1521 = vunpack.c.l.bf16 %v1498
        %v1522 = vunpack.c.h.bf16 %v1498
        %v1523 = vunpack.c.l.bf16 %v1499
        %v1524 = vunpack.c.l.bf16 %v1500
        %v1525 = vunpack.c.h.bf16 %v1500
        %v1526 = vunpack.c.l.bf16 %v1501
        %v1527 = vunpack.c.l.bf16 %v1502
        %v1528 = vunpack.c.h.bf16 %v1502
        %v1529 = vunpack.c.l.bf16 %v1503
        %v1530 = vunpack.c.l.bf16 %v1504
        %v1531 = vunpack.c.h.bf16 %v1504
        %v1532 = vunpack.c.l.bf16 %v1505
        %s1533 = scalar_lea.vmem %s658, 108 [#allocation4]
        %v1534 = vld [vmem:[%s1533] sm:$0xff]
        %v1535 = vld [vmem:[%s1533 + $0x8] sm:$0xf]
        %v1536 = vld [vmem:[%s1533 + $0xc] sm:$0xff]
        %v1537 = vld [vmem:[%s1533 + $0x14] sm:$0xf]
        %v1538 = vld [vmem:[%s1533 + $0x18] sm:$0xff]
        %v1539 = vld [vmem:[%s1533 + $0x20] sm:$0xf]
        %v1540 = vld [vmem:[%s1533 + $0x24] sm:$0xff]
        %v1541 = vld [vmem:[%s1533 + $0x2c] sm:$0xf]
        %v1542 = vld [vmem:[%s1533 + $0x30] sm:$0xff]
        %v1543 = vld [vmem:[%s1533 + $0x38] sm:$0xf]
        %v1544 = vld [vmem:[%s1533 + $0x3c] sm:$0xff]
        %v1545 = vld [vmem:[%s1533 + $0x44] sm:$0xf]
        %v1546 = vld [vmem:[%s1533 + $0x48] sm:$0xff]
        %v1547 = vld [vmem:[%s1533 + $0x50] sm:$0xf]
        %v1548 = vld [vmem:[%s1533 + $0x54] sm:$0xff]
        %v1549 = vld [vmem:[%s1533 + $0x5c] sm:$0xf]
        %v1550 = vld [vmem:[%s1533 + $0x60] sm:$0xff]
        %v1551 = vld [vmem:[%s1533 + $0x68] sm:$0xf]
        %v1552 = vunpack.c.l.bf16 %v1534
        %v1553 = vunpack.c.h.bf16 %v1534
        %v1554 = vunpack.c.l.bf16 %v1535
        %v1555 = vunpack.c.l.bf16 %v1536
        %v1556 = vunpack.c.h.bf16 %v1536
        %v1557 = vunpack.c.l.bf16 %v1537
        %v1558 = vunpack.c.l.bf16 %v1538
        %v1559 = vunpack.c.h.bf16 %v1538
        %v1560 = vunpack.c.l.bf16 %v1539
        %v1561 = vunpack.c.l.bf16 %v1540
        %v1562 = vunpack.c.h.bf16 %v1540
        %v1563 = vunpack.c.l.bf16 %v1541
        %v1564 = vunpack.c.l.bf16 %v1542
        %v1565 = vunpack.c.h.bf16 %v1542
        %v1566 = vunpack.c.l.bf16 %v1543
        %v1567 = vunpack.c.l.bf16 %v1544
        %v1568 = vunpack.c.h.bf16 %v1544
        %v1569 = vunpack.c.l.bf16 %v1545
        %v1570 = vunpack.c.l.bf16 %v1546
        %v1571 = vunpack.c.h.bf16 %v1546
        %v1572 = vunpack.c.l.bf16 %v1547
        %v1573 = vunpack.c.l.bf16 %v1548
        %v1574 = vunpack.c.h.bf16 %v1548
        %v1575 = vunpack.c.l.bf16 %v1549
        %v1576 = vunpack.c.l.bf16 %v1550
        %v1577 = vunpack.c.h.bf16 %v1550
        %v1578 = vunpack.c.l.bf16 %v1551
        %s1579 = scalar_lea.vmem %s658, 216 [#allocation4]
        %v1580 = vld [vmem:[%s1579] sm:$0xff]
        %v1581 = vld [vmem:[%s1579 + $0x8] sm:$0xf]
        %v1582 = vld [vmem:[%s1579 + $0xc] sm:$0xff]
        %v1583 = vld [vmem:[%s1579 + $0x14] sm:$0xf]
        %v1584 = vld [vmem:[%s1579 + $0x18] sm:$0xff]
        %v1585 = vld [vmem:[%s1579 + $0x20] sm:$0xf]
        %v1586 = vld [vmem:[%s1579 + $0x24] sm:$0xff]
        %v1587 = vld [vmem:[%s1579 + $0x2c] sm:$0xf]
        %v1588 = vld [vmem:[%s1579 + $0x30] sm:$0xff]
        %v1589 = vld [vmem:[%s1579 + $0x38] sm:$0xf]
        %v1590 = vld [vmem:[%s1579 + $0x3c] sm:$0xff]
        %v1591 = vld [vmem:[%s1579 + $0x44] sm:$0xf]
        %v1592 = vld [vmem:[%s1579 + $0x48] sm:$0xff]
        %v1593 = vld [vmem:[%s1579 + $0x50] sm:$0xf]
        %v1594 = vld [vmem:[%s1579 + $0x54] sm:$0xff]
        %v1595 = vld [vmem:[%s1579 + $0x5c] sm:$0xf]
        %v1596 = vld [vmem:[%s1579 + $0x60] sm:$0xff]
        %v1597 = vld [vmem:[%s1579 + $0x68] sm:$0xf]
        %v1598 = vunpack.c.l.bf16 %v1580
        %v1599 = vunpack.c.h.bf16 %v1580
        %v1600 = vunpack.c.l.bf16 %v1581
        %v1601 = vunpack.c.l.bf16 %v1582
        %v1602 = vunpack.c.h.bf16 %v1582
        %v1603 = vunpack.c.l.bf16 %v1583
        %v1604 = vunpack.c.l.bf16 %v1584
        %v1605 = vunpack.c.h.bf16 %v1584
        %v1606 = vunpack.c.l.bf16 %v1585
        %v1607 = vunpack.c.l.bf16 %v1586
        %v1608 = vunpack.c.h.bf16 %v1586
        %v1609 = vunpack.c.l.bf16 %v1587
        %v1610 = vunpack.c.l.bf16 %v1588
        %v1611 = vunpack.c.h.bf16 %v1588
        %v1612 = vunpack.c.l.bf16 %v1589
        %v1613 = vunpack.c.l.bf16 %v1590
        %v1614 = vunpack.c.h.bf16 %v1590
        %v1615 = vunpack.c.l.bf16 %v1591
        %v1616 = vunpack.c.l.bf16 %v1592
        %v1617 = vunpack.c.h.bf16 %v1592
        %v1618 = vunpack.c.l.bf16 %v1593
        %v1619 = vunpack.c.l.bf16 %v1594
        %v1620 = vunpack.c.h.bf16 %v1594
        %v1621 = vunpack.c.l.bf16 %v1595
        %v1622 = vunpack.c.l.bf16 %v1596
        %v1623 = vunpack.c.h.bf16 %v1596
        %v1624 = vunpack.c.l.bf16 %v1597
        %s1625 = scalar_lea.vmem %s658, 324 [#allocation4]
        %v1626 = vld [vmem:[%s1625] sm:$0xff]
        %v1627 = vld [vmem:[%s1625 + $0x8] sm:$0xf]
        %v1628 = vld [vmem:[%s1625 + $0xc] sm:$0xff]
        %v1629 = vld [vmem:[%s1625 + $0x14] sm:$0xf]
        %v1630 = vld [vmem:[%s1625 + $0x18] sm:$0xff]
        %v1631 = vld [vmem:[%s1625 + $0x20] sm:$0xf]
        %v1632 = vld [vmem:[%s1625 + $0x24] sm:$0xff]
        %v1633 = vld [vmem:[%s1625 + $0x2c] sm:$0xf]
        %v1634 = vld [vmem:[%s1625 + $0x30] sm:$0xff]
        %v1635 = vld [vmem:[%s1625 + $0x38] sm:$0xf]
        %v1636 = vld [vmem:[%s1625 + $0x3c] sm:$0xff]
        %v1637 = vld [vmem:[%s1625 + $0x44] sm:$0xf]
        %v1638 = vld [vmem:[%s1625 + $0x48] sm:$0xff]
        %v1639 = vld [vmem:[%s1625 + $0x50] sm:$0xf]
        %v1640 = vld [vmem:[%s1625 + $0x54] sm:$0xff]
        %v1641 = vld [vmem:[%s1625 + $0x5c] sm:$0xf]
        %v1642 = vld [vmem:[%s1625 + $0x60] sm:$0xff]
        %v1643 = vld [vmem:[%s1625 + $0x68] sm:$0xf]
        %v1644 = vunpack.c.l.bf16 %v1626
        %v1645 = vunpack.c.h.bf16 %v1626
        %v1646 = vunpack.c.l.bf16 %v1627
        %v1647 = vunpack.c.l.bf16 %v1628
        %v1648 = vunpack.c.h.bf16 %v1628
        %v1649 = vunpack.c.l.bf16 %v1629
        %v1650 = vunpack.c.l.bf16 %v1630
        %v1651 = vunpack.c.h.bf16 %v1630
        %v1652 = vunpack.c.l.bf16 %v1631
        %v1653 = vunpack.c.l.bf16 %v1632
        %v1654 = vunpack.c.h.bf16 %v1632
        %v1655 = vunpack.c.l.bf16 %v1633
        %v1656 = vunpack.c.l.bf16 %v1634
        %v1657 = vunpack.c.h.bf16 %v1634
        %v1658 = vunpack.c.l.bf16 %v1635
        %v1659 = vunpack.c.l.bf16 %v1636
        %v1660 = vunpack.c.h.bf16 %v1636
        %v1661 = vunpack.c.l.bf16 %v1637
        %v1662 = vunpack.c.l.bf16 %v1638
        %v1663 = vunpack.c.h.bf16 %v1638
        %v1664 = vunpack.c.l.bf16 %v1639
        %v1665 = vunpack.c.l.bf16 %v1640
        %v1666 = vunpack.c.h.bf16 %v1640
        %v1667 = vunpack.c.l.bf16 %v1641
        %v1668 = vunpack.c.l.bf16 %v1642
        %v1669 = vunpack.c.h.bf16 %v1642
        %v1670 = vunpack.c.l.bf16 %v1643
        %s1671 = scalar_lea.vmem %s658, 432 [#allocation4]
        %v1672 = vld [vmem:[%s1671] sm:$0xff]
        %v1673 = vld [vmem:[%s1671 + $0x8] sm:$0xf]
        %v1674 = vld [vmem:[%s1671 + $0xc] sm:$0xff]
        %v1675 = vld [vmem:[%s1671 + $0x14] sm:$0xf]
        %v1676 = vld [vmem:[%s1671 + $0x18] sm:$0xff]
        %v1677 = vld [vmem:[%s1671 + $0x20] sm:$0xf]
        %v1678 = vld [vmem:[%s1671 + $0x24] sm:$0xff]
        %v1679 = vld [vmem:[%s1671 + $0x2c] sm:$0xf]
        %v1680 = vld [vmem:[%s1671 + $0x30] sm:$0xff]
        %v1681 = vld [vmem:[%s1671 + $0x38] sm:$0xf]
        %v1682 = vld [vmem:[%s1671 + $0x3c] sm:$0xff]
        %v1683 = vld [vmem:[%s1671 + $0x44] sm:$0xf]
        %v1684 = vld [vmem:[%s1671 + $0x48] sm:$0xff]
        %v1685 = vld [vmem:[%s1671 + $0x50] sm:$0xf]
        %v1686 = vld [vmem:[%s1671 + $0x54] sm:$0xff]
        %v1687 = vld [vmem:[%s1671 + $0x5c] sm:$0xf]
        %v1688 = vld [vmem:[%s1671 + $0x60] sm:$0xff]
        %v1689 = vld [vmem:[%s1671 + $0x68] sm:$0xf]
        %v1690 = vunpack.c.l.bf16 %v1672
        %v1691 = vunpack.c.h.bf16 %v1672
        %v1692 = vunpack.c.l.bf16 %v1673
        %v1693 = vunpack.c.l.bf16 %v1674
        %v1694 = vunpack.c.h.bf16 %v1674
        %v1695 = vunpack.c.l.bf16 %v1675
        %v1696 = vunpack.c.l.bf16 %v1676
        %v1697 = vunpack.c.h.bf16 %v1676
        %v1698 = vunpack.c.l.bf16 %v1677
        %v1699 = vunpack.c.l.bf16 %v1678
        %v1700 = vunpack.c.h.bf16 %v1678
        %v1701 = vunpack.c.l.bf16 %v1679
        %v1702 = vunpack.c.l.bf16 %v1680
        %v1703 = vunpack.c.h.bf16 %v1680
        %v1704 = vunpack.c.l.bf16 %v1681
        %v1705 = vunpack.c.l.bf16 %v1682
        %v1706 = vunpack.c.h.bf16 %v1682
        %v1707 = vunpack.c.l.bf16 %v1683
        %v1708 = vunpack.c.l.bf16 %v1684
        %v1709 = vunpack.c.h.bf16 %v1684
        %v1710 = vunpack.c.l.bf16 %v1685
        %v1711 = vunpack.c.l.bf16 %v1686
        %v1712 = vunpack.c.h.bf16 %v1686
        %v1713 = vunpack.c.l.bf16 %v1687
        %v1714 = vunpack.c.l.bf16 %v1688
        %v1715 = vunpack.c.h.bf16 %v1688
        %v1716 = vunpack.c.l.bf16 %v1689
        %s1717 = scalar_lea.vmem %s658, 540 [#allocation4]
        %v1718 = vld [vmem:[%s1717] sm:$0xff]
        %v1719 = vld [vmem:[%s1717 + $0x8] sm:$0xf]
        %v1720 = vld [vmem:[%s1717 + $0xc] sm:$0xff]
        %v1721 = vld [vmem:[%s1717 + $0x14] sm:$0xf]
        %v1722 = vld [vmem:[%s1717 + $0x18] sm:$0xff]
        %v1723 = vld [vmem:[%s1717 + $0x20] sm:$0xf]
        %v1724 = vld [vmem:[%s1717 + $0x24] sm:$0xff]
        %v1725 = vld [vmem:[%s1717 + $0x2c] sm:$0xf]
        %v1726 = vld [vmem:[%s1717 + $0x30] sm:$0xff]
        %v1727 = vld [vmem:[%s1717 + $0x38] sm:$0xf]
        %v1728 = vld [vmem:[%s1717 + $0x3c] sm:$0xff]
        %v1729 = vld [vmem:[%s1717 + $0x44] sm:$0xf]
        %v1730 = vld [vmem:[%s1717 + $0x48] sm:$0xff]
        %v1731 = vld [vmem:[%s1717 + $0x50] sm:$0xf]
        %v1732 = vld [vmem:[%s1717 + $0x54] sm:$0xff]
        %v1733 = vld [vmem:[%s1717 + $0x5c] sm:$0xf]
        %v1734 = vld [vmem:[%s1717 + $0x60] sm:$0xff]
        %v1735 = vld [vmem:[%s1717 + $0x68] sm:$0xf]
        %v1736 = vunpack.c.l.bf16 %v1718
        %v1737 = vunpack.c.h.bf16 %v1718
        %v1738 = vunpack.c.l.bf16 %v1719
        %v1739 = vunpack.c.l.bf16 %v1720
        %v1740 = vunpack.c.h.bf16 %v1720
        %v1741 = vunpack.c.l.bf16 %v1721
        %v1742 = vunpack.c.l.bf16 %v1722
        %v1743 = vunpack.c.h.bf16 %v1722
        %v1744 = vunpack.c.l.bf16 %v1723
        %v1745 = vunpack.c.l.bf16 %v1724
        %v1746 = vunpack.c.h.bf16 %v1724
        %v1747 = vunpack.c.l.bf16 %v1725
        %v1748 = vunpack.c.l.bf16 %v1726
        %v1749 = vunpack.c.h.bf16 %v1726
        %v1750 = vunpack.c.l.bf16 %v1727
        %v1751 = vunpack.c.l.bf16 %v1728
        %v1752 = vunpack.c.h.bf16 %v1728
        %v1753 = vunpack.c.l.bf16 %v1729
        %v1754 = vunpack.c.l.bf16 %v1730
        %v1755 = vunpack.c.h.bf16 %v1730
        %v1756 = vunpack.c.l.bf16 %v1731
        %v1757 = vunpack.c.l.bf16 %v1732
        %v1758 = vunpack.c.h.bf16 %v1732
        %v1759 = vunpack.c.l.bf16 %v1733
        %v1760 = vunpack.c.l.bf16 %v1734
        %v1761 = vunpack.c.h.bf16 %v1734
        %v1762 = vunpack.c.l.bf16 %v1735
        %vm1763 = vcmp.gt.f32.partialorder %v1736, 0.0
        %vm1764 = vcmp.gt.f32.partialorder %v1737, 0.0
        %vm1765 = vcmp.gt.f32.partialorder %v1738, 0.0
        %vm1766 = vcmp.gt.f32.partialorder %v1739, 0.0
        %vm1767 = vcmp.gt.f32.partialorder %v1740, 0.0
        %vm1768 = vcmp.gt.f32.partialorder %v1741, 0.0
        %vm1769 = vcmp.gt.f32.partialorder %v1742, 0.0
        %vm1770 = vcmp.gt.f32.partialorder %v1743, 0.0
        %vm1771 = vcmp.gt.f32.partialorder %v1744, 0.0
        %vm1772 = vcmp.gt.f32.partialorder %v1745, 0.0
        %vm1773 = vcmp.gt.f32.partialorder %v1746, 0.0
        %vm1774 = vcmp.gt.f32.partialorder %v1747, 0.0
        %vm1775 = vcmp.gt.f32.partialorder %v1748, 0.0
        %vm1776 = vcmp.gt.f32.partialorder %v1749, 0.0
        %vm1777 = vcmp.gt.f32.partialorder %v1750, 0.0
        %vm1778 = vcmp.gt.f32.partialorder %v1751, 0.0
        %vm1779 = vcmp.gt.f32.partialorder %v1752, 0.0
        %vm1780 = vcmp.gt.f32.partialorder %v1753, 0.0
        %vm1781 = vcmp.gt.f32.partialorder %v1754, 0.0
        %vm1782 = vcmp.gt.f32.partialorder %v1755, 0.0
        %vm1783 = vcmp.gt.f32.partialorder %v1756, 0.0
        %vm1784 = vcmp.gt.f32.partialorder %v1757, 0.0
        %vm1785 = vcmp.gt.f32.partialorder %v1758, 0.0
        %vm1786 = vcmp.gt.f32.partialorder %v1759, 0.0
        %vm1787 = vcmp.gt.f32.partialorder %v1760, 0.0
        %vm1788 = vcmp.gt.f32.partialorder %v1761, 0.0
        %vm1789 = vcmp.gt.f32.partialorder %v1762, 0.0
        %1791 = vset.pattern.permute.xlu0 0
        %1792 = vperm.xlu0 %1791, %v1445
        %v1793 = vpop.permute.xlu0 %1792
        %1796 = vset.pattern.permute.xlu0 0
        %1797 = vperm.xlu0 %1796, %v1450
        %v1798 = vpop.permute.xlu0 %1797
        %1801 = vset.pattern.permute.xlu0 0
        %1802 = vperm.xlu0 %1801, %v1455
        %v1803 = vpop.permute.xlu0 %1802
        %1806 = vset.pattern.permute.xlu0 0
        %1807 = vperm.xlu0 %1806, %v1460
        %v1808 = vpop.permute.xlu0 %1807
        %1811 = vset.pattern.permute.xlu0 0
        %1812 = vperm.xlu0 %1811, %v1465
        %v1813 = vpop.permute.xlu0 %1812
        %1816 = vset.pattern.permute.xlu0 0
        %1817 = vperm.xlu0 %1816, %v1470
        %v1818 = vpop.permute.xlu0 %1817
        %1821 = vset.pattern.permute.xlu0 0
        %1822 = vperm.xlu0 %1821, %v1475
        %v1823 = vpop.permute.xlu0 %1822
        %1826 = vset.pattern.permute.xlu0 0
        %1827 = vperm.xlu0 %1826, %v1480
        %v1828 = vpop.permute.xlu0 %1827
        %1831 = vset.pattern.permute.xlu0 0
        %1832 = vperm.xlu0 %1831, %v1485
        %v1833 = vpop.permute.xlu0 %1832
        %v1835 = vmul.f32 %v1793, %v1506
        %v1836 = vmul.f32 %v1793, %v1507
        %v1837 = vmul.f32 %v1793, %v1508
        %v1838 = vmul.f32 %v1798, %v1509
        %v1839 = vmul.f32 %v1798, %v1510
        %v1840 = vmul.f32 %v1798, %v1511
        %v1841 = vmul.f32 %v1803, %v1512
        %v1842 = vmul.f32 %v1803, %v1513
        %v1843 = vmul.f32 %v1803, %v1514
        %v1844 = vmul.f32 %v1808, %v1515
        %v1845 = vmul.f32 %v1808, %v1516
        %v1846 = vmul.f32 %v1808, %v1517
        %v1847 = vmul.f32 %v1813, %v1518
        %v1848 = vmul.f32 %v1813, %v1519
        %v1849 = vmul.f32 %v1813, %v1520
        %v1850 = vmul.f32 %v1818, %v1521
        %v1851 = vmul.f32 %v1818, %v1522
        %v1852 = vmul.f32 %v1818, %v1523
        %v1853 = vmul.f32 %v1823, %v1524
        %v1854 = vmul.f32 %v1823, %v1525
        %v1855 = vmul.f32 %v1823, %v1526
        %v1856 = vmul.f32 %v1828, %v1527
        %v1857 = vmul.f32 %v1828, %v1528
        %v1858 = vmul.f32 %v1828, %v1529
        %v1859 = vmul.f32 %v1833, %v1530
        %v1860 = vmul.f32 %v1833, %v1531
        %v1861 = vmul.f32 %v1833, %v1532
        %v1863 = vsel %vm1347, %v981, 0
        %v1866 = vsel %vm1347, %v986, 0
        %v1869 = vsel %vm1347, %v991, 0
        %v1872 = vsel %vm1347, %v996, 0
        %v1875 = vsel %vm1347, %v1001, 0
        %v1878 = vsel %vm1347, %v1006, 0
        %v1881 = vsel %vm1347, %v1011, 0
        %v1884 = vsel %vm1347, %v1016, 0
        %v1887 = vsel %vm1347, %v1021, 0
        %v1890 = vsel %vm1347, %v1026, 0
        %v1893 = vsel %vm1347, %v1031, 0
        %v1896 = vsel %vm1347, %v1036, 0
        %v1899 = vsel %vm1347, %v1041, 0
        %v1902 = vsel %vm1347, %v1046, 0
        %v1905 = vsel %vm1347, %v1051, 0
        %v1908 = vsel %vm1347, %v1056, 0
        %v1911 = vsel %vm1347, %v1061, 0
        %v1914 = vsel %vm1347, %v1066, 0
        %v1917 = vsel %vm1347, %v1071, 0
        %v1920 = vsel %vm1347, %v1076, 0
        %v1923 = vsel %vm1347, %v1081, 0
        %v1926 = vsel %vm1347, %v1086, 0
        %v1929 = vsel %vm1347, %v1091, 0
        %v1932 = vsel %vm1347, %v1096, 0
        %v1935 = vsel %vm1347, %v1101, 0
        %v1938 = vsel %vm1347, %v1106, 0
        %v1941 = vsel %vm1347, %v1111, 0
        %v1944 = vsel %vm1347, %v1116, 0
        %v1947 = vsel %vm1347, %v1121, 0
        %v1950 = vsel %vm1347, %v1126, 0
        %v1953 = vsel %vm1347, %v1131, 0
        %v1956 = vsel %vm1347, %v1136, 0
        %v1959 = vsel %vm1347, %v1141, 0
        %v1962 = vsel %vm1347, %v1146, 0
        %v1965 = vsel %vm1347, %v1151, 0
        %v1968 = vsel %vm1347, %v1156, 0
        %v1971 = vsel %vm1347, %v1161, 0
        %v1974 = vsel %vm1347, %v1166, 0
        %v1977 = vsel %vm1347, %v1171, 0
        %v1980 = vsel %vm1347, %v1176, 0
        %v1983 = vsel %vm1347, %v1181, 0
        %v1986 = vsel %vm1347, %v1186, 0
        %1988 = vmatprep.subr.mxu0 0.0
        %1989 = vmatpush1.xpose.msra.mxu0 %v1863
        %1990 = vmatprep.subr.mxu0 0.0
        %1991 = vmatpush1.xpose.msra.mxu0 %v1866
        %1992 = vmatprep.subr.mxu0 0.0
        %1993 = vmatpush1.xpose.msra.mxu0 %v1869
        %1994 = vmatprep.subr.mxu0 0.0
        %1995 = vmatpush1.xpose.msra.mxu0 %v1872
        %1996 = vmatprep.subr.mxu0 0.0
        %1997 = vmatpush1.xpose.msra.mxu0 %v1875
        %1998 = vmatprep.subr.mxu0 0.0
        %1999 = vmatpush1.xpose.msra.mxu0 %v1878
        %2000 = vmatprep.subr.mxu0 0.0
        %2001 = vmatpush1.xpose.msra.mxu0 %v1881
        %2002 = vmatprep.subr.mxu0 0.0
        %2003 = vmatpush1.xpose.msra.mxu0 %v1884
        %2004 = vmatprep.subr.mxu0 0.0
        %2005 = vmatpush1.xpose.msra.mxu0 %v1887
        %2006 = vmatprep.subr.mxu0 0.0
        %2007 = vmatpush1.xpose.msra.mxu0 %v1890
        %2008 = vmatprep.subr.mxu0 0.0
        %2009 = vmatpush1.xpose.msra.mxu0 %v1893
        %2010 = vmatprep.subr.mxu0 0.0
        %2011 = vmatpush1.xpose.msra.mxu0 %v1896
        %2012 = vmatprep.subr.mxu0 0.0
        %2013 = vmatpush1.xpose.msra.mxu0 %v1899
        %2014 = vmatprep.subr.mxu0 0.0
        %2015 = vmatpush1.xpose.msra.mxu0 %v1902
        %2016 = vmatprep.subr.mxu0 0.0
        %2017 = vmatpush1.xpose.msra.mxu0 %v1905
        %2018 = vmatprep.subr.mxu0 0.0
        %2019 = vmatpush1.xpose.msra.mxu0 %v1908
        %2020 = vmatprep.subr.mxu0 0.0
        %2021 = vmatpush1.xpose.msra.mxu0 %v1911
        %2022 = vmatprep.subr.mxu0 0.0
        %2023 = vmatpush1.xpose.msra.mxu0 %v1914
        %2024 = vmatprep.subr.mxu0 0.0
        %2025 = vmatpush1.xpose.msra.mxu0 %v1917
        %2026 = vmatprep.subr.mxu0 0.0
        %2027 = vmatpush1.xpose.msra.mxu0 %v1920
        %2028 = vmatprep.subr.mxu0 0.0
        %2029 = vmatpush1.xpose.msra.mxu0 %v1923
        %2030 = vmatprep.subr.mxu0 0.0
        %2031 = vmatpush1.xpose.msra.mxu0 %v1926
        %2032 = vmatprep.subr.mxu0 0.0
        %2033 = vmatpush1.xpose.msra.mxu0 %v1929
        %2034 = vmatprep.subr.mxu0 0.0
        %2035 = vmatpush1.xpose.msra.mxu0 %v1932
        %2036 = vmatprep.subr.mxu0 0.0
        %2037 = vmatpush1.xpose.msra.mxu0 %v1935
        %2038 = vmatprep.subr.mxu0 0.0
        %2039 = vmatpush1.xpose.msra.mxu0 %v1938
        %2040 = vmatprep.subr.mxu0 0.0
        %2041 = vmatpush1.xpose.msra.mxu0 %v1941
        %2042 = vmatprep.subr.mxu0 0.0
        %2043 = vmatpush1.xpose.msra.mxu0 %v1944
        %2044 = vmatprep.subr.mxu0 0.0
        %2045 = vmatpush1.xpose.msra.mxu0 %v1947
        %2046 = vmatprep.subr.mxu0 0.0
        %2047 = vmatpush1.xpose.msra.mxu0 %v1950
        %2048 = vmatprep.subr.mxu0 0.0
        %2049 = vmatpush1.xpose.msra.mxu0 %v1953
        %2050 = vmatprep.subr.mxu0 0.0
        %2051 = vmatpush1.xpose.msra.mxu0 %v1956
        %2052 = vmatprep.mubr.f32.mxu0 0.0
        %2053 = vmatmul.mubr.f32.gmra.mrb[0].mxu0 %v1349
        %v2054 = vpop.f32.mrb[0].mxu0
        %v2055 = vadd.f32 %v1835, %v2054
        %v2056 = vpop.f32.mrb[0].mxu0
        %v2057 = vadd.f32 %v1836, %v2056
        %2058 = vmatprep.mubr.f32.mxu0 0.0
        %2059 = vmatmul.mubr.f32.gmra.mrb[0].mxu0 %v1352
        %v2060 = vpop.f32.mrb[0].mxu0
        %v2061 = vadd.f32 %v1838, %v2060
        %v2062 = vpop.f32.mrb[0].mxu0
        %v2063 = vadd.f32 %v1839, %v2062
        %2064 = vmatprep.mubr.f32.mxu0 0.0
        %2065 = vmatmul.mubr.f32.gmra.mrb[0].mxu0 %v1355
        %v2066 = vpop.f32.mrb[0].mxu0
        %v2067 = vadd.f32 %v1841, %v2066
        %v2068 = vpop.f32.mrb[0].mxu0
        %v2069 = vadd.f32 %v1842, %v2068
        %2070 = vmatprep.mubr.f32.mxu0 0.0
        %2071 = vmatmul.mubr.f32.gmra.mrb[0].mxu0 %v1358
        %v2072 = vpop.f32.mrb[0].mxu0
        %v2073 = vadd.f32 %v1844, %v2072
        %v2074 = vpop.f32.mrb[0].mxu0
        %v2075 = vadd.f32 %v1845, %v2074
        %2076 = vmatprep.mubr.f32.mxu0 0.0
        %2077 = vmatmul.mubr.f32.gmra.mrb[0].mxu0 %v1361
        %v2078 = vpop.f32.mrb[0].mxu0
        %v2079 = vadd.f32 %v1847, %v2078
        %v2080 = vpop.f32.mrb[0].mxu0
        %v2081 = vadd.f32 %v1848, %v2080
        %2082 = vmatprep.mubr.f32.mxu0 0.0
        %2083 = vmatmul.mubr.f32.gmra.mrb[0].mxu0 %v1364
        %v2084 = vpop.f32.mrb[0].mxu0
        %v2085 = vadd.f32 %v1850, %v2084
        %v2086 = vpop.f32.mrb[0].mxu0
        %v2087 = vadd.f32 %v1851, %v2086
        %2088 = vmatprep.mubr.f32.mxu0 0.0
        %2089 = vmatmul.mubr.f32.gmra.mrb[0].mxu0 %v1367
        %v2090 = vpop.f32.mrb[0].mxu0
        %v2091 = vadd.f32 %v1853, %v2090
        %v2092 = vpop.f32.mrb[0].mxu0
        %v2093 = vadd.f32 %v1854, %v2092
        %2094 = vmatprep.mubr.f32.mxu0 0.0
        %2095 = vmatmul.mubr.f32.gmra.mrb[0].mxu0 %v1370
        %v2096 = vpop.f32.mrb[0].mxu0
        %v2097 = vadd.f32 %v1856, %v2096
        %v2098 = vpop.f32.mrb[0].mxu0
        %v2099 = vadd.f32 %v1857, %v2098
        %2100 = vmatprep.mubr.f32.mxu0 0.0
        %2101 = vmatmul.mubr.f32.gmra.mrb[0].mxu0 %v1373
        %v2102 = vpop.f32.mrb[0].mxu0
        %v2103 = vadd.f32 %v1859, %v2102
        %v2104 = vpop.f32.mrb[0].mxu0
        %v2105 = vadd.f32 %v1860, %v2104
        %2106 = vdwg.mxu0
        %2107 = vmatprep.subr.mxu0 0.0
        %2108 = vmatpush1.xpose.msra.mxu0 %v1959
        %2109 = vmatprep.subr.mxu0 0.0
        %2110 = vmatpush1.xpose.msra.mxu0 %v1962
        %2111 = vmatprep.subr.mxu0 0.0
        %2112 = vmatpush1.xpose.msra.mxu0 %v1965
        %2113 = vmatprep.subr.mxu0 0.0
        %2114 = vmatpush1.xpose.msra.mxu0 %v1968
        %2115 = vmatprep.subr.mxu0 0.0
        %2116 = vmatpush1.xpose.msra.mxu0 %v1971
        %2117 = vmatprep.subr.mxu0 0.0
        %2118 = vmatpush1.xpose.msra.mxu0 %v1974
        %2119 = vmatprep.subr.mxu0 0.0
        %2120 = vmatpush1.xpose.msra.mxu0 %v1977
        %2121 = vmatprep.subr.mxu0 0.0
        %2122 = vmatpush1.xpose.msra.mxu0 %v1980
        %2123 = vmatprep.subr.mxu0 0.0
        %2124 = vmatpush1.xpose.msra.mxu0 %v1983
        %2125 = vmatprep.subr.mxu0 0.0
        %2126 = vmatpush1.xpose.msra.mxu0 %v1986
        %2127 = vmatprep.subr.mxu0 0.0
        %2128 = vmatpush1.xpose.msra.mxu0 0.0
        %2129 = vmatprep.subr.mxu0 0.0
        %2130 = vmatpush1.xpose.msra.mxu0 0.0
        %2131 = vmatprep.subr.mxu0 0.0
        %2132 = vmatpush1.xpose.msra.mxu0 0.0
        %2133 = vmatprep.subr.mxu0 0.0
        %2134 = vmatpush1.xpose.msra.mxu0 0.0
        %2135 = vmatprep.subr.mxu0 0.0
        %2136 = vmatpush1.xpose.msra.mxu0 0.0
        %2137 = vmatprep.subr.mxu0 0.0
        %2138 = vmatpush1.xpose.msra.mxu0 0.0
        %2139 = vmatprep.subr.mxu0 0.0
        %2140 = vmatpush1.xpose.msra.mxu0 0.0
        %2141 = vmatprep.subr.mxu0 0.0
        %2142 = vmatpush1.xpose.msra.mxu0 0.0
        %2143 = vmatprep.subr.mxu0 0.0
        %2144 = vmatpush1.xpose.msra.mxu0 0.0
        %2145 = vmatprep.subr.mxu0 0.0
        %2146 = vmatpush1.xpose.msra.mxu0 0.0
        %2147 = vmatprep.subr.mxu0 0.0
        %2148 = vmatpush1.xpose.msra.mxu0 0.0
        %2149 = vmatprep.subr.mxu0 0.0
        %2150 = vmatpush1.xpose.msra.mxu0 0.0
        %2151 = vmatprep.subr.mxu0 0.0
        %2152 = vmatpush1.xpose.msra.mxu0 0.0
        %2153 = vmatprep.subr.mxu0 0.0
        %2154 = vmatpush1.xpose.msra.mxu0 0.0
        %2155 = vmatprep.subr.mxu0 0.0
        %2156 = vmatpush1.xpose.msra.mxu0 0.0
        %2157 = vmatprep.subr.mxu0 0.0
        %2158 = vmatpush1.xpose.msra.mxu0 0.0
        %2159 = vmatprep.subr.mxu0 0.0
        %2160 = vmatpush1.xpose.msra.mxu0 0.0
        %2161 = vmatprep.subr.mxu0 0.0
        %2162 = vmatpush1.xpose.msra.mxu0 0.0
        %2163 = vmatprep.subr.mxu0 0.0
        %2164 = vmatpush1.xpose.msra.mxu0 0.0
        %2165 = vmatprep.subr.mxu0 0.0
        %2166 = vmatpush1.xpose.msra.mxu0 0.0
        %2167 = vmatprep.subr.mxu0 0.0
        %2168 = vmatpush1.xpose.msra.mxu0 0.0
        %2169 = vmatprep.subr.mxu0 0.0
        %2170 = vmatpush1.xpose.msra.mxu0 0.0
        %2171 = vmatprep.mubr.f32.mxu0 0.0
        %2172 = vmatmul.mubr.f32.gmra.mrb[0].mxu0 %v1349
        %v2173 = vpop.f32.mrb[0].mxu0
        %v2174 = vadd.f32 %v1837, %v2173
        %v2175 = vpop.f32.mrb[0].mxu0
        %2176 = vmatprep.mubr.f32.mxu0 0.0
        %2177 = vmatmul.mubr.f32.gmra.mrb[0].mxu0 %v1352
        %v2178 = vpop.f32.mrb[0].mxu0
        %v2179 = vadd.f32 %v1840, %v2178
        %v2180 = vpop.f32.mrb[0].mxu0
        %2181 = vmatprep.mubr.f32.mxu0 0.0
        %2182 = vmatmul.mubr.f32.gmra.mrb[0].mxu0 %v1355
        %v2183 = vpop.f32.mrb[0].mxu0
        %v2184 = vadd.f32 %v1843, %v2183
        %v2185 = vpop.f32.mrb[0].mxu0
        %2186 = vmatprep.mubr.f32.mxu0 0.0
        %2187 = vmatmul.mubr.f32.gmra.mrb[0].mxu0 %v1358
        %v2188 = vpop.f32.mrb[0].mxu0
        %v2189 = vadd.f32 %v1846, %v2188
        %v2190 = vpop.f32.mrb[0].mxu0
        %2191 = vmatprep.mubr.f32.mxu0 0.0
        %2192 = vmatmul.mubr.f32.gmra.mrb[0].mxu0 %v1361
        %v2193 = vpop.f32.mrb[0].mxu0
        %v2194 = vadd.f32 %v1849, %v2193
        %v2195 = vpop.f32.mrb[0].mxu0
        %2196 = vmatprep.mubr.f32.mxu0 0.0
        %2197 = vmatmul.mubr.f32.gmra.mrb[0].mxu0 %v1364
        %v2198 = vpop.f32.mrb[0].mxu0
        %v2199 = vadd.f32 %v1852, %v2198
        %v2200 = vpop.f32.mrb[0].mxu0
        %2201 = vmatprep.mubr.f32.mxu0 0.0
        %2202 = vmatmul.mubr.f32.gmra.mrb[0].mxu0 %v1367
        %v2203 = vpop.f32.mrb[0].mxu0
        %v2204 = vadd.f32 %v1855, %v2203
        %v2205 = vpop.f32.mrb[0].mxu0
        %2206 = vmatprep.mubr.f32.mxu0 0.0
        %2207 = vmatmul.mubr.f32.gmra.mrb[0].mxu0 %v1370
        %v2208 = vpop.f32.mrb[0].mxu0
        %v2209 = vadd.f32 %v1858, %v2208
        %v2210 = vpop.f32.mrb[0].mxu0
        %2211 = vmatprep.mubr.f32.mxu0 0.0
        %2212 = vmatmul.mubr.f32.gmra.mrb[0].mxu0 %v1373
        %v2213 = vpop.f32.mrb[0].mxu0
        %v2214 = vadd.f32 %v1861, %v2213
        %v2215 = vpop.f32.mrb[0].mxu0
        %2216 = vdwg.mxu0
        %2217 = vset.pattern.permute.xlu0 1
        %2218 = vperm.xlu0 %2217, %v1445
        %v2219 = vpop.permute.xlu0 %2218
        %2221 = vset.pattern.permute.xlu0 1
        %2222 = vperm.xlu0 %2221, %v1450
        %v2223 = vpop.permute.xlu0 %2222
        %2225 = vset.pattern.permute.xlu0 1
        %2226 = vperm.xlu0 %2225, %v1455
        %v2227 = vpop.permute.xlu0 %2226
        %2229 = vset.pattern.permute.xlu0 1
        %2230 = vperm.xlu0 %2229, %v1460
        %v2231 = vpop.permute.xlu0 %2230
        %2233 = vset.pattern.permute.xlu0 1
        %2234 = vperm.xlu0 %2233, %v1465
        %v2235 = vpop.permute.xlu0 %2234
        %2237 = vset.pattern.permute.xlu0 1
        %2238 = vperm.xlu0 %2237, %v1470
        %v2239 = vpop.permute.xlu0 %2238
        %2241 = vset.pattern.permute.xlu0 1
        %2242 = vperm.xlu0 %2241, %v1475
        %v2243 = vpop.permute.xlu0 %2242
        %2245 = vset.pattern.permute.xlu0 1
        %2246 = vperm.xlu0 %2245, %v1480
        %v2247 = vpop.permute.xlu0 %2246
        %2249 = vset.pattern.permute.xlu0 1
        %2250 = vperm.xlu0 %2249, %v1485
        %v2251 = vpop.permute.xlu0 %2250
        %v2253 = vmul.f32 %v2219, %v1552
        %v2254 = vmul.f32 %v2219, %v1553
        %v2255 = vmul.f32 %v2219, %v1554
        %v2256 = vmul.f32 %v2223, %v1555
        %v2257 = vmul.f32 %v2223, %v1556
        %v2258 = vmul.f32 %v2223, %v1557
        %v2259 = vmul.f32 %v2227, %v1558
        %v2260 = vmul.f32 %v2227, %v1559
        %v2261 = vmul.f32 %v2227, %v1560
        %v2262 = vmul.f32 %v2231, %v1561
        %v2263 = vmul.f32 %v2231, %v1562
        %v2264 = vmul.f32 %v2231, %v1563
        %v2265 = vmul.f32 %v2235, %v1564
        %v2266 = vmul.f32 %v2235, %v1565
        %v2267 = vmul.f32 %v2235, %v1566
        %v2268 = vmul.f32 %v2239, %v1567
        %v2269 = vmul.f32 %v2239, %v1568
        %v2270 = vmul.f32 %v2239, %v1569
        %v2271 = vmul.f32 %v2243, %v1570
        %v2272 = vmul.f32 %v2243, %v1571
        %v2273 = vmul.f32 %v2243, %v1572
        %v2274 = vmul.f32 %v2247, %v1573
        %v2275 = vmul.f32 %v2247, %v1574
        %v2276 = vmul.f32 %v2247, %v1575
        %v2277 = vmul.f32 %v2251, %v1576
        %v2278 = vmul.f32 %v2251, %v1577
        %v2279 = vmul.f32 %v2251, %v1578
        %v2280 = vadd.f32 %v2055, %v2253
        %v2281 = vadd.f32 %v2057, %v2254
        %v2282 = vadd.f32 %v2174, %v2255
        %v2283 = vadd.f32 %v2061, %v2256
        %v2284 = vadd.f32 %v2063, %v2257
        %v2285 = vadd.f32 %v2179, %v2258
        %v2286 = vadd.f32 %v2067, %v2259
        %v2287 = vadd.f32 %v2069, %v2260
        %v2288 = vadd.f32 %v2184, %v2261
        %v2289 = vadd.f32 %v2073, %v2262
        %v2290 = vadd.f32 %v2075, %v2263
        %v2291 = vadd.f32 %v2189, %v2264
        %v2292 = vadd.f32 %v2079, %v2265
        %v2293 = vadd.f32 %v2081, %v2266
        %v2294 = vadd.f32 %v2194, %v2267
        %v2295 = vadd.f32 %v2085, %v2268
        %v2296 = vadd.f32 %v2087, %v2269
        %v2297 = vadd.f32 %v2199, %v2270
        %v2298 = vadd.f32 %v2091, %v2271
        %v2299 = vadd.f32 %v2093, %v2272
        %v2300 = vadd.f32 %v2204, %v2273
        %v2301 = vadd.f32 %v2097, %v2274
        %v2302 = vadd.f32 %v2099, %v2275
        %v2303 = vadd.f32 %v2209, %v2276
        %v2304 = vadd.f32 %v2103, %v2277
        %v2305 = vadd.f32 %v2105, %v2278
        %v2306 = vadd.f32 %v2214, %v2279
        %2307 = vset.pattern.permute.xlu0 2
        %2308 = vperm.xlu0 %2307, %v1445
        %v2309 = vpop.permute.xlu0 %2308
        %2311 = vset.pattern.permute.xlu0 2
        %2312 = vperm.xlu0 %2311, %v1450
        %v2313 = vpop.permute.xlu0 %2312
        %2315 = vset.pattern.permute.xlu0 2
        %2316 = vperm.xlu0 %2315, %v1455
        %v2317 = vpop.permute.xlu0 %2316
        %2319 = vset.pattern.permute.xlu0 2
        %2320 = vperm.xlu0 %2319, %v1460
        %v2321 = vpop.permute.xlu0 %2320
        %2323 = vset.pattern.permute.xlu0 2
        %2324 = vperm.xlu0 %2323, %v1465
        %v2325 = vpop.permute.xlu0 %2324
        %2327 = vset.pattern.permute.xlu0 2
        %2328 = vperm.xlu0 %2327, %v1470
        %v2329 = vpop.permute.xlu0 %2328
        %2331 = vset.pattern.permute.xlu0 2
        %2332 = vperm.xlu0 %2331, %v1475
        %v2333 = vpop.permute.xlu0 %2332
        %2335 = vset.pattern.permute.xlu0 2
        %2336 = vperm.xlu0 %2335, %v1480
        %v2337 = vpop.permute.xlu0 %2336
        %2339 = vset.pattern.permute.xlu0 2
        %2340 = vperm.xlu0 %2339, %v1485
        %v2341 = vpop.permute.xlu0 %2340
        %v2343 = vmul.f32 %v2309, %v1598
        %v2344 = vmul.f32 %v2309, %v1599
        %v2345 = vmul.f32 %v2309, %v1600
        %v2346 = vmul.f32 %v2313, %v1601
        %v2347 = vmul.f32 %v2313, %v1602
        %v2348 = vmul.f32 %v2313, %v1603
        %v2349 = vmul.f32 %v2317, %v1604
        %v2350 = vmul.f32 %v2317, %v1605
        %v2351 = vmul.f32 %v2317, %v1606
        %v2352 = vmul.f32 %v2321, %v1607
        %v2353 = vmul.f32 %v2321, %v1608
        %v2354 = vmul.f32 %v2321, %v1609
        %v2355 = vmul.f32 %v2325, %v1610
        %v2356 = vmul.f32 %v2325, %v1611
        %v2357 = vmul.f32 %v2325, %v1612
        %v2358 = vmul.f32 %v2329, %v1613
        %v2359 = vmul.f32 %v2329, %v1614
        %v2360 = vmul.f32 %v2329, %v1615
        %v2361 = vmul.f32 %v2333, %v1616
        %v2362 = vmul.f32 %v2333, %v1617
        %v2363 = vmul.f32 %v2333, %v1618
        %v2364 = vmul.f32 %v2337, %v1619
        %v2365 = vmul.f32 %v2337, %v1620
        %v2366 = vmul.f32 %v2337, %v1621
        %v2367 = vmul.f32 %v2341, %v1622
        %v2368 = vmul.f32 %v2341, %v1623
        %v2369 = vmul.f32 %v2341, %v1624
        %v2370 = vadd.f32 %v2280, %v2343
        %v2371 = vadd.f32 %v2281, %v2344
        %v2372 = vadd.f32 %v2282, %v2345
        %v2373 = vadd.f32 %v2283, %v2346
        %v2374 = vadd.f32 %v2284, %v2347
        %v2375 = vadd.f32 %v2285, %v2348
        %v2376 = vadd.f32 %v2286, %v2349
        %v2377 = vadd.f32 %v2287, %v2350
        %v2378 = vadd.f32 %v2288, %v2351
        %v2379 = vadd.f32 %v2289, %v2352
        %v2380 = vadd.f32 %v2290, %v2353
        %v2381 = vadd.f32 %v2291, %v2354
        %v2382 = vadd.f32 %v2292, %v2355
        %v2383 = vadd.f32 %v2293, %v2356
        %v2384 = vadd.f32 %v2294, %v2357
        %v2385 = vadd.f32 %v2295, %v2358
        %v2386 = vadd.f32 %v2296, %v2359
        %v2387 = vadd.f32 %v2297, %v2360
        %v2388 = vadd.f32 %v2298, %v2361
        %v2389 = vadd.f32 %v2299, %v2362
        %v2390 = vadd.f32 %v2300, %v2363
        %v2391 = vadd.f32 %v2301, %v2364
        %v2392 = vadd.f32 %v2302, %v2365
        %v2393 = vadd.f32 %v2303, %v2366
        %v2394 = vadd.f32 %v2304, %v2367
        %v2395 = vadd.f32 %v2305, %v2368
        %v2396 = vadd.f32 %v2306, %v2369
        %2397 = vset.pattern.permute.xlu0 3
        %2398 = vperm.xlu0 %2397, %v1445
        %v2399 = vpop.permute.xlu0 %2398
        %2401 = vset.pattern.permute.xlu0 3
        %2402 = vperm.xlu0 %2401, %v1450
        %v2403 = vpop.permute.xlu0 %2402
        %2405 = vset.pattern.permute.xlu0 3
        %2406 = vperm.xlu0 %2405, %v1455
        %v2407 = vpop.permute.xlu0 %2406
        %2409 = vset.pattern.permute.xlu0 3
        %2410 = vperm.xlu0 %2409, %v1460
        %v2411 = vpop.permute.xlu0 %2410
        %2413 = vset.pattern.permute.xlu0 3
        %2414 = vperm.xlu0 %2413, %v1465
        %v2415 = vpop.permute.xlu0 %2414
        %2417 = vset.pattern.permute.xlu0 3
        %2418 = vperm.xlu0 %2417, %v1470
        %v2419 = vpop.permute.xlu0 %2418
        %2421 = vset.pattern.permute.xlu0 3
        %2422 = vperm.xlu0 %2421, %v1475
        %v2423 = vpop.permute.xlu0 %2422
        %2425 = vset.pattern.permute.xlu0 3
        %2426 = vperm.xlu0 %2425, %v1480
        %v2427 = vpop.permute.xlu0 %2426
        %2429 = vset.pattern.permute.xlu0 3
        %2430 = vperm.xlu0 %2429, %v1485
        %v2431 = vpop.permute.xlu0 %2430
        %v2433 = vmul.f32 %v2399, %v1644
        %v2434 = vmul.f32 %v2399, %v1645
        %v2435 = vmul.f32 %v2399, %v1646
        %v2436 = vmul.f32 %v2403, %v1647
        %v2437 = vmul.f32 %v2403, %v1648
        %v2438 = vmul.f32 %v2403, %v1649
        %v2439 = vmul.f32 %v2407, %v1650
        %v2440 = vmul.f32 %v2407, %v1651
        %v2441 = vmul.f32 %v2407, %v1652
        %v2442 = vmul.f32 %v2411, %v1653
        %v2443 = vmul.f32 %v2411, %v1654
        %v2444 = vmul.f32 %v2411, %v1655
        %v2445 = vmul.f32 %v2415, %v1656
        %v2446 = vmul.f32 %v2415, %v1657
        %v2447 = vmul.f32 %v2415, %v1658
        %v2448 = vmul.f32 %v2419, %v1659
        %v2449 = vmul.f32 %v2419, %v1660
        %v2450 = vmul.f32 %v2419, %v1661
        %v2451 = vmul.f32 %v2423, %v1662
        %v2452 = vmul.f32 %v2423, %v1663
        %v2453 = vmul.f32 %v2423, %v1664
        %v2454 = vmul.f32 %v2427, %v1665
        %v2455 = vmul.f32 %v2427, %v1666
        %v2456 = vmul.f32 %v2427, %v1667
        %v2457 = vmul.f32 %v2431, %v1668
        %v2458 = vmul.f32 %v2431, %v1669
        %v2459 = vmul.f32 %v2431, %v1670
        %v2460 = vadd.f32 %v2370, %v2433
        %v2461 = vadd.f32 %v2371, %v2434
        %v2462 = vadd.f32 %v2372, %v2435
        %v2463 = vadd.f32 %v2373, %v2436
        %v2464 = vadd.f32 %v2374, %v2437
        %v2465 = vadd.f32 %v2375, %v2438
        %v2466 = vadd.f32 %v2376, %v2439
        %v2467 = vadd.f32 %v2377, %v2440
        %v2468 = vadd.f32 %v2378, %v2441
        %v2469 = vadd.f32 %v2379, %v2442
        %v2470 = vadd.f32 %v2380, %v2443
        %v2471 = vadd.f32 %v2381, %v2444
        %v2472 = vadd.f32 %v2382, %v2445
        %v2473 = vadd.f32 %v2383, %v2446
        %v2474 = vadd.f32 %v2384, %v2447
        %v2475 = vadd.f32 %v2385, %v2448
        %v2476 = vadd.f32 %v2386, %v2449
        %v2477 = vadd.f32 %v2387, %v2450
        %v2478 = vadd.f32 %v2388, %v2451
        %v2479 = vadd.f32 %v2389, %v2452
        %v2480 = vadd.f32 %v2390, %v2453
        %v2481 = vadd.f32 %v2391, %v2454
        %v2482 = vadd.f32 %v2392, %v2455
        %v2483 = vadd.f32 %v2393, %v2456
        %v2484 = vadd.f32 %v2394, %v2457
        %v2485 = vadd.f32 %v2395, %v2458
        %v2486 = vadd.f32 %v2396, %v2459
        %2487 = vset.pattern.permute.xlu0 4
        %2488 = vperm.xlu0 %2487, %v1445
        %v2489 = vpop.permute.xlu0 %2488
        %2491 = vset.pattern.permute.xlu0 4
        %2492 = vperm.xlu0 %2491, %v1450
        %v2493 = vpop.permute.xlu0 %2492
        %2495 = vset.pattern.permute.xlu0 4
        %2496 = vperm.xlu0 %2495, %v1455
        %v2497 = vpop.permute.xlu0 %2496
        %2499 = vset.pattern.permute.xlu0 4
        %2500 = vperm.xlu0 %2499, %v1460
        %v2501 = vpop.permute.xlu0 %2500
        %2503 = vset.pattern.permute.xlu0 4
        %2504 = vperm.xlu0 %2503, %v1465
        %v2505 = vpop.permute.xlu0 %2504
        %2507 = vset.pattern.permute.xlu0 4
        %2508 = vperm.xlu0 %2507, %v1470
        %v2509 = vpop.permute.xlu0 %2508
        %2511 = vset.pattern.permute.xlu0 4
        %2512 = vperm.xlu0 %2511, %v1475
        %v2513 = vpop.permute.xlu0 %2512
        %2515 = vset.pattern.permute.xlu0 4
        %2516 = vperm.xlu0 %2515, %v1480
        %v2517 = vpop.permute.xlu0 %2516
        %2519 = vset.pattern.permute.xlu0 4
        %2520 = vperm.xlu0 %2519, %v1485
        %v2521 = vpop.permute.xlu0 %2520
        %v2523 = vmul.f32 %v2489, %v1690
        %v2524 = vmul.f32 %v2489, %v1691
        %v2525 = vmul.f32 %v2489, %v1692
        %v2526 = vmul.f32 %v2493, %v1693
        %v2527 = vmul.f32 %v2493, %v1694
        %v2528 = vmul.f32 %v2493, %v1695
        %v2529 = vmul.f32 %v2497, %v1696
        %v2530 = vmul.f32 %v2497, %v1697
        %v2531 = vmul.f32 %v2497, %v1698
        %v2532 = vmul.f32 %v2501, %v1699
        %v2533 = vmul.f32 %v2501, %v1700
        %v2534 = vmul.f32 %v2501, %v1701
        %v2535 = vmul.f32 %v2505, %v1702
        %v2536 = vmul.f32 %v2505, %v1703
        %v2537 = vmul.f32 %v2505, %v1704
        %v2538 = vmul.f32 %v2509, %v1705
        %v2539 = vmul.f32 %v2509, %v1706
        %v2540 = vmul.f32 %v2509, %v1707
        %v2541 = vmul.f32 %v2513, %v1708
        %v2542 = vmul.f32 %v2513, %v1709
        %v2543 = vmul.f32 %v2513, %v1710
        %v2544 = vmul.f32 %v2517, %v1711
        %v2545 = vmul.f32 %v2517, %v1712
        %v2546 = vmul.f32 %v2517, %v1713
        %v2547 = vmul.f32 %v2521, %v1714
        %v2548 = vmul.f32 %v2521, %v1715
        %v2549 = vmul.f32 %v2521, %v1716
        %v2550 = vadd.f32 %v2460, %v2523
        %v2551 = vadd.f32 %v2461, %v2524
        %v2552 = vadd.f32 %v2462, %v2525
        %v2553 = vadd.f32 %v2463, %v2526
        %v2554 = vadd.f32 %v2464, %v2527
        %v2555 = vadd.f32 %v2465, %v2528
        %v2556 = vadd.f32 %v2466, %v2529
        %v2557 = vadd.f32 %v2467, %v2530
        %v2558 = vadd.f32 %v2468, %v2531
        %v2559 = vadd.f32 %v2469, %v2532
        %v2560 = vadd.f32 %v2470, %v2533
        %v2561 = vadd.f32 %v2471, %v2534
        %v2562 = vadd.f32 %v2472, %v2535
        %v2563 = vadd.f32 %v2473, %v2536
        %v2564 = vadd.f32 %v2474, %v2537
        %v2565 = vadd.f32 %v2475, %v2538
        %v2566 = vadd.f32 %v2476, %v2539
        %v2567 = vadd.f32 %v2477, %v2540
        %v2568 = vadd.f32 %v2478, %v2541
        %v2569 = vadd.f32 %v2479, %v2542
        %v2570 = vadd.f32 %v2480, %v2543
        %v2571 = vadd.f32 %v2481, %v2544
        %v2572 = vadd.f32 %v2482, %v2545
        %v2573 = vadd.f32 %v2483, %v2546
        %v2574 = vadd.f32 %v2484, %v2547
        %v2575 = vadd.f32 %v2485, %v2548
        %v2576 = vadd.f32 %v2486, %v2549
        %v2577 = vmul.f32 %v2550, 0.17677669
        %v2578 = vmul.f32 %v2551, 0.17677669
        %v2579 = vmul.f32 %v2552, 0.17677669
        %v2580 = vmul.f32 %v2553, 0.17677669
        %v2581 = vmul.f32 %v2554, 0.17677669
        %v2582 = vmul.f32 %v2555, 0.17677669
        %v2583 = vmul.f32 %v2556, 0.17677669
        %v2584 = vmul.f32 %v2557, 0.17677669
        %v2585 = vmul.f32 %v2558, 0.17677669
        %v2586 = vmul.f32 %v2559, 0.17677669
        %v2587 = vmul.f32 %v2560, 0.17677669
        %v2588 = vmul.f32 %v2561, 0.17677669
        %v2589 = vmul.f32 %v2562, 0.17677669
        %v2590 = vmul.f32 %v2563, 0.17677669
        %v2591 = vmul.f32 %v2564, 0.17677669
        %v2592 = vmul.f32 %v2565, 0.17677669
        %v2593 = vmul.f32 %v2566, 0.17677669
        %v2594 = vmul.f32 %v2567, 0.17677669
        %v2595 = vmul.f32 %v2568, 0.17677669
        %v2596 = vmul.f32 %v2569, 0.17677669
        %v2597 = vmul.f32 %v2570, 0.17677669
        %v2598 = vmul.f32 %v2571, 0.17677669
        %v2599 = vmul.f32 %v2572, 0.17677669
        %v2600 = vmul.f32 %v2573, 0.17677669
        %v2601 = vmul.f32 %v2574, 0.17677669
        %v2602 = vmul.f32 %v2575, 0.17677669
        %v2603 = vmul.f32 %v2576, 0.17677669
        %v2604 = vsel %vm1763, %v2577, -1e+30
        %v2605 = vsel %vm1764, %v2578, -1e+30
        %v2606 = vsel %vm1765, %v2579, -1e+30
        %v2607 = vsel %vm1766, %v2580, -1e+30
        %v2608 = vsel %vm1767, %v2581, -1e+30
        %v2609 = vsel %vm1768, %v2582, -1e+30
        %v2610 = vsel %vm1769, %v2583, -1e+30
        %v2611 = vsel %vm1770, %v2584, -1e+30
        %v2612 = vsel %vm1771, %v2585, -1e+30
        %v2613 = vsel %vm1772, %v2586, -1e+30
        %v2614 = vsel %vm1773, %v2587, -1e+30
        %v2615 = vsel %vm1774, %v2588, -1e+30
        %v2616 = vsel %vm1775, %v2589, -1e+30
        %v2617 = vsel %vm1776, %v2590, -1e+30
        %v2618 = vsel %vm1777, %v2591, -1e+30
        %v2619 = vsel %vm1778, %v2592, -1e+30
        %v2620 = vsel %vm1779, %v2593, -1e+30
        %v2621 = vsel %vm1780, %v2594, -1e+30
        %v2622 = vsel %vm1781, %v2595, -1e+30
        %v2623 = vsel %vm1782, %v2596, -1e+30
        %v2624 = vsel %vm1783, %v2597, -1e+30
        %v2625 = vsel %vm1784, %v2598, -1e+30
        %v2626 = vsel %vm1785, %v2599, -1e+30
        %v2627 = vsel %vm1786, %v2600, -1e+30
        %v2628 = vsel %vm1787, %v2601, -1e+30
        %v2629 = vsel %vm1788, %v2602, -1e+30
        %v2630 = vsel %vm1789, %v2603, -1e+30
        %v2631 = vmax.f32 %v2604, %v2605
        %vm2632 = vcmask 605184
        %v2633 = vsel %vm2632, %v2606, -inf
        %v2634 = vmax.f32 %v2631, %v2633
        %2635 = vmax.xlane.f32.xlu0 %v2634
        %v2636 = vpop.xlane.xlu0 %2635
        %v2637 = vmax.f32 %v2607, %v2608
        %v2638 = vsel %vm2632, %v2609, -inf
        %v2639 = vmax.f32 %v2637, %v2638
        %2640 = vmax.xlane.f32.xlu0 %v2639
        %v2641 = vpop.xlane.xlu0 %2640
        %v2642 = vmax.f32 %v2610, %v2611
        %v2643 = vsel %vm2632, %v2612, -inf
        %v2644 = vmax.f32 %v2642, %v2643
        %2645 = vmax.xlane.f32.xlu0 %v2644
        %v2646 = vpop.xlane.xlu0 %2645
        %v2647 = vmax.f32 %v2613, %v2614
        %v2648 = vsel %vm2632, %v2615, -inf
        %v2649 = vmax.f32 %v2647, %v2648
        %2650 = vmax.xlane.f32.xlu0 %v2649
        %v2651 = vpop.xlane.xlu0 %2650
        %v2652 = vmax.f32 %v2616, %v2617
        %v2653 = vsel %vm2632, %v2618, -inf
        %v2654 = vmax.f32 %v2652, %v2653
        %2655 = vmax.xlane.f32.xlu0 %v2654
        %v2656 = vpop.xlane.xlu0 %2655
        %v2657 = vmax.f32 %v2619, %v2620
        %v2658 = vsel %vm2632, %v2621, -inf
        %v2659 = vmax.f32 %v2657, %v2658
        %2660 = vmax.xlane.f32.xlu0 %v2659
        %v2661 = vpop.xlane.xlu0 %2660
        %v2662 = vmax.f32 %v2622, %v2623
        %v2663 = vsel %vm2632, %v2624, -inf
        %v2664 = vmax.f32 %v2662, %v2663
        %2665 = vmax.xlane.f32.xlu0 %v2664
        %v2666 = vpop.xlane.xlu0 %2665
        %v2667 = vmax.f32 %v2625, %v2626
        %v2668 = vsel %vm2632, %v2627, -inf
        %v2669 = vmax.f32 %v2667, %v2668
        %2670 = vmax.xlane.f32.xlu0 %v2669
        %v2671 = vpop.xlane.xlu0 %2670
        %v2672 = vmax.f32 %v2628, %v2629
        %v2673 = vsel %vm2632, %v2630, -inf
        %v2674 = vmax.f32 %v2672, %v2673
        %2675 = vmax.xlane.f32.xlu0 %v2674
        %v2676 = vpop.xlane.xlu0 %2675
        %v2677 = vsub.f32 %v2604, %v2636
        %v2678 = vsub.f32 %v2605, %v2636
        %v2679 = vsub.f32 %v2606, %v2636
        %v2680 = vsub.f32 %v2607, %v2641
        %v2681 = vsub.f32 %v2608, %v2641
        %v2682 = vsub.f32 %v2609, %v2641
        %v2683 = vsub.f32 %v2610, %v2646
        %v2684 = vsub.f32 %v2611, %v2646
        %v2685 = vsub.f32 %v2612, %v2646
        %v2686 = vsub.f32 %v2613, %v2651
        %v2687 = vsub.f32 %v2614, %v2651
        %v2688 = vsub.f32 %v2615, %v2651
        %v2689 = vsub.f32 %v2616, %v2656
        %v2690 = vsub.f32 %v2617, %v2656
        %v2691 = vsub.f32 %v2618, %v2656
        %v2692 = vsub.f32 %v2619, %v2661
        %v2693 = vsub.f32 %v2620, %v2661
        %v2694 = vsub.f32 %v2621, %v2661
        %v2695 = vsub.f32 %v2622, %v2666
        %v2696 = vsub.f32 %v2623, %v2666
        %v2697 = vsub.f32 %v2624, %v2666
        %v2698 = vsub.f32 %v2625, %v2671
        %v2699 = vsub.f32 %v2626, %v2671
        %v2700 = vsub.f32 %v2627, %v2671
        %v2701 = vsub.f32 %v2628, %v2676
        %v2702 = vsub.f32 %v2629, %v2676
        %v2703 = vsub.f32 %v2630, %v2676
        %v2704 = vmul.f32 %v2677, 1.442695
        %v2705 = vpow.pop %v2704
        %v2706 = vmul.f32 %v2678, 1.442695
        %v2707 = vpow.pop %v2706
        %v2708 = vmul.f32 %v2679, 1.442695
        %v2709 = vpow.pop %v2708
        %v2710 = vmul.f32 %v2680, 1.442695
        %v2711 = vpow.pop %v2710
        %v2712 = vmul.f32 %v2681, 1.442695
        %v2713 = vpow.pop %v2712
        %v2714 = vmul.f32 %v2682, 1.442695
        %v2715 = vpow.pop %v2714
        %v2716 = vmul.f32 %v2683, 1.442695
        %v2717 = vpow.pop %v2716
        %v2718 = vmul.f32 %v2684, 1.442695
        %v2719 = vpow.pop %v2718
        %v2720 = vmul.f32 %v2685, 1.442695
        %v2721 = vpow.pop %v2720
        %v2722 = vmul.f32 %v2686, 1.442695
        %v2723 = vpow.pop %v2722
        %v2724 = vmul.f32 %v2687, 1.442695
        %v2725 = vpow.pop %v2724
        %v2726 = vmul.f32 %v2688, 1.442695
        %v2727 = vpow.pop %v2726
        %v2728 = vmul.f32 %v2689, 1.442695
        %v2729 = vpow.pop %v2728
        %v2730 = vmul.f32 %v2690, 1.442695
        %v2731 = vpow.pop %v2730
        %v2732 = vmul.f32 %v2691, 1.442695
        %v2733 = vpow.pop %v2732
        %v2734 = vmul.f32 %v2692, 1.442695
        %v2735 = vpow.pop %v2734
        %v2736 = vmul.f32 %v2693, 1.442695
        %v2737 = vpow.pop %v2736
        %v2738 = vmul.f32 %v2694, 1.442695
        %v2739 = vpow.pop %v2738
        %v2740 = vmul.f32 %v2695, 1.442695
        %v2741 = vpow.pop %v2740
        %v2742 = vmul.f32 %v2696, 1.442695
        %v2743 = vpow.pop %v2742
        %v2744 = vmul.f32 %v2697, 1.442695
        %v2745 = vpow.pop %v2744
        %v2746 = vmul.f32 %v2698, 1.442695
        %v2747 = vpow.pop %v2746
        %v2748 = vmul.f32 %v2699, 1.442695
        %v2749 = vpow.pop %v2748
        %v2750 = vmul.f32 %v2700, 1.442695
        %v2751 = vpow.pop %v2750
        %v2752 = vmul.f32 %v2701, 1.442695
        %v2753 = vpow.pop %v2752
        %v2754 = vmul.f32 %v2702, 1.442695
        %v2755 = vpow.pop %v2754
        %v2756 = vmul.f32 %v2703, 1.442695
        %v2757 = vpow.pop %v2756
        %v2759 = vsel %vm2632, %v2709, 0
        %v2762 = vsel %vm2632, %v2715, 0
        %v2765 = vsel %vm2632, %v2721, 0
        %v2768 = vsel %vm2632, %v2727, 0
        %v2771 = vsel %vm2632, %v2733, 0
        %v2774 = vsel %vm2632, %v2739, 0
        %v2777 = vsel %vm2632, %v2745, 0
        %v2780 = vsel %vm2632, %v2751, 0
        %v2783 = vsel %vm2632, %v2757, 0
        %vm2785 = vcmask 1041408
        %v2787 = vsel %vm2785, 1.0, 0
        %2789 = vmatprep.subr.mxu0 0.0
        %2790 = vmatpush1.msra.mxu0 1.0
        %2791 = vmatprep.subr.mxu0 0.0
        %2792 = vmatpush1.msra.mxu0 1.0
        %2793 = vmatprep.subr.mxu0 0.0
        %2794 = vmatpush1.msra.mxu0 1.0
        %2795 = vmatprep.subr.mxu0 0.0
        %2796 = vmatpush1.msra.mxu0 1.0
        %2797 = vmatprep.subr.mxu0 0.0
        %2798 = vmatpush1.msra.mxu0 1.0
        %2799 = vmatprep.subr.mxu0 0.0
        %2800 = vmatpush1.msra.mxu0 1.0
        %2801 = vmatprep.subr.mxu0 0.0
        %2802 = vmatpush1.msra.mxu0 1.0
        %2803 = vmatprep.subr.mxu0 0.0
        %2804 = vmatpush1.msra.mxu0 1.0
        %2805 = vmatprep.subr.mxu0 0.0
        %2806 = vmatpush1.msra.mxu0 1.0
        %2807 = vmatprep.subr.mxu0 0.0
        %2808 = vmatpush1.msra.mxu0 1.0
        %2809 = vmatprep.subr.mxu0 0.0
        %2810 = vmatpush1.msra.mxu0 1.0
        %2811 = vmatprep.subr.mxu0 0.0
        %2812 = vmatpush1.msra.mxu0 1.0
        %2813 = vmatprep.subr.mxu0 0.0
        %2814 = vmatpush1.msra.mxu0 1.0
        %2815 = vmatprep.subr.mxu0 0.0
        %2816 = vmatpush1.msra.mxu0 1.0
        %2817 = vmatprep.subr.mxu0 0.0
        %2818 = vmatpush1.msra.mxu0 1.0
        %2819 = vmatprep.subr.mxu0 0.0
        %2820 = vmatpush1.msra.mxu0 1.0
        %2821 = vmatprep.subr.mxu0 0.0
        %2822 = vmatpush1.msra.mxu0 1.0
        %2823 = vmatprep.subr.mxu0 0.0
        %2824 = vmatpush1.msra.mxu0 1.0
        %2825 = vmatprep.subr.mxu0 0.0
        %2826 = vmatpush1.msra.mxu0 1.0
        %2827 = vmatprep.subr.mxu0 0.0
        %2828 = vmatpush1.msra.mxu0 1.0
        %2829 = vmatprep.subr.mxu0 0.0
        %2830 = vmatpush1.msra.mxu0 1.0
        %2831 = vmatprep.subr.mxu0 0.0
        %2832 = vmatpush1.msra.mxu0 1.0
        %2833 = vmatprep.subr.mxu0 0.0
        %2834 = vmatpush1.msra.mxu0 1.0
        %2835 = vmatprep.subr.mxu0 0.0
        %2836 = vmatpush1.msra.mxu0 1.0
        %2837 = vmatprep.subr.mxu0 0.0
        %2838 = vmatpush1.msra.mxu0 1.0
        %2839 = vmatprep.subr.mxu0 0.0
        %2840 = vmatpush1.msra.mxu0 1.0
        %2841 = vmatprep.subr.mxu0 0.0
        %2842 = vmatpush1.msra.mxu0 1.0
        %2843 = vmatprep.subr.mxu0 0.0
        %2844 = vmatpush1.msra.mxu0 1.0
        %2845 = vmatprep.subr.mxu0 0.0
        %2846 = vmatpush1.msra.mxu0 1.0
        %2847 = vmatprep.subr.mxu0 0.0
        %2848 = vmatpush1.msra.mxu0 1.0
        %2849 = vmatprep.subr.mxu0 0.0
        %2850 = vmatpush1.msra.mxu0 1.0
        %2851 = vmatprep.subr.mxu0 0.0
        %2852 = vmatpush1.msra.mxu0 1.0
        %2853 = vmatprep.mubr.f32.mxu0 %v2707
        %2854 = vmatmul.mubr.f32.gmra.mrb[0].mxu0 %v2705
        %v2855 = vpop.f32.mrb[0].mxu0
        %v2856 = vadd.f32 0.0, %v2855
        %v2857 = vpop.f32.mrb[0].mxu0
        %2858 = vmatprep.mubr.f32.mxu0 %v2713
        %2859 = vmatmul.mubr.f32.gmra.mrb[0].mxu0 %v2711
        %v2860 = vpop.f32.mrb[0].mxu0
        %v2861 = vadd.f32 0.0, %v2860
        %v2862 = vpop.f32.mrb[0].mxu0
        %2863 = vmatprep.mubr.f32.mxu0 %v2719
        %2864 = vmatmul.mubr.f32.gmra.mrb[0].mxu0 %v2717
        %v2865 = vpop.f32.mrb[0].mxu0
        %v2866 = vadd.f32 0.0, %v2865
        %v2867 = vpop.f32.mrb[0].mxu0
        %2868 = vmatprep.mubr.f32.mxu0 %v2725
        %2869 = vmatmul.mubr.f32.gmra.mrb[0].mxu0 %v2723
        %v2870 = vpop.f32.mrb[0].mxu0
        %v2871 = vadd.f32 0.0, %v2870
        %v2872 = vpop.f32.mrb[0].mxu0
        %2873 = vmatprep.mubr.f32.mxu0 %v2731
        %2874 = vmatmul.mubr.f32.gmra.mrb[0].mxu0 %v2729
        %v2875 = vpop.f32.mrb[0].mxu0
        %v2876 = vadd.f32 0.0, %v2875
        %v2877 = vpop.f32.mrb[0].mxu0
        %2878 = vmatprep.mubr.f32.mxu0 %v2737
        %2879 = vmatmul.mubr.f32.gmra.mrb[0].mxu0 %v2735
        %v2880 = vpop.f32.mrb[0].mxu0
        %v2881 = vadd.f32 0.0, %v2880
        %v2882 = vpop.f32.mrb[0].mxu0
        %2883 = vmatprep.mubr.f32.mxu0 %v2743
        %2884 = vmatmul.mubr.f32.gmra.mrb[0].mxu0 %v2741
        %v2885 = vpop.f32.mrb[0].mxu0
        %v2886 = vadd.f32 0.0, %v2885
        %v2887 = vpop.f32.mrb[0].mxu0
        %2888 = vmatprep.mubr.f32.mxu0 %v2749
        %2889 = vmatmul.mubr.f32.gmra.mrb[0].mxu0 %v2747
        %v2890 = vpop.f32.mrb[0].mxu0
        %v2891 = vadd.f32 0.0, %v2890
        %v2892 = vpop.f32.mrb[0].mxu0
        %2893 = vmatprep.mubr.f32.mxu0 %v2755
        %2894 = vmatmul.mubr.f32.gmra.mrb[0].mxu0 %v2753
        %v2895 = vpop.f32.mrb[0].mxu0
        %v2896 = vadd.f32 0.0, %v2895
        %v2897 = vpop.f32.mrb[0].mxu0
        %2898 = vdwg.mxu0
        %2899 = vmatprep.subr.mxu0 0.0
        %2900 = vmatpush1.msra.mxu0 1.0
        %2901 = vmatprep.subr.mxu0 0.0
        %2902 = vmatpush1.msra.mxu0 1.0
        %2903 = vmatprep.subr.mxu0 0.0
        %2904 = vmatpush1.msra.mxu0 1.0
        %2905 = vmatprep.subr.mxu0 0.0
        %2906 = vmatpush1.msra.mxu0 1.0
        %2907 = vmatprep.subr.mxu0 0.0
        %2908 = vmatpush1.msra.mxu0 1.0
        %2909 = vmatprep.subr.mxu0 0.0
        %2910 = vmatpush1.msra.mxu0 1.0
        %2911 = vmatprep.subr.mxu0 0.0
        %2912 = vmatpush1.msra.mxu0 1.0
        %2913 = vmatprep.subr.mxu0 0.0
        %2914 = vmatpush1.msra.mxu0 1.0
        %2915 = vmatprep.subr.mxu0 0.0
        %2916 = vmatpush1.msra.mxu0 1.0
        %2917 = vmatprep.subr.mxu0 0.0
        %2918 = vmatpush1.msra.mxu0 %v2787
        %2919 = vmatprep.subr.mxu0 0.0
        %2920 = vmatpush1.msra.mxu0 0.0
        %2921 = vmatprep.subr.mxu0 0.0
        %2922 = vmatpush1.msra.mxu0 0.0
        %2923 = vmatprep.subr.mxu0 0.0
        %2924 = vmatpush1.msra.mxu0 0.0
        %2925 = vmatprep.subr.mxu0 0.0
        %2926 = vmatpush1.msra.mxu0 0.0
        %2927 = vmatprep.subr.mxu0 0.0
        %2928 = vmatpush1.msra.mxu0 0.0
        %2929 = vmatprep.subr.mxu0 0.0
        %2930 = vmatpush1.msra.mxu0 0.0
        %2931 = vmatprep.subr.mxu0 0.0
        %2932 = vmatpush1.msra.mxu0 0.0
        %2933 = vmatprep.subr.mxu0 0.0
        %2934 = vmatpush1.msra.mxu0 0.0
        %2935 = vmatprep.subr.mxu0 0.0
        %2936 = vmatpush1.msra.mxu0 0.0
        %2937 = vmatprep.subr.mxu0 0.0
        %2938 = vmatpush1.msra.mxu0 0.0
        %2939 = vmatprep.subr.mxu0 0.0
        %2940 = vmatpush1.msra.mxu0 0.0
        %2941 = vmatprep.subr.mxu0 0.0
        %2942 = vmatpush1.msra.mxu0 0.0
        %2943 = vmatprep.subr.mxu0 0.0
        %2944 = vmatpush1.msra.mxu0 0.0
        %2945 = vmatprep.subr.mxu0 0.0
        %2946 = vmatpush1.msra.mxu0 0.0
        %2947 = vmatprep.subr.mxu0 0.0
        %2948 = vmatpush1.msra.mxu0 0.0
        %2949 = vmatprep.subr.mxu0 0.0
        %2950 = vmatpush1.msra.mxu0 0.0
        %2951 = vmatprep.subr.mxu0 0.0
        %2952 = vmatpush1.msra.mxu0 0.0
        %2953 = vmatprep.subr.mxu0 0.0
        %2954 = vmatpush1.msra.mxu0 0.0
        %2955 = vmatprep.subr.mxu0 0.0
        %2956 = vmatpush1.msra.mxu0 0.0
        %2957 = vmatprep.subr.mxu0 0.0
        %2958 = vmatpush1.msra.mxu0 0.0
        %2959 = vmatprep.subr.mxu0 0.0
        %2960 = vmatpush1.msra.mxu0 0.0
        %2961 = vmatprep.subr.mxu0 0.0
        %2962 = vmatpush1.msra.mxu0 0.0
        %2963 = vmatprep.mubr.f32.mxu0 0.0
        %2964 = vmatmul.mubr.f32.gmra.mrb[0].mxu0 %v2759
        %v2965 = vpop.f32.mrb[0].mxu0
        %v2966 = vadd.f32 %v2856, %v2965
        %v2967 = vpop.f32.mrb[0].mxu0
        %2968 = vmatprep.mubr.f32.mxu0 0.0
        %2969 = vmatmul.mubr.f32.gmra.mrb[0].mxu0 %v2762
        %v2970 = vpop.f32.mrb[0].mxu0
        %v2971 = vadd.f32 %v2861, %v2970
        %v2972 = vpop.f32.mrb[0].mxu0
        %2973 = vmatprep.mubr.f32.mxu0 0.0
        %2974 = vmatmul.mubr.f32.gmra.mrb[0].mxu0 %v2765
        %v2975 = vpop.f32.mrb[0].mxu0
        %v2976 = vadd.f32 %v2866, %v2975
        %v2977 = vpop.f32.mrb[0].mxu0
        %2978 = vmatprep.mubr.f32.mxu0 0.0
        %2979 = vmatmul.mubr.f32.gmra.mrb[0].mxu0 %v2768
        %v2980 = vpop.f32.mrb[0].mxu0
        %v2981 = vadd.f32 %v2871, %v2980
        %v2982 = vpop.f32.mrb[0].mxu0
        %2983 = vmatprep.mubr.f32.mxu0 0.0
        %2984 = vmatmul.mubr.f32.gmra.mrb[0].mxu0 %v2771
        %v2985 = vpop.f32.mrb[0].mxu0
        %v2986 = vadd.f32 %v2876, %v2985
        %v2987 = vpop.f32.mrb[0].mxu0
        %2988 = vmatprep.mubr.f32.mxu0 0.0
        %2989 = vmatmul.mubr.f32.gmra.mrb[0].mxu0 %v2774
        %v2990 = vpop.f32.mrb[0].mxu0
        %v2991 = vadd.f32 %v2881, %v2990
        %v2992 = vpop.f32.mrb[0].mxu0
        %2993 = vmatprep.mubr.f32.mxu0 0.0
        %2994 = vmatmul.mubr.f32.gmra.mrb[0].mxu0 %v2777
        %v2995 = vpop.f32.mrb[0].mxu0
        %v2996 = vadd.f32 %v2886, %v2995
        %v2997 = vpop.f32.mrb[0].mxu0
        %2998 = vmatprep.mubr.f32.mxu0 0.0
        %2999 = vmatmul.mubr.f32.gmra.mrb[0].mxu0 %v2780
        %v3000 = vpop.f32.mrb[0].mxu0
        %v3001 = vadd.f32 %v2891, %v3000
        %v3002 = vpop.f32.mrb[0].mxu0
        %3003 = vmatprep.mubr.f32.mxu0 0.0
        %3004 = vmatmul.mubr.f32.gmra.mrb[0].mxu0 %v2783
        %v3005 = vpop.f32.mrb[0].mxu0
        %v3006 = vadd.f32 %v2896, %v3005
        %v3007 = vpop.f32.mrb[0].mxu0
        %3008 = vdwg.mxu0
        %v3009 = vrcp.pop %v2966
        %v3010 = vmul.f32 1.0, %v3009
        %v3011 = vrcp.pop %v2971
        %v3012 = vmul.f32 1.0, %v3011
        %v3013 = vrcp.pop %v2976
        %v3014 = vmul.f32 1.0, %v3013
        %v3015 = vrcp.pop %v2981
        %v3016 = vmul.f32 1.0, %v3015
        %v3017 = vrcp.pop %v2986
        %v3018 = vmul.f32 1.0, %v3017
        %v3019 = vrcp.pop %v2991
        %v3020 = vmul.f32 1.0, %v3019
        %v3021 = vrcp.pop %v2996
        %v3022 = vmul.f32 1.0, %v3021
        %v3023 = vrcp.pop %v3001
        %v3024 = vmul.f32 1.0, %v3023
        %v3025 = vrcp.pop %v3006
        %v3026 = vmul.f32 1.0, %v3025
        %3027 = vrot.lane.b32.xlu0 %v981, 96
        %v3028 = vpop.permute.xlu0 %3027
        %3029 = vrot.lane.b32.xlu0 %v986, 96
        %v3030 = vpop.permute.xlu0 %3029
        %3031 = vrot.lane.b32.xlu0 %v991, 96
        %v3032 = vpop.permute.xlu0 %3031
        %3033 = vrot.lane.b32.xlu0 %v996, 96
        %v3034 = vpop.permute.xlu0 %3033
        %3035 = vrot.lane.b32.xlu0 %v1001, 96
        %v3036 = vpop.permute.xlu0 %3035
        %3037 = vrot.lane.b32.xlu0 %v1006, 96
        %v3038 = vpop.permute.xlu0 %3037
        %3039 = vrot.lane.b32.xlu0 %v1011, 96
        %v3040 = vpop.permute.xlu0 %3039
        %3041 = vrot.lane.b32.xlu0 %v1016, 96
        %v3042 = vpop.permute.xlu0 %3041
        %3043 = vrot.lane.b32.xlu0 %v1021, 96
        %v3044 = vpop.permute.xlu0 %3043
        %3045 = vrot.lane.b32.xlu0 %v1026, 96
        %v3046 = vpop.permute.xlu0 %3045
        %3047 = vrot.lane.b32.xlu0 %v1031, 96
        %v3048 = vpop.permute.xlu0 %3047
        %3049 = vrot.lane.b32.xlu0 %v1036, 96
        %v3050 = vpop.permute.xlu0 %3049
        %3051 = vrot.lane.b32.xlu0 %v1041, 96
        %v3052 = vpop.permute.xlu0 %3051
        %3053 = vrot.lane.b32.xlu0 %v1046, 96
        %v3054 = vpop.permute.xlu0 %3053
        %3055 = vrot.lane.b32.xlu0 %v1051, 96
        %v3056 = vpop.permute.xlu0 %3055
        %3057 = vrot.lane.b32.xlu0 %v1056, 96
        %v3058 = vpop.permute.xlu0 %3057
        %3059 = vrot.lane.b32.xlu0 %v1061, 96
        %v3060 = vpop.permute.xlu0 %3059
        %3061 = vrot.lane.b32.xlu0 %v1066, 96
        %v3062 = vpop.permute.xlu0 %3061
        %3063 = vrot.lane.b32.xlu0 %v1071, 96
        %v3064 = vpop.permute.xlu0 %3063
        %3065 = vrot.lane.b32.xlu0 %v1076, 96
        %v3066 = vpop.permute.xlu0 %3065
        %3067 = vrot.lane.b32.xlu0 %v1081, 96
        %v3068 = vpop.permute.xlu0 %3067
        %3069 = vrot.lane.b32.xlu0 %v1086, 96
        %v3070 = vpop.permute.xlu0 %3069
        %3071 = vrot.lane.b32.xlu0 %v1091, 96
        %v3072 = vpop.permute.xlu0 %3071
        %3073 = vrot.lane.b32.xlu0 %v1096, 96
        %v3074 = vpop.permute.xlu0 %3073
        %3075 = vrot.lane.b32.xlu0 %v1101, 96
        %v3076 = vpop.permute.xlu0 %3075
        %3077 = vrot.lane.b32.xlu0 %v1106, 96
        %v3078 = vpop.permute.xlu0 %3077
        %3079 = vrot.lane.b32.xlu0 %v1111, 96
        %v3080 = vpop.permute.xlu0 %3079
        %3081 = vrot.lane.b32.xlu0 %v1116, 96
        %v3082 = vpop.permute.xlu0 %3081
        %3083 = vrot.lane.b32.xlu0 %v1121, 96
        %v3084 = vpop.permute.xlu0 %3083
        %3085 = vrot.lane.b32.xlu0 %v1126, 96
        %v3086 = vpop.permute.xlu0 %3085
        %3087 = vrot.lane.b32.xlu0 %v1131, 96
        %v3088 = vpop.permute.xlu0 %3087
        %3089 = vrot.lane.b32.xlu0 %v1136, 96
        %v3090 = vpop.permute.xlu0 %3089
        %3091 = vrot.lane.b32.xlu0 %v1141, 96
        %v3092 = vpop.permute.xlu0 %3091
        %3093 = vrot.lane.b32.xlu0 %v1146, 96
        %v3094 = vpop.permute.xlu0 %3093
        %3095 = vrot.lane.b32.xlu0 %v1151, 96
        %v3096 = vpop.permute.xlu0 %3095
        %3097 = vrot.lane.b32.xlu0 %v1156, 96
        %v3098 = vpop.permute.xlu0 %3097
        %3099 = vrot.lane.b32.xlu0 %v1161, 96
        %v3100 = vpop.permute.xlu0 %3099
        %3101 = vrot.lane.b32.xlu0 %v1166, 96
        %v3102 = vpop.permute.xlu0 %3101
        %3103 = vrot.lane.b32.xlu0 %v1171, 96
        %v3104 = vpop.permute.xlu0 %3103
        %3105 = vrot.lane.b32.xlu0 %v1176, 96
        %v3106 = vpop.permute.xlu0 %3105
        %3107 = vrot.lane.b32.xlu0 %v1181, 96
        %v3108 = vpop.permute.xlu0 %3107
        %3109 = vrot.lane.b32.xlu0 %v1186, 96
        %v3110 = vpop.permute.xlu0 %3109
        %v3152 = vsel %vm2785, %v3110, 0
        %3154 = vmatprep.subr.mxu0 0.0
        %3155 = vmatpush1.msra.mxu0 %v3028
        %3156 = vmatprep.subr.mxu0 0.0
        %3157 = vmatpush1.msra.mxu0 %v3030
        %3158 = vmatprep.subr.mxu0 0.0
        %3159 = vmatpush1.msra.mxu0 %v3032
        %3160 = vmatprep.subr.mxu0 0.0
        %3161 = vmatpush1.msra.mxu0 %v3034
        %3162 = vmatprep.subr.mxu0 0.0
        %3163 = vmatpush1.msra.mxu0 %v3036
        %3164 = vmatprep.subr.mxu0 0.0
        %3165 = vmatpush1.msra.mxu0 %v3038
        %3166 = vmatprep.subr.mxu0 0.0
        %3167 = vmatpush1.msra.mxu0 %v3040
        %3168 = vmatprep.subr.mxu0 0.0
        %3169 = vmatpush1.msra.mxu0 %v3042
        %3170 = vmatprep.subr.mxu0 0.0
        %3171 = vmatpush1.msra.mxu0 %v3044
        %3172 = vmatprep.subr.mxu0 0.0
        %3173 = vmatpush1.msra.mxu0 %v3046
        %3174 = vmatprep.subr.mxu0 0.0
        %3175 = vmatpush1.msra.mxu0 %v3048
        %3176 = vmatprep.subr.mxu0 0.0
        %3177 = vmatpush1.msra.mxu0 %v3050
        %3178 = vmatprep.subr.mxu0 0.0
        %3179 = vmatpush1.msra.mxu0 %v3052
        %3180 = vmatprep.subr.mxu0 0.0
        %3181 = vmatpush1.msra.mxu0 %v3054
        %3182 = vmatprep.subr.mxu0 0.0
        %3183 = vmatpush1.msra.mxu0 %v3056
        %3184 = vmatprep.subr.mxu0 0.0
        %3185 = vmatpush1.msra.mxu0 %v3058
        %3186 = vmatprep.subr.mxu0 0.0
        %3187 = vmatpush1.msra.mxu0 %v3060
        %3188 = vmatprep.subr.mxu0 0.0
        %3189 = vmatpush1.msra.mxu0 %v3062
        %3190 = vmatprep.subr.mxu0 0.0
        %3191 = vmatpush1.msra.mxu0 %v3064
        %3192 = vmatprep.subr.mxu0 0.0
        %3193 = vmatpush1.msra.mxu0 %v3066
        %3194 = vmatprep.subr.mxu0 0.0
        %3195 = vmatpush1.msra.mxu0 %v3068
        %3196 = vmatprep.subr.mxu0 0.0
        %3197 = vmatpush1.msra.mxu0 %v3070
        %3198 = vmatprep.subr.mxu0 0.0
        %3199 = vmatpush1.msra.mxu0 %v3072
        %3200 = vmatprep.subr.mxu0 0.0
        %3201 = vmatpush1.msra.mxu0 %v3074
        %3202 = vmatprep.subr.mxu0 0.0
        %3203 = vmatpush1.msra.mxu0 %v3076
        %3204 = vmatprep.subr.mxu0 0.0
        %3205 = vmatpush1.msra.mxu0 %v3078
        %3206 = vmatprep.subr.mxu0 0.0
        %3207 = vmatpush1.msra.mxu0 %v3080
        %3208 = vmatprep.subr.mxu0 0.0
        %3209 = vmatpush1.msra.mxu0 %v3082
        %3210 = vmatprep.subr.mxu0 0.0
        %3211 = vmatpush1.msra.mxu0 %v3084
        %3212 = vmatprep.subr.mxu0 0.0
        %3213 = vmatpush1.msra.mxu0 %v3086
        %3214 = vmatprep.subr.mxu0 0.0
        %3215 = vmatpush1.msra.mxu0 %v3088
        %3216 = vmatprep.subr.mxu0 0.0
        %3217 = vmatpush1.msra.mxu0 %v3090
        %3218 = vmatprep.mubr.f32.mxu0 %v2707
        %3219 = vmatmul.mubr.f32.gmra.mrb[0].mxu0 %v2705
        %v3220 = vpop.f32.mrb[0].mxu0
        %v3221 = vadd.f32 0.0, %v3220
        %v3222 = vpop.f32.mrb[0].mxu0
        %3223 = vmatprep.mubr.f32.mxu0 %v2713
        %3224 = vmatmul.mubr.f32.gmra.mrb[0].mxu0 %v2711
        %v3225 = vpop.f32.mrb[0].mxu0
        %v3226 = vadd.f32 0.0, %v3225
        %v3227 = vpop.f32.mrb[0].mxu0
        %3228 = vmatprep.mubr.f32.mxu0 %v2719
        %3229 = vmatmul.mubr.f32.gmra.mrb[0].mxu0 %v2717
        %v3230 = vpop.f32.mrb[0].mxu0
        %v3231 = vadd.f32 0.0, %v3230
        %v3232 = vpop.f32.mrb[0].mxu0
        %3233 = vmatprep.mubr.f32.mxu0 %v2725
        %3234 = vmatmul.mubr.f32.gmra.mrb[0].mxu0 %v2723
        %v3235 = vpop.f32.mrb[0].mxu0
        %v3236 = vadd.f32 0.0, %v3235
        %v3237 = vpop.f32.mrb[0].mxu0
        %3238 = vmatprep.mubr.f32.mxu0 %v2731
        %3239 = vmatmul.mubr.f32.gmra.mrb[0].mxu0 %v2729
        %v3240 = vpop.f32.mrb[0].mxu0
        %v3241 = vadd.f32 0.0, %v3240
        %v3242 = vpop.f32.mrb[0].mxu0
        %3243 = vmatprep.mubr.f32.mxu0 %v2737
        %3244 = vmatmul.mubr.f32.gmra.mrb[0].mxu0 %v2735
        %v3245 = vpop.f32.mrb[0].mxu0
        %v3246 = vadd.f32 0.0, %v3245
        %v3247 = vpop.f32.mrb[0].mxu0
        %3248 = vmatprep.mubr.f32.mxu0 %v2743
        %3249 = vmatmul.mubr.f32.gmra.mrb[0].mxu0 %v2741
        %v3250 = vpop.f32.mrb[0].mxu0
        %v3251 = vadd.f32 0.0, %v3250
        %v3252 = vpop.f32.mrb[0].mxu0
        %3253 = vmatprep.mubr.f32.mxu0 %v2749
        %3254 = vmatmul.mubr.f32.gmra.mrb[0].mxu0 %v2747
        %v3255 = vpop.f32.mrb[0].mxu0
        %v3256 = vadd.f32 0.0, %v3255
        %v3257 = vpop.f32.mrb[0].mxu0
        %3258 = vmatprep.mubr.f32.mxu0 %v2755
        %3259 = vmatmul.mubr.f32.gmra.mrb[0].mxu0 %v2753
        %v3260 = vpop.f32.mrb[0].mxu0
        %v3261 = vadd.f32 0.0, %v3260
        %v3262 = vpop.f32.mrb[0].mxu0
        %3263 = vdwg.mxu0
        %3264 = vmatprep.subr.mxu0 0.0
        %3265 = vmatpush1.msra.mxu0 %v3092
        %3266 = vmatprep.subr.mxu0 0.0
        %3267 = vmatpush1.msra.mxu0 %v3094
        %3268 = vmatprep.subr.mxu0 0.0
        %3269 = vmatpush1.msra.mxu0 %v3096
        %3270 = vmatprep.subr.mxu0 0.0
        %3271 = vmatpush1.msra.mxu0 %v3098
        %3272 = vmatprep.subr.mxu0 0.0
        %3273 = vmatpush1.msra.mxu0 %v3100
        %3274 = vmatprep.subr.mxu0 0.0
        %3275 = vmatpush1.msra.mxu0 %v3102
        %3276 = vmatprep.subr.mxu0 0.0
        %3277 = vmatpush1.msra.mxu0 %v3104
        %3278 = vmatprep.subr.mxu0 0.0
        %3279 = vmatpush1.msra.mxu0 %v3106
        %3280 = vmatprep.subr.mxu0 0.0
        %3281 = vmatpush1.msra.mxu0 %v3108
        %3282 = vmatprep.subr.mxu0 0.0
        %3283 = vmatpush1.msra.mxu0 %v3152
        %3284 = vmatprep.subr.mxu0 0.0
        %3285 = vmatpush1.msra.mxu0 0.0
        %3286 = vmatprep.subr.mxu0 0.0
        %3287 = vmatpush1.msra.mxu0 0.0
        %3288 = vmatprep.subr.mxu0 0.0
        %3289 = vmatpush1.msra.mxu0 0.0
        %3290 = vmatprep.subr.mxu0 0.0
        %3291 = vmatpush1.msra.mxu0 0.0
        %3292 = vmatprep.subr.mxu0 0.0
        %3293 = vmatpush1.msra.mxu0 0.0
        %3294 = vmatprep.subr.mxu0 0.0
        %3295 = vmatpush1.msra.mxu0 0.0
        %3296 = vmatprep.subr.mxu0 0.0
        %3297 = vmatpush1.msra.mxu0 0.0
        %3298 = vmatprep.subr.mxu0 0.0
        %3299 = vmatpush1.msra.mxu0 0.0
        %3300 = vmatprep.subr.mxu0 0.0
        %3301 = vmatpush1.msra.mxu0 0.0
        %3302 = vmatprep.subr.mxu0 0.0
        %3303 = vmatpush1.msra.mxu0 0.0
        %3304 = vmatprep.subr.mxu0 0.0
        %3305 = vmatpush1.msra.mxu0 0.0
        %3306 = vmatprep.subr.mxu0 0.0
        %3307 = vmatpush1.msra.mxu0 0.0
        %3308 = vmatprep.subr.mxu0 0.0
        %3309 = vmatpush1.msra.mxu0 0.0
        %3310 = vmatprep.subr.mxu0 0.0
        %3311 = vmatpush1.msra.mxu0 0.0
        %3312 = vmatprep.subr.mxu0 0.0
        %3313 = vmatpush1.msra.mxu0 0.0
        %3314 = vmatprep.subr.mxu0 0.0
        %3315 = vmatpush1.msra.mxu0 0.0
        %3316 = vmatprep.subr.mxu0 0.0
        %3317 = vmatpush1.msra.mxu0 0.0
        %3318 = vmatprep.subr.mxu0 0.0
        %3319 = vmatpush1.msra.mxu0 0.0
        %3320 = vmatprep.subr.mxu0 0.0
        %3321 = vmatpush1.msra.mxu0 0.0
        %3322 = vmatprep.subr.mxu0 0.0
        %3323 = vmatpush1.msra.mxu0 0.0
        %3324 = vmatprep.subr.mxu0 0.0
        %3325 = vmatpush1.msra.mxu0 0.0
        %3326 = vmatprep.subr.mxu0 0.0
        %3327 = vmatpush1.msra.mxu0 0.0
        %3328 = vmatprep.mubr.f32.mxu0 0.0
        %3329 = vmatmul.mubr.f32.gmra.mrb[0].mxu0 %v2759
        %v3330 = vpop.f32.mrb[0].mxu0
        %v3331 = vadd.f32 %v3221, %v3330
        %v3332 = vpop.f32.mrb[0].mxu0
        %3333 = vmatprep.mubr.f32.mxu0 0.0
        %3334 = vmatmul.mubr.f32.gmra.mrb[0].mxu0 %v2762
        %v3335 = vpop.f32.mrb[0].mxu0
        %v3336 = vadd.f32 %v3226, %v3335
        %v3337 = vpop.f32.mrb[0].mxu0
        %3338 = vmatprep.mubr.f32.mxu0 0.0
        %3339 = vmatmul.mubr.f32.gmra.mrb[0].mxu0 %v2765
        %v3340 = vpop.f32.mrb[0].mxu0
        %v3341 = vadd.f32 %v3231, %v3340
        %v3342 = vpop.f32.mrb[0].mxu0
        %3343 = vmatprep.mubr.f32.mxu0 0.0
        %3344 = vmatmul.mubr.f32.gmra.mrb[0].mxu0 %v2768
        %v3345 = vpop.f32.mrb[0].mxu0
        %v3346 = vadd.f32 %v3236, %v3345
        %v3347 = vpop.f32.mrb[0].mxu0
        %3348 = vmatprep.mubr.f32.mxu0 0.0
        %3349 = vmatmul.mubr.f32.gmra.mrb[0].mxu0 %v2771
        %v3350 = vpop.f32.mrb[0].mxu0
        %v3351 = vadd.f32 %v3241, %v3350
        %v3352 = vpop.f32.mrb[0].mxu0
        %3353 = vmatprep.mubr.f32.mxu0 0.0
        %3354 = vmatmul.mubr.f32.gmra.mrb[0].mxu0 %v2774
        %v3355 = vpop.f32.mrb[0].mxu0
        %v3356 = vadd.f32 %v3246, %v3355
        %v3357 = vpop.f32.mrb[0].mxu0
        %3358 = vmatprep.mubr.f32.mxu0 0.0
        %3359 = vmatmul.mubr.f32.gmra.mrb[0].mxu0 %v2777
        %v3360 = vpop.f32.mrb[0].mxu0
        %v3361 = vadd.f32 %v3251, %v3360
        %v3362 = vpop.f32.mrb[0].mxu0
        %3363 = vmatprep.mubr.f32.mxu0 0.0
        %3364 = vmatmul.mubr.f32.gmra.mrb[0].mxu0 %v2780
        %v3365 = vpop.f32.mrb[0].mxu0
        %v3366 = vadd.f32 %v3256, %v3365
        %v3367 = vpop.f32.mrb[0].mxu0
        %3368 = vmatprep.mubr.f32.mxu0 0.0
        %3369 = vmatmul.mubr.f32.gmra.mrb[0].mxu0 %v2783
        %v3370 = vpop.f32.mrb[0].mxu0
        %v3371 = vadd.f32 %v3261, %v3370
        %v3372 = vpop.f32.mrb[0].mxu0
        %3373 = vdwg.mxu0
        %3375 = vset.pattern.permute.xlu0 0
        %3376 = vperm.xlu0 %3375, %v3010
        %v3377 = vpop.permute.xlu0 %3376
        %3380 = vset.pattern.permute.xlu0 0
        %3381 = vperm.xlu0 %3380, %v3012
        %v3382 = vpop.permute.xlu0 %3381
        %3385 = vset.pattern.permute.xlu0 0
        %3386 = vperm.xlu0 %3385, %v3014
        %v3387 = vpop.permute.xlu0 %3386
        %3390 = vset.pattern.permute.xlu0 0
        %3391 = vperm.xlu0 %3390, %v3016
        %v3392 = vpop.permute.xlu0 %3391
        %3395 = vset.pattern.permute.xlu0 0
        %3396 = vperm.xlu0 %3395, %v3018
        %v3397 = vpop.permute.xlu0 %3396
        %3400 = vset.pattern.permute.xlu0 0
        %3401 = vperm.xlu0 %3400, %v3020
        %v3402 = vpop.permute.xlu0 %3401
        %3405 = vset.pattern.permute.xlu0 0
        %3406 = vperm.xlu0 %3405, %v3022
        %v3407 = vpop.permute.xlu0 %3406
        %3410 = vset.pattern.permute.xlu0 0
        %3411 = vperm.xlu0 %3410, %v3024
        %v3412 = vpop.permute.xlu0 %3411
        %3415 = vset.pattern.permute.xlu0 0
        %3416 = vperm.xlu0 %3415, %v3026
        %v3417 = vpop.permute.xlu0 %3416
        %v3419 = vmul.f32 %v3331, %v3377
        %v3420 = vmul.f32 %v3336, %v3382
        %v3421 = vmul.f32 %v3341, %v3387
        %v3422 = vmul.f32 %v3346, %v3392
        %v3423 = vmul.f32 %v3351, %v3397
        %v3424 = vmul.f32 %v3356, %v3402
        %v3425 = vmul.f32 %v3361, %v3407
        %v3426 = vmul.f32 %v3366, %v3412
        %v3427 = vmul.f32 %v3371, %v3417
        %v3428 = vmul.f32 %v2705, %v1506
        %v3429 = vmul.f32 %v2707, %v1507
        %v3430 = vmul.f32 %v2709, %v1508
        %v3431 = vmul.f32 %v2711, %v1509
        %v3432 = vmul.f32 %v2713, %v1510
        %v3433 = vmul.f32 %v2715, %v1511
        %v3434 = vmul.f32 %v2717, %v1512
        %v3435 = vmul.f32 %v2719, %v1513
        %v3436 = vmul.f32 %v2721, %v1514
        %v3437 = vmul.f32 %v2723, %v1515
        %v3438 = vmul.f32 %v2725, %v1516
        %v3439 = vmul.f32 %v2727, %v1517
        %v3440 = vmul.f32 %v2729, %v1518
        %v3441 = vmul.f32 %v2731, %v1519
        %v3442 = vmul.f32 %v2733, %v1520
        %v3443 = vmul.f32 %v2735, %v1521
        %v3444 = vmul.f32 %v2737, %v1522
        %v3445 = vmul.f32 %v2739, %v1523
        %v3446 = vmul.f32 %v2741, %v1524
        %v3447 = vmul.f32 %v2743, %v1525
        %v3448 = vmul.f32 %v2745, %v1526
        %v3449 = vmul.f32 %v2747, %v1527
        %v3450 = vmul.f32 %v2749, %v1528
        %v3451 = vmul.f32 %v2751, %v1529
        %v3452 = vmul.f32 %v2753, %v1530
        %v3453 = vmul.f32 %v2755, %v1531
        %v3454 = vmul.f32 %v2757, %v1532
        %v3456 = vsel %vm2632, %v3430, 0
        %v3459 = vsel %vm2632, %v3433, 0
        %v3462 = vsel %vm2632, %v3436, 0
        %v3465 = vsel %vm2632, %v3439, 0
        %v3468 = vsel %vm2632, %v3442, 0
        %v3471 = vsel %vm2632, %v3445, 0
        %v3474 = vsel %vm2632, %v3448, 0
        %v3477 = vsel %vm2632, %v3451, 0
        %v3480 = vsel %vm2632, %v3454, 0
        %3482 = vmatprep.subr.mxu0 0.0
        %3483 = vmatpush1.msra.mxu0 1.0
        %3484 = vmatprep.subr.mxu0 0.0
        %3485 = vmatpush1.msra.mxu0 1.0
        %3486 = vmatprep.subr.mxu0 0.0
        %3487 = vmatpush1.msra.mxu0 1.0
        %3488 = vmatprep.subr.mxu0 0.0
        %3489 = vmatpush1.msra.mxu0 1.0
        %3490 = vmatprep.subr.mxu0 0.0
        %3491 = vmatpush1.msra.mxu0 1.0
        %3492 = vmatprep.subr.mxu0 0.0
        %3493 = vmatpush1.msra.mxu0 1.0
        %3494 = vmatprep.subr.mxu0 0.0
        %3495 = vmatpush1.msra.mxu0 1.0
        %3496 = vmatprep.subr.mxu0 0.0
        %3497 = vmatpush1.msra.mxu0 1.0
        %3498 = vmatprep.subr.mxu0 0.0
        %3499 = vmatpush1.msra.mxu0 1.0
        %3500 = vmatprep.subr.mxu0 0.0
        %3501 = vmatpush1.msra.mxu0 1.0
        %3502 = vmatprep.subr.mxu0 0.0
        %3503 = vmatpush1.msra.mxu0 1.0
        %3504 = vmatprep.subr.mxu0 0.0
        %3505 = vmatpush1.msra.mxu0 1.0
        %3506 = vmatprep.subr.mxu0 0.0
        %3507 = vmatpush1.msra.mxu0 1.0
        %3508 = vmatprep.subr.mxu0 0.0
        %3509 = vmatpush1.msra.mxu0 1.0
        %3510 = vmatprep.subr.mxu0 0.0
        %3511 = vmatpush1.msra.mxu0 1.0
        %3512 = vmatprep.subr.mxu0 0.0
        %3513 = vmatpush1.msra.mxu0 1.0
        %3514 = vmatprep.subr.mxu0 0.0
        %3515 = vmatpush1.msra.mxu0 1.0
        %3516 = vmatprep.subr.mxu0 0.0
        %3517 = vmatpush1.msra.mxu0 1.0
        %3518 = vmatprep.subr.mxu0 0.0
        %3519 = vmatpush1.msra.mxu0 1.0
        %3520 = vmatprep.subr.mxu0 0.0
        %3521 = vmatpush1.msra.mxu0 1.0
        %3522 = vmatprep.subr.mxu0 0.0
        %3523 = vmatpush1.msra.mxu0 1.0
        %3524 = vmatprep.subr.mxu0 0.0
        %3525 = vmatpush1.msra.mxu0 1.0
        %3526 = vmatprep.subr.mxu0 0.0
        %3527 = vmatpush1.msra.mxu0 1.0
        %3528 = vmatprep.subr.mxu0 0.0
        %3529 = vmatpush1.msra.mxu0 1.0
        %3530 = vmatprep.subr.mxu0 0.0
        %3531 = vmatpush1.msra.mxu0 1.0
        %3532 = vmatprep.subr.mxu0 0.0
        %3533 = vmatpush1.msra.mxu0 1.0
        %3534 = vmatprep.subr.mxu0 0.0
        %3535 = vmatpush1.msra.mxu0 1.0
        %3536 = vmatprep.subr.mxu0 0.0
        %3537 = vmatpush1.msra.mxu0 1.0
        %3538 = vmatprep.subr.mxu0 0.0
        %3539 = vmatpush1.msra.mxu0 1.0
        %3540 = vmatprep.subr.mxu0 0.0
        %3541 = vmatpush1.msra.mxu0 1.0
        %3542 = vmatprep.subr.mxu0 0.0
        %3543 = vmatpush1.msra.mxu0 1.0
        %3544 = vmatprep.subr.mxu0 0.0
        %3545 = vmatpush1.msra.mxu0 1.0
        %3546 = vmatprep.mubr.f32.mxu0 %v3429
        %3547 = vmatmul.mubr.f32.gmra.mrb[0].mxu0 %v3428
        %v3548 = vpop.f32.mrb[0].mxu0
        %v3549 = vadd.f32 0.0, %v3548
        %v3550 = vpop.f32.mrb[0].mxu0
        %3551 = vmatprep.mubr.f32.mxu0 %v3432
        %3552 = vmatmul.mubr.f32.gmra.mrb[0].mxu0 %v3431
        %v3553 = vpop.f32.mrb[0].mxu0
        %v3554 = vadd.f32 0.0, %v3553
        %v3555 = vpop.f32.mrb[0].mxu0
        %3556 = vmatprep.mubr.f32.mxu0 %v3435
        %3557 = vmatmul.mubr.f32.gmra.mrb[0].mxu0 %v3434
        %v3558 = vpop.f32.mrb[0].mxu0
        %v3559 = vadd.f32 0.0, %v3558
        %v3560 = vpop.f32.mrb[0].mxu0
        %3561 = vmatprep.mubr.f32.mxu0 %v3438
        %3562 = vmatmul.mubr.f32.gmra.mrb[0].mxu0 %v3437
        %v3563 = vpop.f32.mrb[0].mxu0
        %v3564 = vadd.f32 0.0, %v3563
        %v3565 = vpop.f32.mrb[0].mxu0
        %3566 = vmatprep.mubr.f32.mxu0 %v3441
        %3567 = vmatmul.mubr.f32.gmra.mrb[0].mxu0 %v3440
        %v3568 = vpop.f32.mrb[0].mxu0
        %v3569 = vadd.f32 0.0, %v3568
        %v3570 = vpop.f32.mrb[0].mxu0
        %3571 = vmatprep.mubr.f32.mxu0 %v3444
        %3572 = vmatmul.mubr.f32.gmra.mrb[0].mxu0 %v3443
        %v3573 = vpop.f32.mrb[0].mxu0
        %v3574 = vadd.f32 0.0, %v3573
        %v3575 = vpop.f32.mrb[0].mxu0
        %3576 = vmatprep.mubr.f32.mxu0 %v3447
        %3577 = vmatmul.mubr.f32.gmra.mrb[0].mxu0 %v3446
        %v3578 = vpop.f32.mrb[0].mxu0
        %v3579 = vadd.f32 0.0, %v3578
        %v3580 = vpop.f32.mrb[0].mxu0
        %3581 = vmatprep.mubr.f32.mxu0 %v3450
        %3582 = vmatmul.mubr.f32.gmra.mrb[0].mxu0 %v3449
        %v3583 = vpop.f32.mrb[0].mxu0
        %v3584 = vadd.f32 0.0, %v3583
        %v3585 = vpop.f32.mrb[0].mxu0
        %3586 = vmatprep.mubr.f32.mxu0 %v3453
        %3587 = vmatmul.mubr.f32.gmra.mrb[0].mxu0 %v3452
        %v3588 = vpop.f32.mrb[0].mxu0
        %v3589 = vadd.f32 0.0, %v3588
        %v3590 = vpop.f32.mrb[0].mxu0
        %3591 = vdwg.mxu0
        %3592 = vmatprep.subr.mxu0 0.0
        %3593 = vmatpush1.msra.mxu0 1.0
        %3594 = vmatprep.subr.mxu0 0.0
        %3595 = vmatpush1.msra.mxu0 1.0
        %3596 = vmatprep.subr.mxu0 0.0
        %3597 = vmatpush1.msra.mxu0 1.0
        %3598 = vmatprep.subr.mxu0 0.0
        %3599 = vmatpush1.msra.mxu0 1.0
        %3600 = vmatprep.subr.mxu0 0.0
        %3601 = vmatpush1.msra.mxu0 1.0
        %3602 = vmatprep.subr.mxu0 0.0
        %3603 = vmatpush1.msra.mxu0 1.0
        %3604 = vmatprep.subr.mxu0 0.0
        %3605 = vmatpush1.msra.mxu0 1.0
        %3606 = vmatprep.subr.mxu0 0.0
        %3607 = vmatpush1.msra.mxu0 1.0
        %3608 = vmatprep.subr.mxu0 0.0
        %3609 = vmatpush1.msra.mxu0 1.0
        %3610 = vmatprep.subr.mxu0 0.0
        %3611 = vmatpush1.msra.mxu0 %v2787
        %3612 = vmatprep.subr.mxu0 0.0
        %3613 = vmatpush1.msra.mxu0 0.0
        %3614 = vmatprep.subr.mxu0 0.0
        %3615 = vmatpush1.msra.mxu0 0.0
        %3616 = vmatprep.subr.mxu0 0.0
        %3617 = vmatpush1.msra.mxu0 0.0
        %3618 = vmatprep.subr.mxu0 0.0
        %3619 = vmatpush1.msra.mxu0 0.0
        %3620 = vmatprep.subr.mxu0 0.0
        %3621 = vmatpush1.msra.mxu0 0.0
        %3622 = vmatprep.subr.mxu0 0.0
        %3623 = vmatpush1.msra.mxu0 0.0
        %3624 = vmatprep.subr.mxu0 0.0
        %3625 = vmatpush1.msra.mxu0 0.0
        %3626 = vmatprep.subr.mxu0 0.0
        %3627 = vmatpush1.msra.mxu0 0.0
        %3628 = vmatprep.subr.mxu0 0.0
        %3629 = vmatpush1.msra.mxu0 0.0
        %3630 = vmatprep.subr.mxu0 0.0
        %3631 = vmatpush1.msra.mxu0 0.0
        %3632 = vmatprep.subr.mxu0 0.0
        %3633 = vmatpush1.msra.mxu0 0.0
        %3634 = vmatprep.subr.mxu0 0.0
        %3635 = vmatpush1.msra.mxu0 0.0
        %3636 = vmatprep.subr.mxu0 0.0
        %3637 = vmatpush1.msra.mxu0 0.0
        %3638 = vmatprep.subr.mxu0 0.0
        %3639 = vmatpush1.msra.mxu0 0.0
        %3640 = vmatprep.subr.mxu0 0.0
        %3641 = vmatpush1.msra.mxu0 0.0
        %3642 = vmatprep.subr.mxu0 0.0
        %3643 = vmatpush1.msra.mxu0 0.0
        %3644 = vmatprep.subr.mxu0 0.0
        %3645 = vmatpush1.msra.mxu0 0.0
        %3646 = vmatprep.subr.mxu0 0.0
        %3647 = vmatpush1.msra.mxu0 0.0
        %3648 = vmatprep.subr.mxu0 0.0
        %3649 = vmatpush1.msra.mxu0 0.0
        %3650 = vmatprep.subr.mxu0 0.0
        %3651 = vmatpush1.msra.mxu0 0.0
        %3652 = vmatprep.subr.mxu0 0.0
        %3653 = vmatpush1.msra.mxu0 0.0
        %3654 = vmatprep.subr.mxu0 0.0
        %3655 = vmatpush1.msra.mxu0 0.0
        %3656 = vmatprep.mubr.f32.mxu0 0.0
        %3657 = vmatmul.mubr.f32.gmra.mrb[0].mxu0 %v3456
        %v3658 = vpop.f32.mrb[0].mxu0
        %v3659 = vadd.f32 %v3549, %v3658
        %v3660 = vpop.f32.mrb[0].mxu0
        %3661 = vmatprep.mubr.f32.mxu0 0.0
        %3662 = vmatmul.mubr.f32.gmra.mrb[0].mxu0 %v3459
        %v3663 = vpop.f32.mrb[0].mxu0
        %v3664 = vadd.f32 %v3554, %v3663
        %v3665 = vpop.f32.mrb[0].mxu0
        %3666 = vmatprep.mubr.f32.mxu0 0.0
        %3667 = vmatmul.mubr.f32.gmra.mrb[0].mxu0 %v3462
        %v3668 = vpop.f32.mrb[0].mxu0
        %v3669 = vadd.f32 %v3559, %v3668
        %v3670 = vpop.f32.mrb[0].mxu0
        %3671 = vmatprep.mubr.f32.mxu0 0.0
        %3672 = vmatmul.mubr.f32.gmra.mrb[0].mxu0 %v3465
        %v3673 = vpop.f32.mrb[0].mxu0
        %v3674 = vadd.f32 %v3564, %v3673
        %v3675 = vpop.f32.mrb[0].mxu0
        %3676 = vmatprep.mubr.f32.mxu0 0.0
        %3677 = vmatmul.mubr.f32.gmra.mrb[0].mxu0 %v3468
        %v3678 = vpop.f32.mrb[0].mxu0
        %v3679 = vadd.f32 %v3569, %v3678
        %v3680 = vpop.f32.mrb[0].mxu0
        %3681 = vmatprep.mubr.f32.mxu0 0.0
        %3682 = vmatmul.mubr.f32.gmra.mrb[0].mxu0 %v3471
        %v3683 = vpop.f32.mrb[0].mxu0
        %v3684 = vadd.f32 %v3574, %v3683
        %v3685 = vpop.f32.mrb[0].mxu0
        %3686 = vmatprep.mubr.f32.mxu0 0.0
        %3687 = vmatmul.mubr.f32.gmra.mrb[0].mxu0 %v3474
        %v3688 = vpop.f32.mrb[0].mxu0
        %v3689 = vadd.f32 %v3579, %v3688
        %v3690 = vpop.f32.mrb[0].mxu0
        %3691 = vmatprep.mubr.f32.mxu0 0.0
        %3692 = vmatmul.mubr.f32.gmra.mrb[0].mxu0 %v3477
        %v3693 = vpop.f32.mrb[0].mxu0
        %v3694 = vadd.f32 %v3584, %v3693
        %v3695 = vpop.f32.mrb[0].mxu0
        %3696 = vmatprep.mubr.f32.mxu0 0.0
        %3697 = vmatmul.mubr.f32.gmra.mrb[0].mxu0 %v3480
        %v3698 = vpop.f32.mrb[0].mxu0
        %v3699 = vadd.f32 %v3589, %v3698
        %v3700 = vpop.f32.mrb[0].mxu0
        %3701 = vdwg.mxu0
        %v3702 = vmul.f32 %v3659, %v3010
        %v3703 = vmul.f32 %v3664, %v3012
        %v3704 = vmul.f32 %v3669, %v3014
        %v3705 = vmul.f32 %v3674, %v3016
        %v3706 = vmul.f32 %v3679, %v3018
        %v3707 = vmul.f32 %v3684, %v3020
        %v3708 = vmul.f32 %v3689, %v3022
        %v3709 = vmul.f32 %v3694, %v3024
        %v3710 = vmul.f32 %v3699, %v3026
        %3712 = vset.pattern.permute.xlu0 0
        %3713 = vperm.xlu0 %3712, %v3702
        %v3714 = vpop.permute.xlu0 %3713
        %3717 = vset.pattern.permute.xlu0 0
        %3718 = vperm.xlu0 %3717, %v3703
        %v3719 = vpop.permute.xlu0 %3718
        %3722 = vset.pattern.permute.xlu0 0
        %3723 = vperm.xlu0 %3722, %v3704
        %v3724 = vpop.permute.xlu0 %3723
        %3727 = vset.pattern.permute.xlu0 0
        %3728 = vperm.xlu0 %3727, %v3705
        %v3729 = vpop.permute.xlu0 %3728
        %3732 = vset.pattern.permute.xlu0 0
        %3733 = vperm.xlu0 %3732, %v3706
        %v3734 = vpop.permute.xlu0 %3733
        %3737 = vset.pattern.permute.xlu0 0
        %3738 = vperm.xlu0 %3737, %v3707
        %v3739 = vpop.permute.xlu0 %3738
        %3742 = vset.pattern.permute.xlu0 0
        %3743 = vperm.xlu0 %3742, %v3708
        %v3744 = vpop.permute.xlu0 %3743
        %3747 = vset.pattern.permute.xlu0 0
        %3748 = vperm.xlu0 %3747, %v3709
        %v3749 = vpop.permute.xlu0 %3748
        %3752 = vset.pattern.permute.xlu0 0
        %3753 = vperm.xlu0 %3752, %v3710
        %v3754 = vpop.permute.xlu0 %3753
        %v3756 = vlaneseq
        %v3757 = vshrl.u32 %v3756, 7
        %v3758 = vsub.s32 0, %v3757
        %v3759 = vrot.slane %v1346, %v3758
        %v3760 = vmul.f32 %v3714, %v3759
        %v3761 = vmul.f32 %v3719, %v3759
        %v3762 = vmul.f32 %v3724, %v3759
        %v3763 = vmul.f32 %v3729, %v3759
        %v3764 = vmul.f32 %v3734, %v3759
        %v3765 = vmul.f32 %v3739, %v3759
        %v3766 = vmul.f32 %v3744, %v3759
        %v3767 = vmul.f32 %v3749, %v3759
        %v3768 = vmul.f32 %v3754, %v3759
        %v3769 = vadd.f32 %v3419, %v3760
        %v3770 = vadd.f32 %v3420, %v3761
        %v3771 = vadd.f32 %v3421, %v3762
        %v3772 = vadd.f32 %v3422, %v3763
        %v3773 = vadd.f32 %v3423, %v3764
        %v3774 = vadd.f32 %v3424, %v3765
        %v3775 = vadd.f32 %v3425, %v3766
        %v3776 = vadd.f32 %v3426, %v3767
        %v3777 = vadd.f32 %v3427, %v3768
        %v3778 = vmul.f32 %v2705, %v1552
        %v3779 = vmul.f32 %v2707, %v1553
        %v3780 = vmul.f32 %v2709, %v1554
        %v3781 = vmul.f32 %v2711, %v1555
        %v3782 = vmul.f32 %v2713, %v1556
        %v3783 = vmul.f32 %v2715, %v1557
        %v3784 = vmul.f32 %v2717, %v1558
        %v3785 = vmul.f32 %v2719, %v1559
        %v3786 = vmul.f32 %v2721, %v1560
        %v3787 = vmul.f32 %v2723, %v1561
        %v3788 = vmul.f32 %v2725, %v1562
        %v3789 = vmul.f32 %v2727, %v1563
        %v3790 = vmul.f32 %v2729, %v1564
        %v3791 = vmul.f32 %v2731, %v1565
        %v3792 = vmul.f32 %v2733, %v1566
        %v3793 = vmul.f32 %v2735, %v1567
        %v3794 = vmul.f32 %v2737, %v1568
        %v3795 = vmul.f32 %v2739, %v1569
        %v3796 = vmul.f32 %v2741, %v1570
        %v3797 = vmul.f32 %v2743, %v1571
        %v3798 = vmul.f32 %v2745, %v1572
        %v3799 = vmul.f32 %v2747, %v1573
        %v3800 = vmul.f32 %v2749, %v1574
        %v3801 = vmul.f32 %v2751, %v1575
        %v3802 = vmul.f32 %v2753, %v1576
        %v3803 = vmul.f32 %v2755, %v1577
        %v3804 = vmul.f32 %v2757, %v1578
        %v3806 = vsel %vm2632, %v3780, 0
        %v3809 = vsel %vm2632, %v3783, 0
        %v3812 = vsel %vm2632, %v3786, 0
        %v3815 = vsel %vm2632, %v3789, 0
        %v3818 = vsel %vm2632, %v3792, 0
        %v3821 = vsel %vm2632, %v3795, 0
        %v3824 = vsel %vm2632, %v3798, 0
        %v3827 = vsel %vm2632, %v3801, 0
        %v3830 = vsel %vm2632, %v3804, 0
        %3832 = vmatprep.subr.mxu0 0.0
        %3833 = vmatpush1.msra.mxu0 1.0
        %3834 = vmatprep.subr.mxu0 0.0
        %3835 = vmatpush1.msra.mxu0 1.0
        %3836 = vmatprep.subr.mxu0 0.0
        %3837 = vmatpush1.msra.mxu0 1.0
        %3838 = vmatprep.subr.mxu0 0.0
        %3839 = vmatpush1.msra.mxu0 1.0
        %3840 = vmatprep.subr.mxu0 0.0
        %3841 = vmatpush1.msra.mxu0 1.0
        %3842 = vmatprep.subr.mxu0 0.0
        %3843 = vmatpush1.msra.mxu0 1.0
        %3844 = vmatprep.subr.mxu0 0.0
        %3845 = vmatpush1.msra.mxu0 1.0
        %3846 = vmatprep.subr.mxu0 0.0
        %3847 = vmatpush1.msra.mxu0 1.0
        %3848 = vmatprep.subr.mxu0 0.0
        %3849 = vmatpush1.msra.mxu0 1.0
        %3850 = vmatprep.subr.mxu0 0.0
        %3851 = vmatpush1.msra.mxu0 1.0
        %3852 = vmatprep.subr.mxu0 0.0
        %3853 = vmatpush1.msra.mxu0 1.0
        %3854 = vmatprep.subr.mxu0 0.0
        %3855 = vmatpush1.msra.mxu0 1.0
        %3856 = vmatprep.subr.mxu0 0.0
        %3857 = vmatpush1.msra.mxu0 1.0
        %3858 = vmatprep.subr.mxu0 0.0
        %3859 = vmatpush1.msra.mxu0 1.0
        %3860 = vmatprep.subr.mxu0 0.0
        %3861 = vmatpush1.msra.mxu0 1.0
        %3862 = vmatprep.subr.mxu0 0.0
        %3863 = vmatpush1.msra.mxu0 1.0
        %3864 = vmatprep.subr.mxu0 0.0
        %3865 = vmatpush1.msra.mxu0 1.0
        %3866 = vmatprep.subr.mxu0 0.0
        %3867 = vmatpush1.msra.mxu0 1.0
        %3868 = vmatprep.subr.mxu0 0.0
        %3869 = vmatpush1.msra.mxu0 1.0
        %3870 = vmatprep.subr.mxu0 0.0
        %3871 = vmatpush1.msra.mxu0 1.0
        %3872 = vmatprep.subr.mxu0 0.0
        %3873 = vmatpush1.msra.mxu0 1.0
        %3874 = vmatprep.subr.mxu0 0.0
        %3875 = vmatpush1.msra.mxu0 1.0
        %3876 = vmatprep.subr.mxu0 0.0
        %3877 = vmatpush1.msra.mxu0 1.0
        %3878 = vmatprep.subr.mxu0 0.0
        %3879 = vmatpush1.msra.mxu0 1.0
        %3880 = vmatprep.subr.mxu0 0.0
        %3881 = vmatpush1.msra.mxu0 1.0
        %3882 = vmatprep.subr.mxu0 0.0
        %3883 = vmatpush1.msra.mxu0 1.0
        %3884 = vmatprep.subr.mxu0 0.0
        %3885 = vmatpush1.msra.mxu0 1.0
        %3886 = vmatprep.subr.mxu0 0.0
        %3887 = vmatpush1.msra.mxu0 1.0
        %3888 = vmatprep.subr.mxu0 0.0
        %3889 = vmatpush1.msra.mxu0 1.0
        %3890 = vmatprep.subr.mxu0 0.0
        %3891 = vmatpush1.msra.mxu0 1.0
        %3892 = vmatprep.subr.mxu0 0.0
        %3893 = vmatpush1.msra.mxu0 1.0
        %3894 = vmatprep.subr.mxu0 0.0
        %3895 = vmatpush1.msra.mxu0 1.0
        %3896 = vmatprep.mubr.f32.mxu0 %v3779
        %3897 = vmatmul.mubr.f32.gmra.mrb[0].mxu0 %v3778
        %v3898 = vpop.f32.mrb[0].mxu0
        %v3899 = vadd.f32 0.0, %v3898
        %v3900 = vpop.f32.mrb[0].mxu0
        %3901 = vmatprep.mubr.f32.mxu0 %v3782
        %3902 = vmatmul.mubr.f32.gmra.mrb[0].mxu0 %v3781
        %v3903 = vpop.f32.mrb[0].mxu0
        %v3904 = vadd.f32 0.0, %v3903
        %v3905 = vpop.f32.mrb[0].mxu0
        %3906 = vmatprep.mubr.f32.mxu0 %v3785
        %3907 = vmatmul.mubr.f32.gmra.mrb[0].mxu0 %v3784
        %v3908 = vpop.f32.mrb[0].mxu0
        %v3909 = vadd.f32 0.0, %v3908
        %v3910 = vpop.f32.mrb[0].mxu0
        %3911 = vmatprep.mubr.f32.mxu0 %v3788
        %3912 = vmatmul.mubr.f32.gmra.mrb[0].mxu0 %v3787
        %v3913 = vpop.f32.mrb[0].mxu0
        %v3914 = vadd.f32 0.0, %v3913
        %v3915 = vpop.f32.mrb[0].mxu0
        %3916 = vmatprep.mubr.f32.mxu0 %v3791
        %3917 = vmatmul.mubr.f32.gmra.mrb[0].mxu0 %v3790
        %v3918 = vpop.f32.mrb[0].mxu0
        %v3919 = vadd.f32 0.0, %v3918
        %v3920 = vpop.f32.mrb[0].mxu0
        %3921 = vmatprep.mubr.f32.mxu0 %v3794
        %3922 = vmatmul.mubr.f32.gmra.mrb[0].mxu0 %v3793
        %v3923 = vpop.f32.mrb[0].mxu0
        %v3924 = vadd.f32 0.0, %v3923
        %v3925 = vpop.f32.mrb[0].mxu0
        %3926 = vmatprep.mubr.f32.mxu0 %v3797
        %3927 = vmatmul.mubr.f32.gmra.mrb[0].mxu0 %v3796
        %v3928 = vpop.f32.mrb[0].mxu0
        %v3929 = vadd.f32 0.0, %v3928
        %v3930 = vpop.f32.mrb[0].mxu0
        %3931 = vmatprep.mubr.f32.mxu0 %v3800
        %3932 = vmatmul.mubr.f32.gmra.mrb[0].mxu0 %v3799
        %v3933 = vpop.f32.mrb[0].mxu0
        %v3934 = vadd.f32 0.0, %v3933
        %v3935 = vpop.f32.mrb[0].mxu0
        %3936 = vmatprep.mubr.f32.mxu0 %v3803
        %3937 = vmatmul.mubr.f32.gmra.mrb[0].mxu0 %v3802
        %v3938 = vpop.f32.mrb[0].mxu0
        %v3939 = vadd.f32 0.0, %v3938
        %v3940 = vpop.f32.mrb[0].mxu0
        %3941 = vdwg.mxu0
        %3942 = vmatprep.subr.mxu0 0.0
        %3943 = vmatpush1.msra.mxu0 1.0
        %3944 = vmatprep.subr.mxu0 0.0
        %3945 = vmatpush1.msra.mxu0 1.0
        %3946 = vmatprep.subr.mxu0 0.0
        %3947 = vmatpush1.msra.mxu0 1.0
        %3948 = vmatprep.subr.mxu0 0.0
        %3949 = vmatpush1.msra.mxu0 1.0
        %3950 = vmatprep.subr.mxu0 0.0
        %3951 = vmatpush1.msra.mxu0 1.0
        %3952 = vmatprep.subr.mxu0 0.0
        %3953 = vmatpush1.msra.mxu0 1.0
        %3954 = vmatprep.subr.mxu0 0.0
        %3955 = vmatpush1.msra.mxu0 1.0
        %3956 = vmatprep.subr.mxu0 0.0
        %3957 = vmatpush1.msra.mxu0 1.0
        %3958 = vmatprep.subr.mxu0 0.0
        %3959 = vmatpush1.msra.mxu0 1.0
        %3960 = vmatprep.subr.mxu0 0.0
        %3961 = vmatpush1.msra.mxu0 %v2787
        %3962 = vmatprep.subr.mxu0 0.0
        %3963 = vmatpush1.msra.mxu0 0.0
        %3964 = vmatprep.subr.mxu0 0.0
        %3965 = vmatpush1.msra.mxu0 0.0
        %3966 = vmatprep.subr.mxu0 0.0
        %3967 = vmatpush1.msra.mxu0 0.0
        %3968 = vmatprep.subr.mxu0 0.0
        %3969 = vmatpush1.msra.mxu0 0.0
        %3970 = vmatprep.subr.mxu0 0.0
        %3971 = vmatpush1.msra.mxu0 0.0
        %3972 = vmatprep.subr.mxu0 0.0
        %3973 = vmatpush1.msra.mxu0 0.0
        %3974 = vmatprep.subr.mxu0 0.0
        %3975 = vmatpush1.msra.mxu0 0.0
        %3976 = vmatprep.subr.mxu0 0.0
        %3977 = vmatpush1.msra.mxu0 0.0
        %3978 = vmatprep.subr.mxu0 0.0
        %3979 = vmatpush1.msra.mxu0 0.0
        %3980 = vmatprep.subr.mxu0 0.0
        %3981 = vmatpush1.msra.mxu0 0.0
        %3982 = vmatprep.subr.mxu0 0.0
        %3983 = vmatpush1.msra.mxu0 0.0
        %3984 = vmatprep.subr.mxu0 0.0
        %3985 = vmatpush1.msra.mxu0 0.0
        %3986 = vmatprep.subr.mxu0 0.0
        %3987 = vmatpush1.msra.mxu0 0.0
        %3988 = vmatprep.subr.mxu0 0.0
        %3989 = vmatpush1.msra.mxu0 0.0
        %3990 = vmatprep.subr.mxu0 0.0
        %3991 = vmatpush1.msra.mxu0 0.0
        %3992 = vmatprep.subr.mxu0 0.0
        %3993 = vmatpush1.msra.mxu0 0.0
        %3994 = vmatprep.subr.mxu0 0.0
        %3995 = vmatpush1.msra.mxu0 0.0
        %3996 = vmatprep.subr.mxu0 0.0
        %3997 = vmatpush1.msra.mxu0 0.0
        %3998 = vmatprep.subr.mxu0 0.0
        %3999 = vmatpush1.msra.mxu0 0.0
        %4000 = vmatprep.subr.mxu0 0.0
        %4001 = vmatpush1.msra.mxu0 0.0
        %4002 = vmatprep.subr.mxu0 0.0
        %4003 = vmatpush1.msra.mxu0 0.0
        %4004 = vmatprep.subr.mxu0 0.0
        %4005 = vmatpush1.msra.mxu0 0.0
        %4006 = vmatprep.mubr.f32.mxu0 0.0
        %4007 = vmatmul.mubr.f32.gmra.mrb[0].mxu0 %v3806
        %v4008 = vpop.f32.mrb[0].mxu0
        %v4009 = vadd.f32 %v3899, %v4008
        %v4010 = vpop.f32.mrb[0].mxu0
        %4011 = vmatprep.mubr.f32.mxu0 0.0
        %4012 = vmatmul.mubr.f32.gmra.mrb[0].mxu0 %v3809
        %v4013 = vpop.f32.mrb[0].mxu0
        %v4014 = vadd.f32 %v3904, %v4013
        %v4015 = vpop.f32.mrb[0].mxu0
        %4016 = vmatprep.mubr.f32.mxu0 0.0
        %4017 = vmatmul.mubr.f32.gmra.mrb[0].mxu0 %v3812
        %v4018 = vpop.f32.mrb[0].mxu0
        %v4019 = vadd.f32 %v3909, %v4018
        %v4020 = vpop.f32.mrb[0].mxu0
        %4021 = vmatprep.mubr.f32.mxu0 0.0
        %4022 = vmatmul.mubr.f32.gmra.mrb[0].mxu0 %v3815
        %v4023 = vpop.f32.mrb[0].mxu0
        %v4024 = vadd.f32 %v3914, %v4023
        %v4025 = vpop.f32.mrb[0].mxu0
        %4026 = vmatprep.mubr.f32.mxu0 0.0
        %4027 = vmatmul.mubr.f32.gmra.mrb[0].mxu0 %v3818
        %v4028 = vpop.f32.mrb[0].mxu0
        %v4029 = vadd.f32 %v3919, %v4028
        %v4030 = vpop.f32.mrb[0].mxu0
        %4031 = vmatprep.mubr.f32.mxu0 0.0
        %4032 = vmatmul.mubr.f32.gmra.mrb[0].mxu0 %v3821
        %v4033 = vpop.f32.mrb[0].mxu0
        %v4034 = vadd.f32 %v3924, %v4033
        %v4035 = vpop.f32.mrb[0].mxu0
        %4036 = vmatprep.mubr.f32.mxu0 0.0
        %4037 = vmatmul.mubr.f32.gmra.mrb[0].mxu0 %v3824
        %v4038 = vpop.f32.mrb[0].mxu0
        %v4039 = vadd.f32 %v3929, %v4038
        %v4040 = vpop.f32.mrb[0].mxu0
        %4041 = vmatprep.mubr.f32.mxu0 0.0
        %4042 = vmatmul.mubr.f32.gmra.mrb[0].mxu0 %v3827
        %v4043 = vpop.f32.mrb[0].mxu0
        %v4044 = vadd.f32 %v3934, %v4043
        %v4045 = vpop.f32.mrb[0].mxu0
        %4046 = vmatprep.mubr.f32.mxu0 0.0
        %4047 = vmatmul.mubr.f32.gmra.mrb[0].mxu0 %v3830
        %v4048 = vpop.f32.mrb[0].mxu0
        %v4049 = vadd.f32 %v3939, %v4048
        %v4050 = vpop.f32.mrb[0].mxu0
        %4051 = vdwg.mxu0
        %v4052 = vmul.f32 %v4009, %v3010
        %v4053 = vmul.f32 %v4014, %v3012
        %v4054 = vmul.f32 %v4019, %v3014
        %v4055 = vmul.f32 %v4024, %v3016
        %v4056 = vmul.f32 %v4029, %v3018
        %v4057 = vmul.f32 %v4034, %v3020
        %v4058 = vmul.f32 %v4039, %v3022
        %v4059 = vmul.f32 %v4044, %v3024
        %v4060 = vmul.f32 %v4049, %v3026
        %4062 = vset.pattern.permute.xlu0 0
        %4063 = vperm.xlu0 %4062, %v4052
        %v4064 = vpop.permute.xlu0 %4063
        %4067 = vset.pattern.permute.xlu0 0
        %4068 = vperm.xlu0 %4067, %v4053
        %v4069 = vpop.permute.xlu0 %4068
        %4072 = vset.pattern.permute.xlu0 0
        %4073 = vperm.xlu0 %4072, %v4054
        %v4074 = vpop.permute.xlu0 %4073
        %4077 = vset.pattern.permute.xlu0 0
        %4078 = vperm.xlu0 %4077, %v4055
        %v4079 = vpop.permute.xlu0 %4078
        %4082 = vset.pattern.permute.xlu0 0
        %4083 = vperm.xlu0 %4082, %v4056
        %v4084 = vpop.permute.xlu0 %4083
        %4087 = vset.pattern.permute.xlu0 0
        %4088 = vperm.xlu0 %4087, %v4057
        %v4089 = vpop.permute.xlu0 %4088
        %4092 = vset.pattern.permute.xlu0 0
        %4093 = vperm.xlu0 %4092, %v4058
        %v4094 = vpop.permute.xlu0 %4093
        %4097 = vset.pattern.permute.xlu0 0
        %4098 = vperm.xlu0 %4097, %v4059
        %v4099 = vpop.permute.xlu0 %4098
        %4102 = vset.pattern.permute.xlu0 0
        %4103 = vperm.xlu0 %4102, %v4060
        %v4104 = vpop.permute.xlu0 %4103
        %v4106 = vlaneseq
        %v4107 = vshrl.u32 %v4106, 7
        %v4108 = vsub.s32 1, %v4107
        %v4109 = vrot.slane %v1346, %v4108
        %v4110 = vmul.f32 %v4064, %v4109
        %v4111 = vmul.f32 %v4069, %v4109
        %v4112 = vmul.f32 %v4074, %v4109
        %v4113 = vmul.f32 %v4079, %v4109
        %v4114 = vmul.f32 %v4084, %v4109
        %v4115 = vmul.f32 %v4089, %v4109
        %v4116 = vmul.f32 %v4094, %v4109
        %v4117 = vmul.f32 %v4099, %v4109
        %v4118 = vmul.f32 %v4104, %v4109
        %v4119 = vadd.f32 %v3769, %v4110
        %v4120 = vadd.f32 %v3770, %v4111
        %v4121 = vadd.f32 %v3771, %v4112
        %v4122 = vadd.f32 %v3772, %v4113
        %v4123 = vadd.f32 %v3773, %v4114
        %v4124 = vadd.f32 %v3774, %v4115
        %v4125 = vadd.f32 %v3775, %v4116
        %v4126 = vadd.f32 %v3776, %v4117
        %v4127 = vadd.f32 %v3777, %v4118
        %v4128 = vmul.f32 %v2705, %v1598
        %v4129 = vmul.f32 %v2707, %v1599
        %v4130 = vmul.f32 %v2709, %v1600
        %v4131 = vmul.f32 %v2711, %v1601
        %v4132 = vmul.f32 %v2713, %v1602
        %v4133 = vmul.f32 %v2715, %v1603
        %v4134 = vmul.f32 %v2717, %v1604
        %v4135 = vmul.f32 %v2719, %v1605
        %v4136 = vmul.f32 %v2721, %v1606
        %v4137 = vmul.f32 %v2723, %v1607
        %v4138 = vmul.f32 %v2725, %v1608
        %v4139 = vmul.f32 %v2727, %v1609
        %v4140 = vmul.f32 %v2729, %v1610
        %v4141 = vmul.f32 %v2731, %v1611
        %v4142 = vmul.f32 %v2733, %v1612
        %v4143 = vmul.f32 %v2735, %v1613
        %v4144 = vmul.f32 %v2737, %v1614
        %v4145 = vmul.f32 %v2739, %v1615
        %v4146 = vmul.f32 %v2741, %v1616
        %v4147 = vmul.f32 %v2743, %v1617
        %v4148 = vmul.f32 %v2745, %v1618
        %v4149 = vmul.f32 %v2747, %v1619
        %v4150 = vmul.f32 %v2749, %v1620
        %v4151 = vmul.f32 %v2751, %v1621
        %v4152 = vmul.f32 %v2753, %v1622
        %v4153 = vmul.f32 %v2755, %v1623
        %v4154 = vmul.f32 %v2757, %v1624
        %v4156 = vsel %vm2632, %v4130, 0
        %v4159 = vsel %vm2632, %v4133, 0
        %v4162 = vsel %vm2632, %v4136, 0
        %v4165 = vsel %vm2632, %v4139, 0
        %v4168 = vsel %vm2632, %v4142, 0
        %v4171 = vsel %vm2632, %v4145, 0
        %v4174 = vsel %vm2632, %v4148, 0
        %v4177 = vsel %vm2632, %v4151, 0
        %v4180 = vsel %vm2632, %v4154, 0
        %4182 = vmatprep.subr.mxu0 0.0
        %4183 = vmatpush1.msra.mxu0 1.0
        %4184 = vmatprep.subr.mxu0 0.0
        %4185 = vmatpush1.msra.mxu0 1.0
        %4186 = vmatprep.subr.mxu0 0.0
        %4187 = vmatpush1.msra.mxu0 1.0
        %4188 = vmatprep.subr.mxu0 0.0
        %4189 = vmatpush1.msra.mxu0 1.0
        %4190 = vmatprep.subr.mxu0 0.0
        %4191 = vmatpush1.msra.mxu0 1.0
        %4192 = vmatprep.subr.mxu0 0.0
        %4193 = vmatpush1.msra.mxu0 1.0
        %4194 = vmatprep.subr.mxu0 0.0
        %4195 = vmatpush1.msra.mxu0 1.0
        %4196 = vmatprep.subr.mxu0 0.0
        %4197 = vmatpush1.msra.mxu0 1.0
        %4198 = vmatprep.subr.mxu0 0.0
        %4199 = vmatpush1.msra.mxu0 1.0
        %4200 = vmatprep.subr.mxu0 0.0
        %4201 = vmatpush1.msra.mxu0 1.0
        %4202 = vmatprep.subr.mxu0 0.0
        %4203 = vmatpush1.msra.mxu0 1.0
        %4204 = vmatprep.subr.mxu0 0.0
        %4205 = vmatpush1.msra.mxu0 1.0
        %4206 = vmatprep.subr.mxu0 0.0
        %4207 = vmatpush1.msra.mxu0 1.0
        %4208 = vmatprep.subr.mxu0 0.0
        %4209 = vmatpush1.msra.mxu0 1.0
        %4210 = vmatprep.subr.mxu0 0.0
        %4211 = vmatpush1.msra.mxu0 1.0
        %4212 = vmatprep.subr.mxu0 0.0
        %4213 = vmatpush1.msra.mxu0 1.0
        %4214 = vmatprep.subr.mxu0 0.0
        %4215 = vmatpush1.msra.mxu0 1.0
        %4216 = vmatprep.subr.mxu0 0.0
        %4217 = vmatpush1.msra.mxu0 1.0
        %4218 = vmatprep.subr.mxu0 0.0
        %4219 = vmatpush1.msra.mxu0 1.0
        %4220 = vmatprep.subr.mxu0 0.0
        %4221 = vmatpush1.msra.mxu0 1.0
        %4222 = vmatprep.subr.mxu0 0.0
        %4223 = vmatpush1.msra.mxu0 1.0
        %4224 = vmatprep.subr.mxu0 0.0
        %4225 = vmatpush1.msra.mxu0 1.0
        %4226 = vmatprep.subr.mxu0 0.0
        %4227 = vmatpush1.msra.mxu0 1.0
        %4228 = vmatprep.subr.mxu0 0.0
        %4229 = vmatpush1.msra.mxu0 1.0
        %4230 = vmatprep.subr.mxu0 0.0
        %4231 = vmatpush1.msra.mxu0 1.0
        %4232 = vmatprep.subr.mxu0 0.0
        %4233 = vmatpush1.msra.mxu0 1.0
        %4234 = vmatprep.subr.mxu0 0.0
        %4235 = vmatpush1.msra.mxu0 1.0
        %4236 = vmatprep.subr.mxu0 0.0
        %4237 = vmatpush1.msra.mxu0 1.0
        %4238 = vmatprep.subr.mxu0 0.0
        %4239 = vmatpush1.msra.mxu0 1.0
        %4240 = vmatprep.subr.mxu0 0.0
        %4241 = vmatpush1.msra.mxu0 1.0
        %4242 = vmatprep.subr.mxu0 0.0
        %4243 = vmatpush1.msra.mxu0 1.0
        %4244 = vmatprep.subr.mxu0 0.0
        %4245 = vmatpush1.msra.mxu0 1.0
        %4246 = vmatprep.mubr.f32.mxu0 %v4129
        %4247 = vmatmul.mubr.f32.gmra.mrb[0].mxu0 %v4128
        %v4248 = vpop.f32.mrb[0].mxu0
        %v4249 = vadd.f32 0.0, %v4248
        %v4250 = vpop.f32.mrb[0].mxu0
        %4251 = vmatprep.mubr.f32.mxu0 %v4132
        %4252 = vmatmul.mubr.f32.gmra.mrb[0].mxu0 %v4131
        %v4253 = vpop.f32.mrb[0].mxu0
        %v4254 = vadd.f32 0.0, %v4253
        %v4255 = vpop.f32.mrb[0].mxu0
        %4256 = vmatprep.mubr.f32.mxu0 %v4135
        %4257 = vmatmul.mubr.f32.gmra.mrb[0].mxu0 %v4134
        %v4258 = vpop.f32.mrb[0].mxu0
        %v4259 = vadd.f32 0.0, %v4258
        %v4260 = vpop.f32.mrb[0].mxu0
        %4261 = vmatprep.mubr.f32.mxu0 %v4138
        %4262 = vmatmul.mubr.f32.gmra.mrb[0].mxu0 %v4137
        %v4263 = vpop.f32.mrb[0].mxu0
        %v4264 = vadd.f32 0.0, %v4263
        %v4265 = vpop.f32.mrb[0].mxu0
        %4266 = vmatprep.mubr.f32.mxu0 %v4141
        %4267 = vmatmul.mubr.f32.gmra.mrb[0].mxu0 %v4140
        %v4268 = vpop.f32.mrb[0].mxu0
        %v4269 = vadd.f32 0.0, %v4268
        %v4270 = vpop.f32.mrb[0].mxu0
        %4271 = vmatprep.mubr.f32.mxu0 %v4144
        %4272 = vmatmul.mubr.f32.gmra.mrb[0].mxu0 %v4143
        %v4273 = vpop.f32.mrb[0].mxu0
        %v4274 = vadd.f32 0.0, %v4273
        %v4275 = vpop.f32.mrb[0].mxu0
        %4276 = vmatprep.mubr.f32.mxu0 %v4147
        %4277 = vmatmul.mubr.f32.gmra.mrb[0].mxu0 %v4146
        %v4278 = vpop.f32.mrb[0].mxu0
        %v4279 = vadd.f32 0.0, %v4278
        %v4280 = vpop.f32.mrb[0].mxu0
        %4281 = vmatprep.mubr.f32.mxu0 %v4150
        %4282 = vmatmul.mubr.f32.gmra.mrb[0].mxu0 %v4149
        %v4283 = vpop.f32.mrb[0].mxu0
        %v4284 = vadd.f32 0.0, %v4283
        %v4285 = vpop.f32.mrb[0].mxu0
        %4286 = vmatprep.mubr.f32.mxu0 %v4153
        %4287 = vmatmul.mubr.f32.gmra.mrb[0].mxu0 %v4152
        %v4288 = vpop.f32.mrb[0].mxu0
        %v4289 = vadd.f32 0.0, %v4288
        %v4290 = vpop.f32.mrb[0].mxu0
        %4291 = vdwg.mxu0
        %4292 = vmatprep.subr.mxu0 0.0
        %4293 = vmatpush1.msra.mxu0 1.0
        %4294 = vmatprep.subr.mxu0 0.0
        %4295 = vmatpush1.msra.mxu0 1.0
        %4296 = vmatprep.subr.mxu0 0.0
        %4297 = vmatpush1.msra.mxu0 1.0
        %4298 = vmatprep.subr.mxu0 0.0
        %4299 = vmatpush1.msra.mxu0 1.0
        %4300 = vmatprep.subr.mxu0 0.0
        %4301 = vmatpush1.msra.mxu0 1.0
        %4302 = vmatprep.subr.mxu0 0.0
        %4303 = vmatpush1.msra.mxu0 1.0
        %4304 = vmatprep.subr.mxu0 0.0
        %4305 = vmatpush1.msra.mxu0 1.0
        %4306 = vmatprep.subr.mxu0 0.0
        %4307 = vmatpush1.msra.mxu0 1.0
        %4308 = vmatprep.subr.mxu0 0.0
        %4309 = vmatpush1.msra.mxu0 1.0
        %4310 = vmatprep.subr.mxu0 0.0
        %4311 = vmatpush1.msra.mxu0 %v2787
        %4312 = vmatprep.subr.mxu0 0.0
        %4313 = vmatpush1.msra.mxu0 0.0
        %4314 = vmatprep.subr.mxu0 0.0
        %4315 = vmatpush1.msra.mxu0 0.0
        %4316 = vmatprep.subr.mxu0 0.0
        %4317 = vmatpush1.msra.mxu0 0.0
        %4318 = vmatprep.subr.mxu0 0.0
        %4319 = vmatpush1.msra.mxu0 0.0
        %4320 = vmatprep.subr.mxu0 0.0
        %4321 = vmatpush1.msra.mxu0 0.0
        %4322 = vmatprep.subr.mxu0 0.0
        %4323 = vmatpush1.msra.mxu0 0.0
        %4324 = vmatprep.subr.mxu0 0.0
        %4325 = vmatpush1.msra.mxu0 0.0
        %4326 = vmatprep.subr.mxu0 0.0
        %4327 = vmatpush1.msra.mxu0 0.0
        %4328 = vmatprep.subr.mxu0 0.0
        %4329 = vmatpush1.msra.mxu0 0.0
        %4330 = vmatprep.subr.mxu0 0.0
        %4331 = vmatpush1.msra.mxu0 0.0
        %4332 = vmatprep.subr.mxu0 0.0
        %4333 = vmatpush1.msra.mxu0 0.0
        %4334 = vmatprep.subr.mxu0 0.0
        %4335 = vmatpush1.msra.mxu0 0.0
        %4336 = vmatprep.subr.mxu0 0.0
        %4337 = vmatpush1.msra.mxu0 0.0
        %4338 = vmatprep.subr.mxu0 0.0
        %4339 = vmatpush1.msra.mxu0 0.0
        %4340 = vmatprep.subr.mxu0 0.0
        %4341 = vmatpush1.msra.mxu0 0.0
        %4342 = vmatprep.subr.mxu0 0.0
        %4343 = vmatpush1.msra.mxu0 0.0
        %4344 = vmatprep.subr.mxu0 0.0
        %4345 = vmatpush1.msra.mxu0 0.0
        %4346 = vmatprep.subr.mxu0 0.0
        %4347 = vmatpush1.msra.mxu0 0.0
        %4348 = vmatprep.subr.mxu0 0.0
        %4349 = vmatpush1.msra.mxu0 0.0
        %4350 = vmatprep.subr.mxu0 0.0
        %4351 = vmatpush1.msra.mxu0 0.0
        %4352 = vmatprep.subr.mxu0 0.0
        %4353 = vmatpush1.msra.mxu0 0.0
        %4354 = vmatprep.subr.mxu0 0.0
        %4355 = vmatpush1.msra.mxu0 0.0
        %4356 = vmatprep.mubr.f32.mxu0 0.0
        %4357 = vmatmul.mubr.f32.gmra.mrb[0].mxu0 %v4156
        %v4358 = vpop.f32.mrb[0].mxu0
        %v4359 = vadd.f32 %v4249, %v4358
        %v4360 = vpop.f32.mrb[0].mxu0
        %4361 = vmatprep.mubr.f32.mxu0 0.0
        %4362 = vmatmul.mubr.f32.gmra.mrb[0].mxu0 %v4159
        %v4363 = vpop.f32.mrb[0].mxu0
        %v4364 = vadd.f32 %v4254, %v4363
        %v4365 = vpop.f32.mrb[0].mxu0
        %4366 = vmatprep.mubr.f32.mxu0 0.0
        %4367 = vmatmul.mubr.f32.gmra.mrb[0].mxu0 %v4162
        %v4368 = vpop.f32.mrb[0].mxu0
        %v4369 = vadd.f32 %v4259, %v4368
        %v4370 = vpop.f32.mrb[0].mxu0
        %4371 = vmatprep.mubr.f32.mxu0 0.0
        %4372 = vmatmul.mubr.f32.gmra.mrb[0].mxu0 %v4165
        %v4373 = vpop.f32.mrb[0].mxu0
        %v4374 = vadd.f32 %v4264, %v4373
        %v4375 = vpop.f32.mrb[0].mxu0
        %4376 = vmatprep.mubr.f32.mxu0 0.0
        %4377 = vmatmul.mubr.f32.gmra.mrb[0].mxu0 %v4168
        %v4378 = vpop.f32.mrb[0].mxu0
        %v4379 = vadd.f32 %v4269, %v4378
        %v4380 = vpop.f32.mrb[0].mxu0
        %4381 = vmatprep.mubr.f32.mxu0 0.0
        %4382 = vmatmul.mubr.f32.gmra.mrb[0].mxu0 %v4171
        %v4383 = vpop.f32.mrb[0].mxu0
        %v4384 = vadd.f32 %v4274, %v4383
        %v4385 = vpop.f32.mrb[0].mxu0
        %4386 = vmatprep.mubr.f32.mxu0 0.0
        %4387 = vmatmul.mubr.f32.gmra.mrb[0].mxu0 %v4174
        %v4388 = vpop.f32.mrb[0].mxu0
        %v4389 = vadd.f32 %v4279, %v4388
        %v4390 = vpop.f32.mrb[0].mxu0
        %4391 = vmatprep.mubr.f32.mxu0 0.0
        %4392 = vmatmul.mubr.f32.gmra.mrb[0].mxu0 %v4177
        %v4393 = vpop.f32.mrb[0].mxu0
        %v4394 = vadd.f32 %v4284, %v4393
        %v4395 = vpop.f32.mrb[0].mxu0
        %4396 = vmatprep.mubr.f32.mxu0 0.0
        %4397 = vmatmul.mubr.f32.gmra.mrb[0].mxu0 %v4180
        %v4398 = vpop.f32.mrb[0].mxu0
        %v4399 = vadd.f32 %v4289, %v4398
        %v4400 = vpop.f32.mrb[0].mxu0
        %4401 = vdwg.mxu0
        %v4402 = vmul.f32 %v4359, %v3010
        %v4403 = vmul.f32 %v4364, %v3012
        %v4404 = vmul.f32 %v4369, %v3014
        %v4405 = vmul.f32 %v4374, %v3016
        %v4406 = vmul.f32 %v4379, %v3018
        %v4407 = vmul.f32 %v4384, %v3020
        %v4408 = vmul.f32 %v4389, %v3022
        %v4409 = vmul.f32 %v4394, %v3024
        %v4410 = vmul.f32 %v4399, %v3026
        %4412 = vset.pattern.permute.xlu0 0
        %4413 = vperm.xlu0 %4412, %v4402
        %v4414 = vpop.permute.xlu0 %4413
        %4417 = vset.pattern.permute.xlu0 0
        %4418 = vperm.xlu0 %4417, %v4403
        %v4419 = vpop.permute.xlu0 %4418
        %4422 = vset.pattern.permute.xlu0 0
        %4423 = vperm.xlu0 %4422, %v4404
        %v4424 = vpop.permute.xlu0 %4423
        %4427 = vset.pattern.permute.xlu0 0
        %4428 = vperm.xlu0 %4427, %v4405
        %v4429 = vpop.permute.xlu0 %4428
        %4432 = vset.pattern.permute.xlu0 0
        %4433 = vperm.xlu0 %4432, %v4406
        %v4434 = vpop.permute.xlu0 %4433
        %4437 = vset.pattern.permute.xlu0 0
        %4438 = vperm.xlu0 %4437, %v4407
        %v4439 = vpop.permute.xlu0 %4438
        %4442 = vset.pattern.permute.xlu0 0
        %4443 = vperm.xlu0 %4442, %v4408
        %v4444 = vpop.permute.xlu0 %4443
        %4447 = vset.pattern.permute.xlu0 0
        %4448 = vperm.xlu0 %4447, %v4409
        %v4449 = vpop.permute.xlu0 %4448
        %4452 = vset.pattern.permute.xlu0 0
        %4453 = vperm.xlu0 %4452, %v4410
        %v4454 = vpop.permute.xlu0 %4453
        %v4456 = vlaneseq
        %v4457 = vshrl.u32 %v4456, 7
        %v4458 = vsub.s32 2, %v4457
        %v4459 = vrot.slane %v1346, %v4458
        %v4460 = vmul.f32 %v4414, %v4459
        %v4461 = vmul.f32 %v4419, %v4459
        %v4462 = vmul.f32 %v4424, %v4459
        %v4463 = vmul.f32 %v4429, %v4459
        %v4464 = vmul.f32 %v4434, %v4459
        %v4465 = vmul.f32 %v4439, %v4459
        %v4466 = vmul.f32 %v4444, %v4459
        %v4467 = vmul.f32 %v4449, %v4459
        %v4468 = vmul.f32 %v4454, %v4459
        %v4469 = vadd.f32 %v4119, %v4460
        %v4470 = vadd.f32 %v4120, %v4461
        %v4471 = vadd.f32 %v4121, %v4462
        %v4472 = vadd.f32 %v4122, %v4463
        %v4473 = vadd.f32 %v4123, %v4464
        %v4474 = vadd.f32 %v4124, %v4465
        %v4475 = vadd.f32 %v4125, %v4466
        %v4476 = vadd.f32 %v4126, %v4467
        %v4477 = vadd.f32 %v4127, %v4468
        %v4478 = vmul.f32 %v2705, %v1644
        %v4479 = vmul.f32 %v2707, %v1645
        %v4480 = vmul.f32 %v2709, %v1646
        %v4481 = vmul.f32 %v2711, %v1647
        %v4482 = vmul.f32 %v2713, %v1648
        %v4483 = vmul.f32 %v2715, %v1649
        %v4484 = vmul.f32 %v2717, %v1650
        %v4485 = vmul.f32 %v2719, %v1651
        %v4486 = vmul.f32 %v2721, %v1652
        %v4487 = vmul.f32 %v2723, %v1653
        %v4488 = vmul.f32 %v2725, %v1654
        %v4489 = vmul.f32 %v2727, %v1655
        %v4490 = vmul.f32 %v2729, %v1656
        %v4491 = vmul.f32 %v2731, %v1657
        %v4492 = vmul.f32 %v2733, %v1658
        %v4493 = vmul.f32 %v2735, %v1659
        %v4494 = vmul.f32 %v2737, %v1660
        %v4495 = vmul.f32 %v2739, %v1661
        %v4496 = vmul.f32 %v2741, %v1662
        %v4497 = vmul.f32 %v2743, %v1663
        %v4498 = vmul.f32 %v2745, %v1664
        %v4499 = vmul.f32 %v2747, %v1665
        %v4500 = vmul.f32 %v2749, %v1666
        %v4501 = vmul.f32 %v2751, %v1667
        %v4502 = vmul.f32 %v2753, %v1668
        %v4503 = vmul.f32 %v2755, %v1669
        %v4504 = vmul.f32 %v2757, %v1670
        %v4506 = vsel %vm2632, %v4480, 0
        %v4509 = vsel %vm2632, %v4483, 0
        %v4512 = vsel %vm2632, %v4486, 0
        %v4515 = vsel %vm2632, %v4489, 0
        %v4518 = vsel %vm2632, %v4492, 0
        %v4521 = vsel %vm2632, %v4495, 0
        %v4524 = vsel %vm2632, %v4498, 0
        %v4527 = vsel %vm2632, %v4501, 0
        %v4530 = vsel %vm2632, %v4504, 0
        %4532 = vmatprep.subr.mxu0 0.0
        %4533 = vmatpush1.msra.mxu0 1.0
        %4534 = vmatprep.subr.mxu0 0.0
        %4535 = vmatpush1.msra.mxu0 1.0
        %4536 = vmatprep.subr.mxu0 0.0
        %4537 = vmatpush1.msra.mxu0 1.0
        %4538 = vmatprep.subr.mxu0 0.0
        %4539 = vmatpush1.msra.mxu0 1.0
        %4540 = vmatprep.subr.mxu0 0.0
        %4541 = vmatpush1.msra.mxu0 1.0
        %4542 = vmatprep.subr.mxu0 0.0
        %4543 = vmatpush1.msra.mxu0 1.0
        %4544 = vmatprep.subr.mxu0 0.0
        %4545 = vmatpush1.msra.mxu0 1.0
        %4546 = vmatprep.subr.mxu0 0.0
        %4547 = vmatpush1.msra.mxu0 1.0
        %4548 = vmatprep.subr.mxu0 0.0
        %4549 = vmatpush1.msra.mxu0 1.0
        %4550 = vmatprep.subr.mxu0 0.0
        %4551 = vmatpush1.msra.mxu0 1.0
        %4552 = vmatprep.subr.mxu0 0.0
        %4553 = vmatpush1.msra.mxu0 1.0
        %4554 = vmatprep.subr.mxu0 0.0
        %4555 = vmatpush1.msra.mxu0 1.0
        %4556 = vmatprep.subr.mxu0 0.0
        %4557 = vmatpush1.msra.mxu0 1.0
        %4558 = vmatprep.subr.mxu0 0.0
        %4559 = vmatpush1.msra.mxu0 1.0
        %4560 = vmatprep.subr.mxu0 0.0
        %4561 = vmatpush1.msra.mxu0 1.0
        %4562 = vmatprep.subr.mxu0 0.0
        %4563 = vmatpush1.msra.mxu0 1.0
        %4564 = vmatprep.subr.mxu0 0.0
        %4565 = vmatpush1.msra.mxu0 1.0
        %4566 = vmatprep.subr.mxu0 0.0
        %4567 = vmatpush1.msra.mxu0 1.0
        %4568 = vmatprep.subr.mxu0 0.0
        %4569 = vmatpush1.msra.mxu0 1.0
        %4570 = vmatprep.subr.mxu0 0.0
        %4571 = vmatpush1.msra.mxu0 1.0
        %4572 = vmatprep.subr.mxu0 0.0
        %4573 = vmatpush1.msra.mxu0 1.0
        %4574 = vmatprep.subr.mxu0 0.0
        %4575 = vmatpush1.msra.mxu0 1.0
        %4576 = vmatprep.subr.mxu0 0.0
        %4577 = vmatpush1.msra.mxu0 1.0
        %4578 = vmatprep.subr.mxu0 0.0
        %4579 = vmatpush1.msra.mxu0 1.0
        %4580 = vmatprep.subr.mxu0 0.0
        %4581 = vmatpush1.msra.mxu0 1.0
        %4582 = vmatprep.subr.mxu0 0.0
        %4583 = vmatpush1.msra.mxu0 1.0
        %4584 = vmatprep.subr.mxu0 0.0
        %4585 = vmatpush1.msra.mxu0 1.0
        %4586 = vmatprep.subr.mxu0 0.0
        %4587 = vmatpush1.msra.mxu0 1.0
        %4588 = vmatprep.subr.mxu0 0.0
        %4589 = vmatpush1.msra.mxu0 1.0
        %4590 = vmatprep.subr.mxu0 0.0
        %4591 = vmatpush1.msra.mxu0 1.0
        %4592 = vmatprep.subr.mxu0 0.0
        %4593 = vmatpush1.msra.mxu0 1.0
        %4594 = vmatprep.subr.mxu0 0.0
        %4595 = vmatpush1.msra.mxu0 1.0
        %4596 = vmatprep.mubr.f32.mxu0 %v4479
        %4597 = vmatmul.mubr.f32.gmra.mrb[0].mxu0 %v4478
        %v4598 = vpop.f32.mrb[0].mxu0
        %v4599 = vadd.f32 0.0, %v4598
        %v4600 = vpop.f32.mrb[0].mxu0
        %4601 = vmatprep.mubr.f32.mxu0 %v4482
        %4602 = vmatmul.mubr.f32.gmra.mrb[0].mxu0 %v4481
        %v4603 = vpop.f32.mrb[0].mxu0
        %v4604 = vadd.f32 0.0, %v4603
        %v4605 = vpop.f32.mrb[0].mxu0
        %4606 = vmatprep.mubr.f32.mxu0 %v4485
        %4607 = vmatmul.mubr.f32.gmra.mrb[0].mxu0 %v4484
        %v4608 = vpop.f32.mrb[0].mxu0
        %v4609 = vadd.f32 0.0, %v4608
        %v4610 = vpop.f32.mrb[0].mxu0
        %4611 = vmatprep.mubr.f32.mxu0 %v4488
        %4612 = vmatmul.mubr.f32.gmra.mrb[0].mxu0 %v4487
        %v4613 = vpop.f32.mrb[0].mxu0
        %v4614 = vadd.f32 0.0, %v4613
        %v4615 = vpop.f32.mrb[0].mxu0
        %4616 = vmatprep.mubr.f32.mxu0 %v4491
        %4617 = vmatmul.mubr.f32.gmra.mrb[0].mxu0 %v4490
        %v4618 = vpop.f32.mrb[0].mxu0
        %v4619 = vadd.f32 0.0, %v4618
        %v4620 = vpop.f32.mrb[0].mxu0
        %4621 = vmatprep.mubr.f32.mxu0 %v4494
        %4622 = vmatmul.mubr.f32.gmra.mrb[0].mxu0 %v4493
        %v4623 = vpop.f32.mrb[0].mxu0
        %v4624 = vadd.f32 0.0, %v4623
        %v4625 = vpop.f32.mrb[0].mxu0
        %4626 = vmatprep.mubr.f32.mxu0 %v4497
        %4627 = vmatmul.mubr.f32.gmra.mrb[0].mxu0 %v4496
        %v4628 = vpop.f32.mrb[0].mxu0
        %v4629 = vadd.f32 0.0, %v4628
        %v4630 = vpop.f32.mrb[0].mxu0
        %4631 = vmatprep.mubr.f32.mxu0 %v4500
        %4632 = vmatmul.mubr.f32.gmra.mrb[0].mxu0 %v4499
        %v4633 = vpop.f32.mrb[0].mxu0
        %v4634 = vadd.f32 0.0, %v4633
        %v4635 = vpop.f32.mrb[0].mxu0
        %4636 = vmatprep.mubr.f32.mxu0 %v4503
        %4637 = vmatmul.mubr.f32.gmra.mrb[0].mxu0 %v4502
        %v4638 = vpop.f32.mrb[0].mxu0
        %v4639 = vadd.f32 0.0, %v4638
        %v4640 = vpop.f32.mrb[0].mxu0
        %4641 = vdwg.mxu0
        %4642 = vmatprep.subr.mxu0 0.0
        %4643 = vmatpush1.msra.mxu0 1.0
        %4644 = vmatprep.subr.mxu0 0.0
        %4645 = vmatpush1.msra.mxu0 1.0
        %4646 = vmatprep.subr.mxu0 0.0
        %4647 = vmatpush1.msra.mxu0 1.0
        %4648 = vmatprep.subr.mxu0 0.0
        %4649 = vmatpush1.msra.mxu0 1.0
        %4650 = vmatprep.subr.mxu0 0.0
        %4651 = vmatpush1.msra.mxu0 1.0
        %4652 = vmatprep.subr.mxu0 0.0
        %4653 = vmatpush1.msra.mxu0 1.0
        %4654 = vmatprep.subr.mxu0 0.0
        %4655 = vmatpush1.msra.mxu0 1.0
        %4656 = vmatprep.subr.mxu0 0.0
        %4657 = vmatpush1.msra.mxu0 1.0
        %4658 = vmatprep.subr.mxu0 0.0
        %4659 = vmatpush1.msra.mxu0 1.0
        %4660 = vmatprep.subr.mxu0 0.0
        %4661 = vmatpush1.msra.mxu0 %v2787
        %4662 = vmatprep.subr.mxu0 0.0
        %4663 = vmatpush1.msra.mxu0 0.0
        %4664 = vmatprep.subr.mxu0 0.0
        %4665 = vmatpush1.msra.mxu0 0.0
        %4666 = vmatprep.subr.mxu0 0.0
        %4667 = vmatpush1.msra.mxu0 0.0
        %4668 = vmatprep.subr.mxu0 0.0
        %4669 = vmatpush1.msra.mxu0 0.0
        %4670 = vmatprep.subr.mxu0 0.0
        %4671 = vmatpush1.msra.mxu0 0.0
        %4672 = vmatprep.subr.mxu0 0.0
        %4673 = vmatpush1.msra.mxu0 0.0
        %4674 = vmatprep.subr.mxu0 0.0
        %4675 = vmatpush1.msra.mxu0 0.0
        %4676 = vmatprep.subr.mxu0 0.0
        %4677 = vmatpush1.msra.mxu0 0.0
        %4678 = vmatprep.subr.mxu0 0.0
        %4679 = vmatpush1.msra.mxu0 0.0
        %4680 = vmatprep.subr.mxu0 0.0
        %4681 = vmatpush1.msra.mxu0 0.0
        %4682 = vmatprep.subr.mxu0 0.0
        %4683 = vmatpush1.msra.mxu0 0.0
        %4684 = vmatprep.subr.mxu0 0.0
        %4685 = vmatpush1.msra.mxu0 0.0
        %4686 = vmatprep.subr.mxu0 0.0
        %4687 = vmatpush1.msra.mxu0 0.0
        %4688 = vmatprep.subr.mxu0 0.0
        %4689 = vmatpush1.msra.mxu0 0.0
        %4690 = vmatprep.subr.mxu0 0.0
        %4691 = vmatpush1.msra.mxu0 0.0
        %4692 = vmatprep.subr.mxu0 0.0
        %4693 = vmatpush1.msra.mxu0 0.0
        %4694 = vmatprep.subr.mxu0 0.0
        %4695 = vmatpush1.msra.mxu0 0.0
        %4696 = vmatprep.subr.mxu0 0.0
        %4697 = vmatpush1.msra.mxu0 0.0
        %4698 = vmatprep.subr.mxu0 0.0
        %4699 = vmatpush1.msra.mxu0 0.0
        %4700 = vmatprep.subr.mxu0 0.0
        %4701 = vmatpush1.msra.mxu0 0.0
        %4702 = vmatprep.subr.mxu0 0.0
        %4703 = vmatpush1.msra.mxu0 0.0
        %4704 = vmatprep.subr.mxu0 0.0
        %4705 = vmatpush1.msra.mxu0 0.0
        %4706 = vmatprep.mubr.f32.mxu0 0.0
        %4707 = vmatmul.mubr.f32.gmra.mrb[0].mxu0 %v4506
        %v4708 = vpop.f32.mrb[0].mxu0
        %v4709 = vadd.f32 %v4599, %v4708
        %v4710 = vpop.f32.mrb[0].mxu0
        %4711 = vmatprep.mubr.f32.mxu0 0.0
        %4712 = vmatmul.mubr.f32.gmra.mrb[0].mxu0 %v4509
        %v4713 = vpop.f32.mrb[0].mxu0
        %v4714 = vadd.f32 %v4604, %v4713
        %v4715 = vpop.f32.mrb[0].mxu0
        %4716 = vmatprep.mubr.f32.mxu0 0.0
        %4717 = vmatmul.mubr.f32.gmra.mrb[0].mxu0 %v4512
        %v4718 = vpop.f32.mrb[0].mxu0
        %v4719 = vadd.f32 %v4609, %v4718
        %v4720 = vpop.f32.mrb[0].mxu0
        %4721 = vmatprep.mubr.f32.mxu0 0.0
        %4722 = vmatmul.mubr.f32.gmra.mrb[0].mxu0 %v4515
        %v4723 = vpop.f32.mrb[0].mxu0
        %v4724 = vadd.f32 %v4614, %v4723
        %v4725 = vpop.f32.mrb[0].mxu0
        %4726 = vmatprep.mubr.f32.mxu0 0.0
        %4727 = vmatmul.mubr.f32.gmra.mrb[0].mxu0 %v4518
        %v4728 = vpop.f32.mrb[0].mxu0
        %v4729 = vadd.f32 %v4619, %v4728
        %v4730 = vpop.f32.mrb[0].mxu0
        %4731 = vmatprep.mubr.f32.mxu0 0.0
        %4732 = vmatmul.mubr.f32.gmra.mrb[0].mxu0 %v4521
        %v4733 = vpop.f32.mrb[0].mxu0
        %v4734 = vadd.f32 %v4624, %v4733
        %v4735 = vpop.f32.mrb[0].mxu0
        %4736 = vmatprep.mubr.f32.mxu0 0.0
        %4737 = vmatmul.mubr.f32.gmra.mrb[0].mxu0 %v4524
        %v4738 = vpop.f32.mrb[0].mxu0
        %v4739 = vadd.f32 %v4629, %v4738
        %v4740 = vpop.f32.mrb[0].mxu0
        %4741 = vmatprep.mubr.f32.mxu0 0.0
        %4742 = vmatmul.mubr.f32.gmra.mrb[0].mxu0 %v4527
        %v4743 = vpop.f32.mrb[0].mxu0
        %v4744 = vadd.f32 %v4634, %v4743
        %v4745 = vpop.f32.mrb[0].mxu0
        %4746 = vmatprep.mubr.f32.mxu0 0.0
        %4747 = vmatmul.mubr.f32.gmra.mrb[0].mxu0 %v4530
        %v4748 = vpop.f32.mrb[0].mxu0
        %v4749 = vadd.f32 %v4639, %v4748
        %v4750 = vpop.f32.mrb[0].mxu0
        %4751 = vdwg.mxu0
        %v4752 = vmul.f32 %v4709, %v3010
        %v4753 = vmul.f32 %v4714, %v3012
        %v4754 = vmul.f32 %v4719, %v3014
        %v4755 = vmul.f32 %v4724, %v3016
        %v4756 = vmul.f32 %v4729, %v3018
        %v4757 = vmul.f32 %v4734, %v3020
        %v4758 = vmul.f32 %v4739, %v3022
        %v4759 = vmul.f32 %v4744, %v3024
        %v4760 = vmul.f32 %v4749, %v3026
        %4762 = vset.pattern.permute.xlu0 0
        %4763 = vperm.xlu0 %4762, %v4752
        %v4764 = vpop.permute.xlu0 %4763
        %4767 = vset.pattern.permute.xlu0 0
        %4768 = vperm.xlu0 %4767, %v4753
        %v4769 = vpop.permute.xlu0 %4768
        %4772 = vset.pattern.permute.xlu0 0
        %4773 = vperm.xlu0 %4772, %v4754
        %v4774 = vpop.permute.xlu0 %4773
        %4777 = vset.pattern.permute.xlu0 0
        %4778 = vperm.xlu0 %4777, %v4755
        %v4779 = vpop.permute.xlu0 %4778
        %4782 = vset.pattern.permute.xlu0 0
        %4783 = vperm.xlu0 %4782, %v4756
        %v4784 = vpop.permute.xlu0 %4783
        %4787 = vset.pattern.permute.xlu0 0
        %4788 = vperm.xlu0 %4787, %v4757
        %v4789 = vpop.permute.xlu0 %4788
        %4792 = vset.pattern.permute.xlu0 0
        %4793 = vperm.xlu0 %4792, %v4758
        %v4794 = vpop.permute.xlu0 %4793
        %4797 = vset.pattern.permute.xlu0 0
        %4798 = vperm.xlu0 %4797, %v4759
        %v4799 = vpop.permute.xlu0 %4798
        %4802 = vset.pattern.permute.xlu0 0
        %4803 = vperm.xlu0 %4802, %v4760
        %v4804 = vpop.permute.xlu0 %4803
        %v4806 = vlaneseq
        %v4807 = vshrl.u32 %v4806, 7
        %v4808 = vsub.s32 3, %v4807
        %v4809 = vrot.slane %v1346, %v4808
        %v4810 = vmul.f32 %v4764, %v4809
        %v4811 = vmul.f32 %v4769, %v4809
        %v4812 = vmul.f32 %v4774, %v4809
        %v4813 = vmul.f32 %v4779, %v4809
        %v4814 = vmul.f32 %v4784, %v4809
        %v4815 = vmul.f32 %v4789, %v4809
        %v4816 = vmul.f32 %v4794, %v4809
        %v4817 = vmul.f32 %v4799, %v4809
        %v4818 = vmul.f32 %v4804, %v4809
        %v4819 = vadd.f32 %v4469, %v4810
        %v4820 = vadd.f32 %v4470, %v4811
        %v4821 = vadd.f32 %v4471, %v4812
        %v4822 = vadd.f32 %v4472, %v4813
        %v4823 = vadd.f32 %v4473, %v4814
        %v4824 = vadd.f32 %v4474, %v4815
        %v4825 = vadd.f32 %v4475, %v4816
        %v4826 = vadd.f32 %v4476, %v4817
        %v4827 = vadd.f32 %v4477, %v4818
        %v4828 = vmul.f32 %v2705, %v1690
        %v4829 = vmul.f32 %v2707, %v1691
        %v4830 = vmul.f32 %v2709, %v1692
        %v4831 = vmul.f32 %v2711, %v1693
        %v4832 = vmul.f32 %v2713, %v1694
        %v4833 = vmul.f32 %v2715, %v1695
        %v4834 = vmul.f32 %v2717, %v1696
        %v4835 = vmul.f32 %v2719, %v1697
        %v4836 = vmul.f32 %v2721, %v1698
        %v4837 = vmul.f32 %v2723, %v1699
        %v4838 = vmul.f32 %v2725, %v1700
        %v4839 = vmul.f32 %v2727, %v1701
        %v4840 = vmul.f32 %v2729, %v1702
        %v4841 = vmul.f32 %v2731, %v1703
        %v4842 = vmul.f32 %v2733, %v1704
        %v4843 = vmul.f32 %v2735, %v1705
        %v4844 = vmul.f32 %v2737, %v1706
        %v4845 = vmul.f32 %v2739, %v1707
        %v4846 = vmul.f32 %v2741, %v1708
        %v4847 = vmul.f32 %v2743, %v1709
        %v4848 = vmul.f32 %v2745, %v1710
        %v4849 = vmul.f32 %v2747, %v1711
        %v4850 = vmul.f32 %v2749, %v1712
        %v4851 = vmul.f32 %v2751, %v1713
        %v4852 = vmul.f32 %v2753, %v1714
        %v4853 = vmul.f32 %v2755, %v1715
        %v4854 = vmul.f32 %v2757, %v1716
        %v4856 = vsel %vm2632, %v4830, 0
        %v4859 = vsel %vm2632, %v4833, 0
        %v4862 = vsel %vm2632, %v4836, 0
        %v4865 = vsel %vm2632, %v4839, 0
        %v4868 = vsel %vm2632, %v4842, 0
        %v4871 = vsel %vm2632, %v4845, 0
        %v4874 = vsel %vm2632, %v4848, 0
        %v4877 = vsel %vm2632, %v4851, 0
        %v4880 = vsel %vm2632, %v4854, 0
        %4882 = vmatprep.subr.mxu0 0.0
        %4883 = vmatpush1.msra.mxu0 1.0
        %4884 = vmatprep.subr.mxu0 0.0
        %4885 = vmatpush1.msra.mxu0 1.0
        %4886 = vmatprep.subr.mxu0 0.0
        %4887 = vmatpush1.msra.mxu0 1.0
        %4888 = vmatprep.subr.mxu0 0.0
        %4889 = vmatpush1.msra.mxu0 1.0
        %4890 = vmatprep.subr.mxu0 0.0
        %4891 = vmatpush1.msra.mxu0 1.0
        %4892 = vmatprep.subr.mxu0 0.0
        %4893 = vmatpush1.msra.mxu0 1.0
        %4894 = vmatprep.subr.mxu0 0.0
        %4895 = vmatpush1.msra.mxu0 1.0
        %4896 = vmatprep.subr.mxu0 0.0
        %4897 = vmatpush1.msra.mxu0 1.0
        %4898 = vmatprep.subr.mxu0 0.0
        %4899 = vmatpush1.msra.mxu0 1.0
        %4900 = vmatprep.subr.mxu0 0.0
        %4901 = vmatpush1.msra.mxu0 1.0
        %4902 = vmatprep.subr.mxu0 0.0
        %4903 = vmatpush1.msra.mxu0 1.0
        %4904 = vmatprep.subr.mxu0 0.0
        %4905 = vmatpush1.msra.mxu0 1.0
        %4906 = vmatprep.subr.mxu0 0.0
        %4907 = vmatpush1.msra.mxu0 1.0
        %4908 = vmatprep.subr.mxu0 0.0
        %4909 = vmatpush1.msra.mxu0 1.0
        %4910 = vmatprep.subr.mxu0 0.0
        %4911 = vmatpush1.msra.mxu0 1.0
        %4912 = vmatprep.subr.mxu0 0.0
        %4913 = vmatpush1.msra.mxu0 1.0
        %4914 = vmatprep.subr.mxu0 0.0
        %4915 = vmatpush1.msra.mxu0 1.0
        %4916 = vmatprep.subr.mxu0 0.0
        %4917 = vmatpush1.msra.mxu0 1.0
        %4918 = vmatprep.subr.mxu0 0.0
        %4919 = vmatpush1.msra.mxu0 1.0
        %4920 = vmatprep.subr.mxu0 0.0
        %4921 = vmatpush1.msra.mxu0 1.0
        %4922 = vmatprep.subr.mxu0 0.0
        %4923 = vmatpush1.msra.mxu0 1.0
        %4924 = vmatprep.subr.mxu0 0.0
        %4925 = vmatpush1.msra.mxu0 1.0
        %4926 = vmatprep.subr.mxu0 0.0
        %4927 = vmatpush1.msra.mxu0 1.0
        %4928 = vmatprep.subr.mxu0 0.0
        %4929 = vmatpush1.msra.mxu0 1.0
        %4930 = vmatprep.subr.mxu0 0.0
        %4931 = vmatpush1.msra.mxu0 1.0
        %4932 = vmatprep.subr.mxu0 0.0
        %4933 = vmatpush1.msra.mxu0 1.0
        %4934 = vmatprep.subr.mxu0 0.0
        %4935 = vmatpush1.msra.mxu0 1.0
        %4936 = vmatprep.subr.mxu0 0.0
        %4937 = vmatpush1.msra.mxu0 1.0
        %4938 = vmatprep.subr.mxu0 0.0
        %4939 = vmatpush1.msra.mxu0 1.0
        %4940 = vmatprep.subr.mxu0 0.0
        %4941 = vmatpush1.msra.mxu0 1.0
        %4942 = vmatprep.subr.mxu0 0.0
        %4943 = vmatpush1.msra.mxu0 1.0
        %4944 = vmatprep.subr.mxu0 0.0
        %4945 = vmatpush1.msra.mxu0 1.0
        %4946 = vmatprep.mubr.f32.mxu0 %v4829
        %4947 = vmatmul.mubr.f32.gmra.mrb[0].mxu0 %v4828
        %v4948 = vpop.f32.mrb[0].mxu0
        %v4949 = vadd.f32 0.0, %v4948
        %v4950 = vpop.f32.mrb[0].mxu0
        %4951 = vmatprep.mubr.f32.mxu0 %v4832
        %4952 = vmatmul.mubr.f32.gmra.mrb[0].mxu0 %v4831
        %v4953 = vpop.f32.mrb[0].mxu0
        %v4954 = vadd.f32 0.0, %v4953
        %v4955 = vpop.f32.mrb[0].mxu0
        %4956 = vmatprep.mubr.f32.mxu0 %v4835
        %4957 = vmatmul.mubr.f32.gmra.mrb[0].mxu0 %v4834
        %v4958 = vpop.f32.mrb[0].mxu0
        %v4959 = vadd.f32 0.0, %v4958
        %v4960 = vpop.f32.mrb[0].mxu0
        %4961 = vmatprep.mubr.f32.mxu0 %v4838
        %4962 = vmatmul.mubr.f32.gmra.mrb[0].mxu0 %v4837
        %v4963 = vpop.f32.mrb[0].mxu0
        %v4964 = vadd.f32 0.0, %v4963
        %v4965 = vpop.f32.mrb[0].mxu0
        %4966 = vmatprep.mubr.f32.mxu0 %v4841
        %4967 = vmatmul.mubr.f32.gmra.mrb[0].mxu0 %v4840
        %v4968 = vpop.f32.mrb[0].mxu0
        %v4969 = vadd.f32 0.0, %v4968
        %v4970 = vpop.f32.mrb[0].mxu0
        %4971 = vmatprep.mubr.f32.mxu0 %v4844
        %4972 = vmatmul.mubr.f32.gmra.mrb[0].mxu0 %v4843
        %v4973 = vpop.f32.mrb[0].mxu0
        %v4974 = vadd.f32 0.0, %v4973
        %v4975 = vpop.f32.mrb[0].mxu0
        %4976 = vmatprep.mubr.f32.mxu0 %v4847
        %4977 = vmatmul.mubr.f32.gmra.mrb[0].mxu0 %v4846
        %v4978 = vpop.f32.mrb[0].mxu0
        %v4979 = vadd.f32 0.0, %v4978
        %v4980 = vpop.f32.mrb[0].mxu0
        %4981 = vmatprep.mubr.f32.mxu0 %v4850
        %4982 = vmatmul.mubr.f32.gmra.mrb[0].mxu0 %v4849
        %v4983 = vpop.f32.mrb[0].mxu0
        %v4984 = vadd.f32 0.0, %v4983
        %v4985 = vpop.f32.mrb[0].mxu0
        %4986 = vmatprep.mubr.f32.mxu0 %v4853
        %4987 = vmatmul.mubr.f32.gmra.mrb[0].mxu0 %v4852
        %v4988 = vpop.f32.mrb[0].mxu0
        %v4989 = vadd.f32 0.0, %v4988
        %v4990 = vpop.f32.mrb[0].mxu0
        %4991 = vdwg.mxu0
        %4992 = vmatprep.subr.mxu0 0.0
        %4993 = vmatpush1.msra.mxu0 1.0
        %4994 = vmatprep.subr.mxu0 0.0
        %4995 = vmatpush1.msra.mxu0 1.0
        %4996 = vmatprep.subr.mxu0 0.0
        %4997 = vmatpush1.msra.mxu0 1.0
        %4998 = vmatprep.subr.mxu0 0.0
        %4999 = vmatpush1.msra.mxu0 1.0
        %5000 = vmatprep.subr.mxu0 0.0
        %5001 = vmatpush1.msra.mxu0 1.0
        %5002 = vmatprep.subr.mxu0 0.0
        %5003 = vmatpush1.msra.mxu0 1.0
        %5004 = vmatprep.subr.mxu0 0.0
        %5005 = vmatpush1.msra.mxu0 1.0
        %5006 = vmatprep.subr.mxu0 0.0
        %5007 = vmatpush1.msra.mxu0 1.0
        %5008 = vmatprep.subr.mxu0 0.0
        %5009 = vmatpush1.msra.mxu0 1.0
        %5010 = vmatprep.subr.mxu0 0.0
        %5011 = vmatpush1.msra.mxu0 %v2787
        %5012 = vmatprep.subr.mxu0 0.0
        %5013 = vmatpush1.msra.mxu0 0.0
        %5014 = vmatprep.subr.mxu0 0.0
        %5015 = vmatpush1.msra.mxu0 0.0
        %5016 = vmatprep.subr.mxu0 0.0
        %5017 = vmatpush1.msra.mxu0 0.0
        %5018 = vmatprep.subr.mxu0 0.0
        %5019 = vmatpush1.msra.mxu0 0.0
        %5020 = vmatprep.subr.mxu0 0.0
        %5021 = vmatpush1.msra.mxu0 0.0
        %5022 = vmatprep.subr.mxu0 0.0
        %5023 = vmatpush1.msra.mxu0 0.0
        %5024 = vmatprep.subr.mxu0 0.0
        %5025 = vmatpush1.msra.mxu0 0.0
        %5026 = vmatprep.subr.mxu0 0.0
        %5027 = vmatpush1.msra.mxu0 0.0
        %5028 = vmatprep.subr.mxu0 0.0
        %5029 = vmatpush1.msra.mxu0 0.0
        %5030 = vmatprep.subr.mxu0 0.0
        %5031 = vmatpush1.msra.mxu0 0.0
        %5032 = vmatprep.subr.mxu0 0.0
        %5033 = vmatpush1.msra.mxu0 0.0
        %5034 = vmatprep.subr.mxu0 0.0
        %5035 = vmatpush1.msra.mxu0 0.0
        %5036 = vmatprep.subr.mxu0 0.0
        %5037 = vmatpush1.msra.mxu0 0.0
        %5038 = vmatprep.subr.mxu0 0.0
        %5039 = vmatpush1.msra.mxu0 0.0
        %5040 = vmatprep.subr.mxu0 0.0
        %5041 = vmatpush1.msra.mxu0 0.0
        %5042 = vmatprep.subr.mxu0 0.0
        %5043 = vmatpush1.msra.mxu0 0.0
        %5044 = vmatprep.subr.mxu0 0.0
        %5045 = vmatpush1.msra.mxu0 0.0
        %5046 = vmatprep.subr.mxu0 0.0
        %5047 = vmatpush1.msra.mxu0 0.0
        %5048 = vmatprep.subr.mxu0 0.0
        %5049 = vmatpush1.msra.mxu0 0.0
        %5050 = vmatprep.subr.mxu0 0.0
        %5051 = vmatpush1.msra.mxu0 0.0
        %5052 = vmatprep.subr.mxu0 0.0
        %5053 = vmatpush1.msra.mxu0 0.0
        %5054 = vmatprep.subr.mxu0 0.0
        %5055 = vmatpush1.msra.mxu0 0.0
        %5056 = vmatprep.mubr.f32.mxu0 0.0
        %5057 = vmatmul.mubr.f32.gmra.mrb[0].mxu0 %v4856
        %v5058 = vpop.f32.mrb[0].mxu0
        %v5059 = vadd.f32 %v4949, %v5058
        %v5060 = vpop.f32.mrb[0].mxu0
        %5061 = vmatprep.mubr.f32.mxu0 0.0
        %5062 = vmatmul.mubr.f32.gmra.mrb[0].mxu0 %v4859
        %v5063 = vpop.f32.mrb[0].mxu0
        %v5064 = vadd.f32 %v4954, %v5063
        %v5065 = vpop.f32.mrb[0].mxu0
        %5066 = vmatprep.mubr.f32.mxu0 0.0
        %5067 = vmatmul.mubr.f32.gmra.mrb[0].mxu0 %v4862
        %v5068 = vpop.f32.mrb[0].mxu0
        %v5069 = vadd.f32 %v4959, %v5068
        %v5070 = vpop.f32.mrb[0].mxu0
        %5071 = vmatprep.mubr.f32.mxu0 0.0
        %5072 = vmatmul.mubr.f32.gmra.mrb[0].mxu0 %v4865
        %v5073 = vpop.f32.mrb[0].mxu0
        %v5074 = vadd.f32 %v4964, %v5073
        %v5075 = vpop.f32.mrb[0].mxu0
        %5076 = vmatprep.mubr.f32.mxu0 0.0
        %5077 = vmatmul.mubr.f32.gmra.mrb[0].mxu0 %v4868
        %v5078 = vpop.f32.mrb[0].mxu0
        %v5079 = vadd.f32 %v4969, %v5078
        %v5080 = vpop.f32.mrb[0].mxu0
        %5081 = vmatprep.mubr.f32.mxu0 0.0
        %5082 = vmatmul.mubr.f32.gmra.mrb[0].mxu0 %v4871
        %v5083 = vpop.f32.mrb[0].mxu0
        %v5084 = vadd.f32 %v4974, %v5083
        %v5085 = vpop.f32.mrb[0].mxu0
        %5086 = vmatprep.mubr.f32.mxu0 0.0
        %5087 = vmatmul.mubr.f32.gmra.mrb[0].mxu0 %v4874
        %v5088 = vpop.f32.mrb[0].mxu0
        %v5089 = vadd.f32 %v4979, %v5088
        %v5090 = vpop.f32.mrb[0].mxu0
        %5091 = vmatprep.mubr.f32.mxu0 0.0
        %5092 = vmatmul.mubr.f32.gmra.mrb[0].mxu0 %v4877
        %v5093 = vpop.f32.mrb[0].mxu0
        %v5094 = vadd.f32 %v4984, %v5093
        %v5095 = vpop.f32.mrb[0].mxu0
        %5096 = vmatprep.mubr.f32.mxu0 0.0
        %5097 = vmatmul.mubr.f32.gmra.mrb[0].mxu0 %v4880
        %v5098 = vpop.f32.mrb[0].mxu0
        %v5099 = vadd.f32 %v4989, %v5098
        %v5100 = vpop.f32.mrb[0].mxu0
        %5101 = vdwg.mxu0
        %v5102 = vmul.f32 %v5059, %v3010
        %v5103 = vmul.f32 %v5064, %v3012
        %v5104 = vmul.f32 %v5069, %v3014
        %v5105 = vmul.f32 %v5074, %v3016
        %v5106 = vmul.f32 %v5079, %v3018
        %v5107 = vmul.f32 %v5084, %v3020
        %v5108 = vmul.f32 %v5089, %v3022
        %v5109 = vmul.f32 %v5094, %v3024
        %v5110 = vmul.f32 %v5099, %v3026
        %5112 = vset.pattern.permute.xlu0 0
        %5113 = vperm.xlu0 %5112, %v5102
        %v5114 = vpop.permute.xlu0 %5113
        %5117 = vset.pattern.permute.xlu0 0
        %5118 = vperm.xlu0 %5117, %v5103
        %v5119 = vpop.permute.xlu0 %5118
        %5122 = vset.pattern.permute.xlu0 0
        %5123 = vperm.xlu0 %5122, %v5104
        %v5124 = vpop.permute.xlu0 %5123
        %5127 = vset.pattern.permute.xlu0 0
        %5128 = vperm.xlu0 %5127, %v5105
        %v5129 = vpop.permute.xlu0 %5128
        %5132 = vset.pattern.permute.xlu0 0
        %5133 = vperm.xlu0 %5132, %v5106
        %v5134 = vpop.permute.xlu0 %5133
        %5137 = vset.pattern.permute.xlu0 0
        %5138 = vperm.xlu0 %5137, %v5107
        %v5139 = vpop.permute.xlu0 %5138
        %5142 = vset.pattern.permute.xlu0 0
        %5143 = vperm.xlu0 %5142, %v5108
        %v5144 = vpop.permute.xlu0 %5143
        %5147 = vset.pattern.permute.xlu0 0
        %5148 = vperm.xlu0 %5147, %v5109
        %v5149 = vpop.permute.xlu0 %5148
        %5152 = vset.pattern.permute.xlu0 0
        %5153 = vperm.xlu0 %5152, %v5110
        %v5154 = vpop.permute.xlu0 %5153
        %v5156 = vlaneseq
        %v5157 = vshrl.u32 %v5156, 7
        %v5158 = vsub.s32 4, %v5157
        %v5159 = vrot.slane %v1346, %v5158
        %v5160 = vmul.f32 %v5114, %v5159
        %v5161 = vmul.f32 %v5119, %v5159
        %v5162 = vmul.f32 %v5124, %v5159
        %v5163 = vmul.f32 %v5129, %v5159
        %v5164 = vmul.f32 %v5134, %v5159
        %v5165 = vmul.f32 %v5139, %v5159
        %v5166 = vmul.f32 %v5144, %v5159
        %v5167 = vmul.f32 %v5149, %v5159
        %v5168 = vmul.f32 %v5154, %v5159
        %v5169 = vadd.f32 %v4819, %v5160
        %v5170 = vadd.f32 %v4820, %v5161
        %v5171 = vadd.f32 %v4821, %v5162
        %v5172 = vadd.f32 %v4822, %v5163
        %v5173 = vadd.f32 %v4823, %v5164
        %v5174 = vadd.f32 %v4824, %v5165
        %v5175 = vadd.f32 %v4825, %v5166
        %v5176 = vadd.f32 %v4826, %v5167
        %v5177 = vadd.f32 %v4827, %v5168
        %vm5178 = vcmp.gt.f32.partialorder %v2636, -1e+29
        %vm5179 = vcmp.gt.f32.partialorder %v2641, -1e+29
        %vm5180 = vcmp.gt.f32.partialorder %v2646, -1e+29
        %vm5181 = vcmp.gt.f32.partialorder %v2651, -1e+29
        %vm5182 = vcmp.gt.f32.partialorder %v2656, -1e+29
        %vm5183 = vcmp.gt.f32.partialorder %v2661, -1e+29
        %vm5184 = vcmp.gt.f32.partialorder %v2666, -1e+29
        %vm5185 = vcmp.gt.f32.partialorder %v2671, -1e+29
        %vm5186 = vcmp.gt.f32.partialorder %v2676, -1e+29
        %v5187 = vsel %vm5178, 1, 0
        %v5188 = vsel %vm5179, 1, 0
        %v5189 = vsel %vm5180, 1, 0
        %v5190 = vsel %vm5181, 1, 0
        %v5191 = vsel %vm5182, 1, 0
        %v5192 = vsel %vm5183, 1, 0
        %v5193 = vsel %vm5184, 1, 0
        %v5194 = vsel %vm5185, 1, 0
        %v5195 = vsel %vm5186, 1, 0
        %vm5196 = vcmp.eq.s32.totalorder %v5187, 1
        %vm5197 = vcmp.eq.s32.totalorder %v5188, 1
        %vm5198 = vcmp.eq.s32.totalorder %v5189, 1
        %vm5199 = vcmp.eq.s32.totalorder %v5190, 1
        %vm5200 = vcmp.eq.s32.totalorder %v5191, 1
        %vm5201 = vcmp.eq.s32.totalorder %v5192, 1
        %vm5202 = vcmp.eq.s32.totalorder %v5193, 1
        %vm5203 = vcmp.eq.s32.totalorder %v5194, 1
        %vm5204 = vcmp.eq.s32.totalorder %v5195, 1
        %v5205 = vsel %vm5196, %v5169, 0.0
        %v5206 = vsel %vm5197, %v5170, 0.0
        %v5207 = vsel %vm5198, %v5171, 0.0
        %v5208 = vsel %vm5199, %v5172, 0.0
        %v5209 = vsel %vm5200, %v5173, 0.0
        %v5210 = vsel %vm5201, %v5174, 0.0
        %v5211 = vsel %vm5202, %v5175, 0.0
        %v5212 = vsel %vm5203, %v5176, 0.0
        %v5213 = vsel %vm5204, %v5177, 0.0
        %5214 = vrot.lane.b32.xlu0 %v1303, 96
        %v5215 = vpop.permute.xlu0 %5214
        %5216 = vrot.lane.b32.xlu0 %v1308, 96
        %v5217 = vpop.permute.xlu0 %5216
        %5218 = vrot.lane.b32.xlu0 %v1313, 96
        %v5219 = vpop.permute.xlu0 %5218
        %5220 = vrot.lane.b32.xlu0 %v1318, 96
        %v5221 = vpop.permute.xlu0 %5220
        %5222 = vrot.lane.b32.xlu0 %v1323, 96
        %v5223 = vpop.permute.xlu0 %5222
        %5224 = vrot.lane.b32.xlu0 %v1328, 96
        %v5225 = vpop.permute.xlu0 %5224
        %5226 = vrot.lane.b32.xlu0 %v1333, 96
        %v5227 = vpop.permute.xlu0 %5226
        %5228 = vrot.lane.b32.xlu0 %v1338, 96
        %v5229 = vpop.permute.xlu0 %5228
        %5230 = vrot.lane.b32.xlu0 %v1343, 96
        %v5231 = vpop.permute.xlu0 %5230
        %v5241 = vadd.f32 %v5205, %v5215
        %v5242 = vadd.f32 %v5206, %v5217
        %v5243 = vadd.f32 %v5207, %v5219
        %v5244 = vadd.f32 %v5208, %v5221
        %v5245 = vadd.f32 %v5209, %v5223
        %v5246 = vadd.f32 %v5210, %v5225
        %v5247 = vadd.f32 %v5211, %v5227
        %v5248 = vadd.f32 %v5212, %v5229
        %v5249 = vadd.f32 %v5213, %v5231
        %v5250 = vmax.f32 %v5241, 0.0
        %v5251 = vmax.f32 %v5242, 0.0
        %v5252 = vmax.f32 %v5243, 0.0
        %v5253 = vmax.f32 %v5244, 0.0
        %v5254 = vmax.f32 %v5245, 0.0
        %v5255 = vmax.f32 %v5246, 0.0
        %v5256 = vmax.f32 %v5247, 0.0
        %v5257 = vmax.f32 %v5248, 0.0
        %v5258 = vmax.f32 %v5249, 0.0
        %v5268 = vcombine.high %v5250, %v5250
        %v5270 = vunpack.c.l.s4 1983009808
        %v5271 = vunpack.c.0.s8 %v5270
        %v5272 = vlaneseq
        %v5273 = vshrl.u32 %v5272, 7
        %v5274 = vsub.s32 %v5271, %v5273
        %v5275 = vrot.slane %v5250, %v5274
        %v5277 = vunpack.c.l.s4 1983009808
        %v5278 = vunpack.c.0.s8 %v5277
        %v5279 = vlaneseq
        %v5280 = vshrl.u32 %v5279, 7
        %v5281 = vsub.s32 %v5278, %v5280
        %v5282 = vrot.slane %v5268, %v5281
        %v5283 = vcombine.high %v5275, %v5275
        %v5284 = vcombine.high %v5282, %v5282
        %v5285 = vcombine.high %v5251, %v5251
        %v5287 = vunpack.c.l.s4 1983009808
        %v5288 = vunpack.c.0.s8 %v5287
        %v5289 = vlaneseq
        %v5290 = vshrl.u32 %v5289, 7
        %v5291 = vsub.s32 %v5288, %v5290
        %v5292 = vrot.slane %v5251, %v5291
        %v5294 = vunpack.c.l.s4 1983009808
        %v5295 = vunpack.c.0.s8 %v5294
        %v5296 = vlaneseq
        %v5297 = vshrl.u32 %v5296, 7
        %v5298 = vsub.s32 %v5295, %v5297
        %v5299 = vrot.slane %v5285, %v5298
        %v5300 = vcombine.high %v5292, %v5292
        %v5301 = vcombine.high %v5299, %v5299
        %v5302 = vcombine.high %v5252, %v5252
        %v5304 = vunpack.c.l.s4 1983009808
        %v5305 = vunpack.c.0.s8 %v5304
        %v5306 = vlaneseq
        %v5307 = vshrl.u32 %v5306, 7
        %v5308 = vsub.s32 %v5305, %v5307
        %v5309 = vrot.slane %v5252, %v5308
        %v5311 = vunpack.c.l.s4 1983009808
        %v5312 = vunpack.c.0.s8 %v5311
        %v5313 = vlaneseq
        %v5314 = vshrl.u32 %v5313, 7
        %v5315 = vsub.s32 %v5312, %v5314
        %v5316 = vrot.slane %v5302, %v5315
        %v5317 = vcombine.high %v5309, %v5309
        %v5318 = vcombine.high %v5316, %v5316
        %v5319 = vcombine.high %v5253, %v5253
        %v5321 = vunpack.c.l.s4 1983009808
        %v5322 = vunpack.c.0.s8 %v5321
        %v5323 = vlaneseq
        %v5324 = vshrl.u32 %v5323, 7
        %v5325 = vsub.s32 %v5322, %v5324
        %v5326 = vrot.slane %v5253, %v5325
        %v5328 = vunpack.c.l.s4 1983009808
        %v5329 = vunpack.c.0.s8 %v5328
        %v5330 = vlaneseq
        %v5331 = vshrl.u32 %v5330, 7
        %v5332 = vsub.s32 %v5329, %v5331
        %v5333 = vrot.slane %v5319, %v5332
        %v5334 = vcombine.high %v5326, %v5326
        %v5335 = vcombine.high %v5333, %v5333
        %v5336 = vcombine.high %v5254, %v5254
        %v5338 = vunpack.c.l.s4 1983009808
        %v5339 = vunpack.c.0.s8 %v5338
        %v5340 = vlaneseq
        %v5341 = vshrl.u32 %v5340, 7
        %v5342 = vsub.s32 %v5339, %v5341
        %v5343 = vrot.slane %v5254, %v5342
        %v5345 = vunpack.c.l.s4 1983009808
        %v5346 = vunpack.c.0.s8 %v5345
        %v5347 = vlaneseq
        %v5348 = vshrl.u32 %v5347, 7
        %v5349 = vsub.s32 %v5346, %v5348
        %v5350 = vrot.slane %v5336, %v5349
        %v5351 = vcombine.high %v5343, %v5343
        %v5352 = vcombine.high %v5350, %v5350
        %v5353 = vcombine.high %v5255, %v5255
        %v5355 = vunpack.c.l.s4 1983009808
        %v5356 = vunpack.c.0.s8 %v5355
        %v5357 = vlaneseq
        %v5358 = vshrl.u32 %v5357, 7
        %v5359 = vsub.s32 %v5356, %v5358
        %v5360 = vrot.slane %v5255, %v5359
        %v5362 = vunpack.c.l.s4 1983009808
        %v5363 = vunpack.c.0.s8 %v5362
        %v5364 = vlaneseq
        %v5365 = vshrl.u32 %v5364, 7
        %v5366 = vsub.s32 %v5363, %v5365
        %v5367 = vrot.slane %v5353, %v5366
        %v5368 = vcombine.high %v5360, %v5360
        %v5369 = vcombine.high %v5367, %v5367
        %v5370 = vcombine.high %v5256, %v5256
        %v5372 = vunpack.c.l.s4 1983009808
        %v5373 = vunpack.c.0.s8 %v5372
        %v5374 = vlaneseq
        %v5375 = vshrl.u32 %v5374, 7
        %v5376 = vsub.s32 %v5373, %v5375
        %v5377 = vrot.slane %v5256, %v5376
        %v5379 = vunpack.c.l.s4 1983009808
        %v5380 = vunpack.c.0.s8 %v5379
        %v5381 = vlaneseq
        %v5382 = vshrl.u32 %v5381, 7
        %v5383 = vsub.s32 %v5380, %v5382
        %v5384 = vrot.slane %v5370, %v5383
        %v5385 = vcombine.high %v5377, %v5377
        %v5386 = vcombine.high %v5384, %v5384
        %v5387 = vcombine.high %v5257, %v5257
        %v5389 = vunpack.c.l.s4 1983009808
        %v5390 = vunpack.c.0.s8 %v5389
        %v5391 = vlaneseq
        %v5392 = vshrl.u32 %v5391, 7
        %v5393 = vsub.s32 %v5390, %v5392
        %v5394 = vrot.slane %v5257, %v5393
        %v5396 = vunpack.c.l.s4 1983009808
        %v5397 = vunpack.c.0.s8 %v5396
        %v5398 = vlaneseq
        %v5399 = vshrl.u32 %v5398, 7
        %v5400 = vsub.s32 %v5397, %v5399
        %v5401 = vrot.slane %v5387, %v5400
        %v5402 = vcombine.high %v5394, %v5394
        %v5403 = vcombine.high %v5401, %v5401
        %v5404 = vcombine.high %v5258, %v5258
        %v5406 = vunpack.c.l.s4 1983009808
        %v5407 = vunpack.c.0.s8 %v5406
        %v5408 = vlaneseq
        %v5409 = vshrl.u32 %v5408, 7
        %v5410 = vsub.s32 %v5407, %v5409
        %v5411 = vrot.slane %v5258, %v5410
        %v5413 = vunpack.c.l.s4 1983009808
        %v5414 = vunpack.c.0.s8 %v5413
        %v5415 = vlaneseq
        %v5416 = vshrl.u32 %v5415, 7
        %v5417 = vsub.s32 %v5414, %v5416
        %v5418 = vrot.slane %v5404, %v5417
        %v5419 = vcombine.high %v5411, %v5411
        %v5420 = vcombine.high %v5418, %v5418
        %v5421 = vcombine.low %v5275, %v5283
        %v5422 = vcombine.low %v5282, %v5284
        %v5424 = vunpack.c.l.s4 1983009808
        %v5425 = vunpack.c.0.s8 %v5424
        %v5426 = vlaneseq
        %v5427 = vshrl.u32 %v5426, 7
        %v5428 = vsub.s32 %v5425, %v5427
        %v5429 = vrot.slane %v5421, %v5428
        %v5431 = vunpack.c.l.s4 1983009808
        %v5432 = vunpack.c.0.s8 %v5431
        %v5433 = vlaneseq
        %v5434 = vshrl.u32 %v5433, 7
        %v5435 = vsub.s32 %v5432, %v5434
        %v5436 = vrot.slane %v5422, %v5435
        %v5437 = vcombine.low %v5429, %v5436
        %v5438 = vcombine.low %v5292, %v5300
        %v5439 = vcombine.low %v5299, %v5301
        %v5441 = vunpack.c.l.s4 1983009808
        %v5442 = vunpack.c.0.s8 %v5441
        %v5443 = vlaneseq
        %v5444 = vshrl.u32 %v5443, 7
        %v5445 = vsub.s32 %v5442, %v5444
        %v5446 = vrot.slane %v5438, %v5445
        %v5448 = vunpack.c.l.s4 1983009808
        %v5449 = vunpack.c.0.s8 %v5448
        %v5450 = vlaneseq
        %v5451 = vshrl.u32 %v5450, 7
        %v5452 = vsub.s32 %v5449, %v5451
        %v5453 = vrot.slane %v5439, %v5452
        %v5454 = vcombine.low %v5446, %v5453
        %v5456 = vunpack.c.l.s4 1983009808
        %v5457 = vunpack.c.0.s8 %v5456
        %v5458 = vlaneseq
        %v5459 = vshrl.u32 %v5458, 7
        %v5460 = vsub.s32 %v5457, %v5459
        %v5461 = vrot.slane %v5309, %v5460
        %v5462 = vcombine.low %v5317, %v5316
        %v5463 = vcombine.low %v5318, %v5326
        %v5465 = vunpack.c.l.s4 1983009808
        %v5466 = vunpack.c.0.s8 %v5465
        %v5467 = vlaneseq
        %v5468 = vshrl.u32 %v5467, 7
        %v5469 = vsub.s32 %v5466, %v5468
        %v5470 = vrot.slane %v5462, %v5469
        %v5472 = vunpack.c.l.s4 1983009808
        %v5473 = vunpack.c.0.s8 %v5472
        %v5474 = vlaneseq
        %v5475 = vshrl.u32 %v5474, 7
        %v5476 = vsub.s32 %v5473, %v5475
        %v5477 = vrot.slane %v5463, %v5476
        %v5478 = vcombine.low %v5470, %v5477
        %v5479 = vcombine.low %v5334, %v5333
        %v5480 = vcombine.low %v5335, %v5343
        %v5482 = vunpack.c.l.s4 1983009808
        %v5483 = vunpack.c.0.s8 %v5482
        %v5484 = vlaneseq
        %v5485 = vshrl.u32 %v5484, 7
        %v5486 = vsub.s32 %v5483, %v5485
        %v5487 = vrot.slane %v5479, %v5486
        %v5489 = vunpack.c.l.s4 1983009808
        %v5490 = vunpack.c.0.s8 %v5489
        %v5491 = vlaneseq
        %v5492 = vshrl.u32 %v5491, 7
        %v5493 = vsub.s32 %v5490, %v5492
        %v5494 = vrot.slane %v5480, %v5493
        %v5495 = vcombine.low %v5487, %v5494
        %v5497 = vunpack.c.l.s4 1983009808
        %v5498 = vunpack.c.0.s8 %v5497
        %v5499 = vlaneseq
        %v5500 = vshrl.u32 %v5499, 7
        %v5501 = vsub.s32 %v5498, %v5500
        %v5502 = vrot.slane %v5351, %v5501
        %v5503 = vcombine.low %v5350, %v5352
        %v5504 = vcombine.low %v5360, %v5368
        %v5506 = vunpack.c.l.s4 1983009808
        %v5507 = vunpack.c.0.s8 %v5506
        %v5508 = vlaneseq
        %v5509 = vshrl.u32 %v5508, 7
        %v5510 = vsub.s32 %v5507, %v5509
        %v5511 = vrot.slane %v5503, %v5510
        %v5513 = vunpack.c.l.s4 1983009808
        %v5514 = vunpack.c.0.s8 %v5513
        %v5515 = vlaneseq
        %v5516 = vshrl.u32 %v5515, 7
        %v5517 = vsub.s32 %v5514, %v5516
        %v5518 = vrot.slane %v5504, %v5517
        %v5519 = vcombine.low %v5511, %v5518
        %v5520 = vcombine.low %v5367, %v5369
        %v5521 = vcombine.low %v5377, %v5385
        %v5523 = vunpack.c.l.s4 1983009808
        %v5524 = vunpack.c.0.s8 %v5523
        %v5525 = vlaneseq
        %v5526 = vshrl.u32 %v5525, 7
        %v5527 = vsub.s32 %v5524, %v5526
        %v5528 = vrot.slane %v5520, %v5527
        %v5530 = vunpack.c.l.s4 1983009808
        %v5531 = vunpack.c.0.s8 %v5530
        %v5532 = vlaneseq
        %v5533 = vshrl.u32 %v5532, 7
        %v5534 = vsub.s32 %v5531, %v5533
        %v5535 = vrot.slane %v5521, %v5534
        %v5536 = vcombine.low %v5528, %v5535
        %v5538 = vunpack.c.l.s4 1983009808
        %v5539 = vunpack.c.0.s8 %v5538
        %v5540 = vlaneseq
        %v5541 = vshrl.u32 %v5540, 7
        %v5542 = vsub.s32 %v5539, %v5541
        %v5543 = vrot.slane %v5384, %v5542
        %v5544 = vcombine.low %v5386, %v5394
        %v5545 = vcombine.low %v5402, %v5401
        %v5547 = vunpack.c.l.s4 1983009808
        %v5548 = vunpack.c.0.s8 %v5547
        %v5549 = vlaneseq
        %v5550 = vshrl.u32 %v5549, 7
        %v5551 = vsub.s32 %v5548, %v5550
        %v5552 = vrot.slane %v5544, %v5551
        %v5554 = vunpack.c.l.s4 1983009808
        %v5555 = vunpack.c.0.s8 %v5554
        %v5556 = vlaneseq
        %v5557 = vshrl.u32 %v5556, 7
        %v5558 = vsub.s32 %v5555, %v5557
        %v5559 = vrot.slane %v5545, %v5558
        %v5560 = vcombine.low %v5552, %v5559
        %v5561 = vcombine.low %v5403, %v5411
        %v5562 = vcombine.low %v5419, %v5418
        %v5564 = vunpack.c.l.s4 1983009808
        %v5565 = vunpack.c.0.s8 %v5564
        %v5566 = vlaneseq
        %v5567 = vshrl.u32 %v5566, 7
        %v5568 = vsub.s32 %v5565, %v5567
        %v5569 = vrot.slane %v5561, %v5568
        %v5571 = vunpack.c.l.s4 1983009808
        %v5572 = vunpack.c.0.s8 %v5571
        %v5573 = vlaneseq
        %v5574 = vshrl.u32 %v5573, 7
        %v5575 = vsub.s32 %v5572, %v5574
        %v5576 = vrot.slane %v5562, %v5575
        %v5577 = vcombine.low %v5569, %v5576
        %v5579 = vunpack.c.l.s4 1983009808
        %v5580 = vunpack.c.0.s8 %v5579
        %v5581 = vlaneseq
        %v5582 = vshrl.u32 %v5581, 7
        %v5583 = vsub.s32 %v5580, %v5582
        %v5584 = vrot.slane %v5420, %v5583
        %v5597 = vsel %vm1347, %v5437, -inf
        %v5598 = vsel %vm1347, %v5454, -inf
        %v5599 = vmax.f32 %v5597, %v5598
        %vm5600 = vcmask 254976
        %v5601 = vsel %vm5600, %v5461, -inf
        %v5602 = vmax.f32 %v5599, %v5601
        %v5603 = vrot.slane %v5602, 4
        %v5604 = vmax.f32 %v5602, %v5603
        %v5605 = vrot.slane %v5604, 2
        %v5606 = vmax.f32 %v5604, %v5605
        %v5607 = vrot.slane %v5606, 1
        %v5608 = vmax.f32 %v5606, %v5607
        %v5609 = vsel %vm1347, %v5478, -inf
        %v5610 = vsel %vm1347, %v5495, -inf
        %v5611 = vmax.f32 %v5609, %v5610
        %v5612 = vsel %vm5600, %v5502, -inf
        %v5613 = vmax.f32 %v5611, %v5612
        %v5614 = vrot.slane %v5613, 4
        %v5615 = vmax.f32 %v5613, %v5614
        %v5616 = vrot.slane %v5615, 2
        %v5617 = vmax.f32 %v5615, %v5616
        %v5618 = vrot.slane %v5617, 1
        %v5619 = vmax.f32 %v5617, %v5618
        %v5620 = vsel %vm1347, %v5519, -inf
        %v5621 = vsel %vm1347, %v5536, -inf
        %v5622 = vmax.f32 %v5620, %v5621
        %v5623 = vsel %vm5600, %v5543, -inf
        %v5624 = vmax.f32 %v5622, %v5623
        %v5625 = vrot.slane %v5624, 4
        %v5626 = vmax.f32 %v5624, %v5625
        %v5627 = vrot.slane %v5626, 2
        %v5628 = vmax.f32 %v5626, %v5627
        %v5629 = vrot.slane %v5628, 1
        %v5630 = vmax.f32 %v5628, %v5629
        %v5631 = vsel %vm1347, %v5560, -inf
        %v5632 = vsel %vm1347, %v5577, -inf
        %v5633 = vmax.f32 %v5631, %v5632
        %v5634 = vsel %vm5600, %v5584, -inf
        %v5635 = vmax.f32 %v5633, %v5634
        %v5636 = vrot.slane %v5635, 4
        %v5637 = vmax.f32 %v5635, %v5636
        %v5638 = vrot.slane %v5637, 2
        %v5639 = vmax.f32 %v5637, %v5638
        %v5640 = vrot.slane %v5639, 1
        %v5641 = vmax.f32 %v5639, %v5640
        %v5642 = vld [vmem:[%s8] sm:$0xff]
        %v5643 = vld [vmem:[%s8 + $0x8] sm:$0xff]
        %v5644 = vld [vmem:[%s8 + $0x10] sm:$0xff]
        %v5645 = vld [vmem:[%s8 + $0x18] sm:$0xff]
        %v5646 = vld [vmem:[%s9] sm:$0x1]
        %v5648 = vlaneseq
        %v5649 = vshrl.u32 %v5648, 7
        %v5650 = vsub.s32 0, %v5649
        %v5651 = vrot.slane %v5646, %v5650
        %vm5657 = vcmask 1041409
        %v5658 = vsel %vm5657, %v5619, %v5608
        %vm5659 = vcmask 1042434
        %v5660 = vsel %vm5659, %v5630, %v5658
        %vm5661 = vcmask 1043459
        %v5662 = vsel %vm5661, %v5641, %v5660
        %v5663 = vsel %vm1347, %v5662, 0
        %5665 = vmatprep.subr.mxu0 0.0
        %5666 = vmatpush1.msra.mxu0 %v5642
        %5667 = vmatprep.subr.mxu0 0.0
        %5668 = vmatpush1.msra.mxu0 %v5643
        %5669 = vmatprep.subr.mxu0 0.0
        %5670 = vmatpush1.msra.mxu0 %v5644
        %5671 = vmatprep.subr.mxu0 0.0
        %5672 = vmatpush1.msra.mxu0 %v5645
        %5673 = vmatprep.subr.mxu0 0.0
        %5674 = vmatpush1.msra.mxu0 0.0
        %5675 = vmatprep.subr.mxu0 0.0
        %5676 = vmatpush1.msra.mxu0 0.0
        %5677 = vmatprep.subr.mxu0 0.0
        %5678 = vmatpush1.msra.mxu0 0.0
        %5679 = vmatprep.subr.mxu0 0.0
        %5680 = vmatpush1.msra.mxu0 0.0
        %5681 = vmatprep.subr.mxu0 0.0
        %5682 = vmatpush1.msra.mxu0 0.0
        %5683 = vmatprep.subr.mxu0 0.0
        %5684 = vmatpush1.msra.mxu0 0.0
        %5685 = vmatprep.subr.mxu0 0.0
        %5686 = vmatpush1.msra.mxu0 0.0
        %5687 = vmatprep.subr.mxu0 0.0
        %5688 = vmatpush1.msra.mxu0 0.0
        %5689 = vmatprep.subr.mxu0 0.0
        %5690 = vmatpush1.msra.mxu0 0.0
        %5691 = vmatprep.subr.mxu0 0.0
        %5692 = vmatpush1.msra.mxu0 0.0
        %5693 = vmatprep.subr.mxu0 0.0
        %5694 = vmatpush1.msra.mxu0 0.0
        %5695 = vmatprep.subr.mxu0 0.0
        %5696 = vmatpush1.msra.mxu0 0.0
        %5697 = vmatprep.subr.mxu0 0.0
        %5698 = vmatpush1.msra.mxu0 0.0
        %5699 = vmatprep.subr.mxu0 0.0
        %5700 = vmatpush1.msra.mxu0 0.0
        %5701 = vmatprep.subr.mxu0 0.0
        %5702 = vmatpush1.msra.mxu0 0.0
        %5703 = vmatprep.subr.mxu0 0.0
        %5704 = vmatpush1.msra.mxu0 0.0
        %5705 = vmatprep.subr.mxu0 0.0
        %5706 = vmatpush1.msra.mxu0 0.0
        %5707 = vmatprep.subr.mxu0 0.0
        %5708 = vmatpush1.msra.mxu0 0.0
        %5709 = vmatprep.subr.mxu0 0.0
        %5710 = vmatpush1.msra.mxu0 0.0
        %5711 = vmatprep.subr.mxu0 0.0
        %5712 = vmatpush1.msra.mxu0 0.0
        %5713 = vmatprep.subr.mxu0 0.0
        %5714 = vmatpush1.msra.mxu0 0.0
        %5715 = vmatprep.subr.mxu0 0.0
        %5716 = vmatpush1.msra.mxu0 0.0
        %5717 = vmatprep.subr.mxu0 0.0
        %5718 = vmatpush1.msra.mxu0 0.0
        %5719 = vmatprep.subr.mxu0 0.0
        %5720 = vmatpush1.msra.mxu0 0.0
        %5721 = vmatprep.subr.mxu0 0.0
        %5722 = vmatpush1.msra.mxu0 0.0
        %5723 = vmatprep.subr.mxu0 0.0
        %5724 = vmatpush1.msra.mxu0 0.0
        %5725 = vmatprep.subr.mxu0 0.0
        %5726 = vmatpush1.msra.mxu0 0.0
        %5727 = vmatprep.subr.mxu0 0.0
        %5728 = vmatpush1.msra.mxu0 0.0
        %5729 = vmatprep.mubr.f32.mxu0 0.0
        %5730 = vmatmul.mubr.f32.gmra.mrb[0].mxu0 %v5663
        %v5731 = vpop.f32.mrb[0].mxu0
        %v5732 = vadd.f32 %v5651, %v5731
        %v5733 = vpop.f32.mrb[0].mxu0
        %5734 = vdwg.mxu0
        %v5735 = vmax.f32 %v5732, 0.0
        %v5736 = vld [vmem:[%s10] sm:$0xff]
        %v5737 = vld [vmem:[%s10 + $0x8] sm:$0xff]
        %v5738 = vld [vmem:[%s10 + $0x10] sm:$0xff]
        %v5739 = vld [vmem:[%s10 + $0x18] sm:$0xff]
        %v5740 = vld [vmem:[#allocation3] sm:$0x1]
        %v5742 = vlaneseq
        %v5743 = vshrl.u32 %v5742, 7
        %v5744 = vsub.s32 0, %v5743
        %v5745 = vrot.slane %v5740, %v5744
        %v5748 = vsel %vm1347, %v5735, 0
        %5750 = vmatprep.subr.mxu0 0.0
        %5751 = vmatpush1.msra.mxu0 %v5736
        %5752 = vmatprep.subr.mxu0 0.0
        %5753 = vmatpush1.msra.mxu0 %v5737
        %5754 = vmatprep.subr.mxu0 0.0
        %5755 = vmatpush1.msra.mxu0 %v5738
        %5756 = vmatprep.subr.mxu0 0.0
        %5757 = vmatpush1.msra.mxu0 %v5739
        %5758 = vmatprep.subr.mxu0 0.0
        %5759 = vmatpush1.msra.mxu0 0.0
        %5760 = vmatprep.subr.mxu0 0.0
        %5761 = vmatpush1.msra.mxu0 0.0
        %5762 = vmatprep.subr.mxu0 0.0
        %5763 = vmatpush1.msra.mxu0 0.0
        %5764 = vmatprep.subr.mxu0 0.0
        %5765 = vmatpush1.msra.mxu0 0.0
        %5766 = vmatprep.subr.mxu0 0.0
        %5767 = vmatpush1.msra.mxu0 0.0
        %5768 = vmatprep.subr.mxu0 0.0
        %5769 = vmatpush1.msra.mxu0 0.0
        %5770 = vmatprep.subr.mxu0 0.0
        %5771 = vmatpush1.msra.mxu0 0.0
        %5772 = vmatprep.subr.mxu0 0.0
        %5773 = vmatpush1.msra.mxu0 0.0
        %5774 = vmatprep.subr.mxu0 0.0
        %5775 = vmatpush1.msra.mxu0 0.0
        %5776 = vmatprep.subr.mxu0 0.0
        %5777 = vmatpush1.msra.mxu0 0.0
        %5778 = vmatprep.subr.mxu0 0.0
        %5779 = vmatpush1.msra.mxu0 0.0
        %5780 = vmatprep.subr.mxu0 0.0
        %5781 = vmatpush1.msra.mxu0 0.0
        %5782 = vmatprep.subr.mxu0 0.0
        %5783 = vmatpush1.msra.mxu0 0.0
        %5784 = vmatprep.subr.mxu0 0.0
        %5785 = vmatpush1.msra.mxu0 0.0
        %5786 = vmatprep.subr.mxu0 0.0
        %5787 = vmatpush1.msra.mxu0 0.0
        %5788 = vmatprep.subr.mxu0 0.0
        %5789 = vmatpush1.msra.mxu0 0.0
        %5790 = vmatprep.subr.mxu0 0.0
        %5791 = vmatpush1.msra.mxu0 0.0
        %5792 = vmatprep.subr.mxu0 0.0
        %5793 = vmatpush1.msra.mxu0 0.0
        %5794 = vmatprep.subr.mxu0 0.0
        %5795 = vmatpush1.msra.mxu0 0.0
        %5796 = vmatprep.subr.mxu0 0.0
        %5797 = vmatpush1.msra.mxu0 0.0
        %5798 = vmatprep.subr.mxu0 0.0
        %5799 = vmatpush1.msra.mxu0 0.0
        %5800 = vmatprep.subr.mxu0 0.0
        %5801 = vmatpush1.msra.mxu0 0.0
        %5802 = vmatprep.subr.mxu0 0.0
        %5803 = vmatpush1.msra.mxu0 0.0
        %5804 = vmatprep.subr.mxu0 0.0
        %5805 = vmatpush1.msra.mxu0 0.0
        %5806 = vmatprep.subr.mxu0 0.0
        %5807 = vmatpush1.msra.mxu0 0.0
        %5808 = vmatprep.subr.mxu0 0.0
        %5809 = vmatpush1.msra.mxu0 0.0
        %5810 = vmatprep.subr.mxu0 0.0
        %5811 = vmatpush1.msra.mxu0 0.0
        %5812 = vmatprep.subr.mxu0 0.0
        %5813 = vmatpush1.msra.mxu0 0.0
        %5814 = vmatprep.mubr.f32.mxu0 0.0
        %5815 = vmatmul.mubr.f32.gmra.mrb[0].mxu0 %v5748
        %v5816 = vpop.f32.mrb[0].mxu0
        %v5817 = vadd.f32 %v5745, %v5816
        %v5818 = vpop.f32.mrb[0].mxu0
        %5819 = vdwg.mxu0
        %s5820 = smul.u32 %s30, 4
        %v5821 = vlaneseq
        %v5822 = vshrl.u32 %v5821, 7
        %v5823 = vstv %s5820
        %v5824 = vadd.s32 %v5823, %v5822
        %vm5825 = vcmp.lt.s32.totalorder %v5824, 18
        %v5826 = vsel %vm5825, %v5817, 0.0
        %v5827 = vld [vmem:[#allocation2] sm:$0x1]
        %vm5828 = vcmask 3072
        %v5829 = vsel %vm5828, %v5826, 0.0
        %v5830 = vrot.slane %v5829, 4
        %v5831 = vadd.f32 %v5829, %v5830
        %v5832 = vrot.slane %v5831, 2
        %v5833 = vadd.f32 %v5831, %v5832
        %v5834 = vrot.slane %v5833, 1
        %v5835 = vadd.f32 %v5833, %v5834
        %v5836 = vadd.f32 %v5827, %v5835
        %vm5837 = vcmask 0
        %5838 = vst.msk [vmem:[#allocation2] sm:$0x1] %vm5837, %v5836
        %v5839 = vld [vmem:[#allocation2] sm:$0x1]
        %v5840 = vmul.f32 %v5839, 0.055555556
        %v5841 = vxor.u32 %v5840, 2147483648
        %v5842 = vmul.f32 %v5841, 1.442695
        %v5843 = vpow.pop %v5842
        %v5844 = vadd.f32 %v5843, 1.0
        %v5845 = vrcp.pop %v5844
        %v5846 = vmul.f32 1.0, %v5845
        %5847 = vst.msk [vmem:[%s726] sm:$0x1] %vm5837, %v5846
        %p5848 = scmp.lt.s32.totalorder %s29, 1
        %s5849 = scalar_select %p5848, %s29, 1
        %s5850 = scalar_lea.vmem %s12, %s5849
        // Predicated region
        $region99: #{model_base_forward.1} parent=89 // pred_check
          %p5851 = pneg %p326
        $region100: #{model_base_forward.1} parent=89 // pred_check_branch
          %5853 = sbr.rel (%p5851) target = $region102
        $region101: #{model_base_forward.1} parent=89 // pred_region
          _
        $region102: #{model_base_forward.1} parent=89 // pred_fallthru
          _
      $region90: #{model_base_forward.1} parent=5 // pred_fallthru
        _
      %p5854 = scmp.le.s32.totalorder 2, %s20
      // Predicated region
      $region103: #{model_base_forward.1} parent=5 // pred_check
        %p5855 = pneg %p5854
      $region104: #{model_base_forward.1} parent=5 // pred_check_branch
        %5857 = sbr.rel (%p5855) target = $region106
      $region105: #{model_base_forward.1} parent=5 // pred_region
        %s5858 = ssub.s32 %s20, 2
        // Predicated region
        $region107: #{model_base_forward.1} parent=105 // pred_check
          %p5859 = pneg %p332
        $region108: #{model_base_forward.1} parent=105 // pred_check_branch
          %5861 = sbr.rel (%p5859) target = $region110
        $region109: #{model_base_forward.1} parent=105 // pred_region
          %p5862 = scmp.lt.s32.totalorder %s31, 1
          %s5863 = scalar_select %p5862, %s31, 1
          %s5864 = scalar_lea.vmem %s12, %s5863
        $region110: #{model_base_forward.1} parent=105 // pred_fallthru
          _
      $region106: #{model_base_forward.1} parent=5 // pred_fallthru
        _
    $region6: #{model_base_forward.1} parent=1 // loop_footer
      %s24 = sadd.s32 1, %s20
    $region7: #{model_base_forward.1} parent=1 // loop_footer_branch
      %19 = sbr.rel target = $region3
    $region8: #{model_base_forward.1} parent=1 // loop_exit
      _

</llo_original>
